<compile_context>
chip_gen: v6e
topology: v6e:2x2x1
jax: 0.10.0
libtpu: 0.0.40
codegen_flags: <defaults>
</compile_context>

<pallas_src>
import functools
import math

import jax
import jax.numpy as jnp
from jax.experimental import pallas as pl
from jax.experimental.pallas import tpu as pltpu


_BN_EPS = 1e-5


class KeyGen:
    def __init__(self, key):
        self._key = key

    def __call__(self):
        self._key, sub = jax.random.split(self._key)
        return sub


# ----------------------------------------------------------------------------
# parameter init: Conv + BN(eval) fold, slab packing, tap stacking
# ----------------------------------------------------------------------------
def _conv_bn_init(kg, cin, cout, k):
    """Conv2d(k, stride 1, pad k//2) + BatchNorm2d (eval, default stats), BN folded."""
    fan_in = cin * k * k
    w = jax.random.normal(kg(), (k, k, cin, cout), jnp.float32) * math.sqrt(2.0 / fan_in)
    bound = 1.0 / math.sqrt(fan_in)
    b = jax.random.uniform(kg(), (cout,), jnp.float32, -bound, bound)
    scale = 1.0 / math.sqrt(1.0 + _BN_EPS)   # gamma=1, beta=0, mean=0, var=1
    return w * scale, b * scale


def _pack_1x1(entries, cin, total_cols):
    """Pack 1x1 convs side-by-side -> (cin, total_cols) bf16, (1, total_cols) f32."""
    W = jnp.zeros((cin, total_cols), jnp.float32)
    B = jnp.zeros((1, total_cols), jnp.float32)
    for (w, b, col_off) in entries:
        cout = w.shape[-1]
        W = W.at[:, col_off:col_off + cout].set(w.reshape(cin, cout))
        B = B.at[0, col_off:col_off + cout].set(b)
    return W.astype(jnp.bfloat16), B


def _pack_3x3(entries, rows_per_tap, total_cols):
    """Pack 3x3 convs into a tap-stacked GEMM weight (9*rows_per_tap, total_cols).

    Row index = (dy*3 + dx)*rows_per_tap + row_off + cin, matching the in-kernel
    concatenation order of the 9 shifted views.
    """
    W = jnp.zeros((9 * rows_per_tap, total_cols), jnp.float32)
    B = jnp.zeros((1, total_cols), jnp.float32)
    for (w, b, row_off, col_off) in entries:
        _, _, cin, cout = w.shape
        for dy in range(3):
            for dx in range(3):
                base = (dy * 3 + dx) * rows_per_tap
                W = W.at[base + row_off:base + row_off + cin,
                         col_off:col_off + cout].set(w[dy, dx])
        B = B.at[0, col_off:col_off + cout].set(b)
    return W.astype(jnp.bfloat16), B


def init_inception_a(key, cin):
    kg = KeyGen(key)
    # block1: AvgPool2d(3,1,1) + Conv1x1(cin->96); fold the 1/9 pool factor into W.
    w1, b1 = _conv_bn_init(kg, cin, 96, 1)
    w1p, b1p = _pack_1x1([(w1 * (1.0 / 9.0), b1, 0)], cin, 128)
    # fused sibling 1x1s over the same x:
    #   cols   0: 96 -> block2 (cin->96)
    #   cols 128:192 -> block3[0] (cin->64)   (shared slab ch 0:64)
    #   cols 192:256 -> block4[0] (cin->64)   (shared slab ch 64:128)
    w2, b2 = _conv_bn_init(kg, cin, 96, 1)
    w3a, b3a = _conv_bn_init(kg, cin, 64, 1)
    w4a, b4a = _conv_bn_init(kg, cin, 64, 1)
    wf, bf = _pack_1x1([(w2, b2, 0), (w3a, b3a, 128), (w4a, b4a, 192)], cin, 256)
    # combined 3x3 conv over the shared slab:
    #   block3[1] (64->96) reads slab ch 0:64  -> output cols 0:96
    #   block4[1] (64->96) reads slab ch 64:128 -> output cols 128:224
    w3b, b3b = _conv_bn_init(kg, 64, 96, 3)
    w4b, b4b = _conv_bn_init(kg, 64, 96, 3)
    w34, b34 = _pack_3x3([(w3b, b3b, 0, 0), (w4b, b4b, 64, 128)], 128, 256)
    # block4[2]: 3x3 conv 96->96
    w4c, b4c = _conv_bn_init(kg, 96, 96, 3)
    w4cp, b4cp = _pack_3x3([(w4c, b4c, 0, 0)], 128, 128)
    return {"w1": w1p, "b1": b1p, "wf": wf, "bf": bf,
            "w34": w34, "b34": b34, "w4c": w4cp, "b4c": b4cp}


# ----------------------------------------------------------------------------
# the fused InceptionA kernel (one grid step per image)
# ----------------------------------------------------------------------------
def _tap_stack(tpad, H, W):
    """Concatenate the 9 shifted (H,W,128) views of a padded (H+2,W+2,128) value
    along channels -> (H*W, 9*128) bf16 GEMM operand."""
    parts = [tpad[dy:dy + H, dx:dx + W, :] for dy in range(3) for dx in range(3)]
    return jnp.concatenate(parts, axis=-1).reshape(H * W, 9 * 128).astype(jnp.bfloat16)


def _inception_a_kernel(xp_ref, w1_ref, b1_ref, wf_ref, bf_ref,
                        w34_ref, b34_ref, w4c_ref, b4c_ref,
                        o1_ref, o2_ref, o3_ref, o4_ref,
                        t34_scr, t4_scr, *, H, W):
    # Padded intermediates live in VMEM scratch; re-zero each step (cheap, and safe
    # even if the parallel batch axis is split across TensorCores).
    t34_scr[...] = jnp.zeros_like(t34_scr)
    t4_scr[...] = jnp.zeros_like(t4_scr)

    xp = xp_ref[0]                                   # (H+2, W+2, Cin) bf16
    cin = xp.shape[-1]

    # ---- block1: separable 3x3 avg-pool (1/9 folded into w1) + 1x1 conv ----
    xf = xp.astype(jnp.float32)
    rs = xf[0:H, :, :] + xf[1:H + 1, :, :] + xf[2:H + 2, :, :]        # (H, W+2, Cin)
    pooled = rs[:, 0:W, :] + rs[:, 1:W + 1, :] + rs[:, 2:W + 2, :]    # (H, W, Cin)
    a_pool = pooled.reshape(H * W, cin).astype(jnp.bfloat16)
    y1 = jnp.dot(a_pool, w1_ref[...], preferred_element_type=jnp.float32)
    y1 = jnp.maximum(y1 + b1_ref[...], 0.0)
    o1_ref[...] = y1.reshape(1, H, W, 128).astype(o1_ref.dtype)

    # ---- fused sibling 1x1 convs: block2 | block3[0] & block4[0] shared slab ----
    a_int = xp[1:H + 1, 1:W + 1, :].reshape(H * W, cin)               # bf16
    yf = jnp.dot(a_int, wf_ref[...], preferred_element_type=jnp.float32)
    yf = jnp.maximum(yf + bf_ref[...], 0.0)                           # (H*W, 256)
    o2_ref[...] = yf[:, 0:128].reshape(1, H, W, 128).astype(o2_ref.dtype)
    # shared slab: ch 0:64 = block3 branch input, ch 64:128 = block4 branch input
    t34_scr[1:H + 1, 1:W + 1, :] = yf[:, 128:256].reshape(H, W, 128)

    # ---- combined 3x3 conv: block3[1] (cols 0:128) + block4[1] (cols 128:256) ----
    a34 = _tap_stack(t34_scr[...], H, W)                              # (H*W, 1152)
    y34 = jnp.dot(a34, w34_ref[...], preferred_element_type=jnp.float32)
    y34 = jnp.maximum(y34 + b34_ref[...], 0.0)                        # (H*W, 256)
    o3_ref[...] = y34[:, 0:128].reshape(1, H, W, 128).astype(o3_ref.dtype)
    t4_scr[1:H + 1, 1:W + 1, :] = y34[:, 128:256].reshape(H, W, 128)

    # ---- block4[2]: 3x3 conv 96 -> 96 (intermediate never leaves VMEM) ----
    a4 = _tap_stack(t4_scr[...], H, W)                                # (H*W, 1152)
    y4 = jnp.dot(a4, w4c_ref[...], preferred_element_type=jnp.float32)
    y4 = jnp.maximum(y4 + b4c_ref[...], 0.0)
    o4_ref[...] = y4.reshape(1, H, W, 128).astype(o4_ref.dtype)


def inception_a_forward(params, x_nchw):
    x = jnp.transpose(x_nchw.astype(jnp.float32), (0, 2, 3, 1)).astype(jnp.bfloat16)
    N, H, W, C = x.shape
    xp = jnp.pad(x, ((0, 0), (1, 1), (1, 1), (0, 0)))   # single fused XLA op on tiny x

    out_shape = tuple(jax.ShapeDtypeStruct((N, H, W, 128), jnp.float32) for _ in range(4))
    out_specs = tuple(pl.BlockSpec((1, H, W, 128), lambda n: (n, 0, 0, 0)) for _ in range(4))

    x1, x2, x3, x4 = pl.pallas_call(
        functools.partial(_inception_a_kernel, H=H, W=W),
        out_shape=out_shape,
        grid=(N,),
        in_specs=[
            pl.BlockSpec((1, H + 2, W + 2, C), lambda n: (n, 0, 0, 0)),
            pl.BlockSpec((C, 128), lambda n: (0, 0)),
            pl.BlockSpec((1, 128), lambda n: (0, 0)),
            pl.BlockSpec((C, 256), lambda n: (0, 0)),
            pl.BlockSpec((1, 256), lambda n: (0, 0)),
            pl.BlockSpec((9 * 128, 256), lambda n: (0, 0)),
            pl.BlockSpec((1, 256), lambda n: (0, 0)),
            pl.BlockSpec((9 * 128, 128), lambda n: (0, 0)),
            pl.BlockSpec((1, 128), lambda n: (0, 0)),
        ],
        out_specs=out_specs,
        scratch_shapes=[
            pltpu.VMEM((H + 2, W + 2, 128), jnp.float32),   # padded shared 1x1 slab
            pltpu.VMEM((H + 2, W + 2, 128), jnp.float32),   # padded block4 intermediate
        ],
        compiler_params=pltpu.CompilerParams(dimension_semantics=("parallel",)),
    )(xp, params["w1"], params["b1"], params["wf"], params["bf"],
      params["w34"], params["b34"], params["w4c"], params["b4c"])

    out = jnp.concatenate(
        [x1[..., :96], x2[..., :96], x3[..., :96], x4[..., :96]], axis=-1)
    return jnp.transpose(out, (0, 3, 1, 2))                 # NHWC -> NCHW


# ----------------------------------------------------------------------------
if __name__ == "__main__":
    key = jax.random.PRNGKey(0)
    pkey, xkey = jax.random.split(key)

    C_IN, Hh, Ww, Bb = 32, 16, 16, 2
    params = init_inception_a(pkey, C_IN)
    x = jax.random.normal(xkey, (Bb, C_IN, Hh, Ww), jnp.float32)

    fwd = jax.jit(inception_a_forward)
    out = jax.block_until_ready(fwd(params, x))

    assert out.shape == (Bb, 4 * 96, Hh, Ww) and out.dtype == jnp.float32
    assert bool(jnp.all(jnp.isfinite(out)))
    assert bool(jnp.all(out >= 0.0))   # ReLU epilogue
    print("KERNEL_OK")
</pallas_src>

<mosaic_0001>
module attributes {stable_mosaic.version = 11 : i64} {
  func.func @_inception_a_kernel(%arg0: i32, %arg1: memref<1x18x18x32xbf16, #tpu.memory_space<vmem>>, %arg2: memref<32x128xbf16, #tpu.memory_space<vmem>>, %arg3: memref<1x128xf32, #tpu.memory_space<vmem>>, %arg4: memref<32x256xbf16, #tpu.memory_space<vmem>>, %arg5: memref<1x256xf32, #tpu.memory_space<vmem>>, %arg6: memref<1152x256xbf16, #tpu.memory_space<vmem>>, %arg7: memref<1x256xf32, #tpu.memory_space<vmem>>, %arg8: memref<1152x128xbf16, #tpu.memory_space<vmem>>, %arg9: memref<1x128xf32, #tpu.memory_space<vmem>>, %arg10: memref<1x16x16x128xf32, #tpu.memory_space<vmem>>, %arg11: memref<1x16x16x128xf32, #tpu.memory_space<vmem>>, %arg12: memref<1x16x16x128xf32, #tpu.memory_space<vmem>>, %arg13: memref<1x16x16x128xf32, #tpu.memory_space<vmem>>, %arg14: memref<18x18x128xf32, #tpu.memory_space<vmem>>, %arg15: memref<18x18x128xf32, #tpu.memory_space<vmem>>) attributes {dimension_semantics = [#tpu.dimension_semantics<parallel>], iteration_bounds = array<i64: 2>, scalar_prefetch = 0 : i64, scratch_operands = 2 : i64, tpu.core_type = #tpu.core_type<tc>, window_params = [{transform_indices = @transform_0, window_bounds = array<i64: 1, 18, 18, 32>}, {pipeline_mode = #tpu.pipeline_mode<synchronous>, transform_indices = @transform_1, window_bounds = array<i64: 32, 128>}, {pipeline_mode = #tpu.pipeline_mode<synchronous>, transform_indices = @transform_2, window_bounds = array<i64: 1, 128>}, {pipeline_mode = #tpu.pipeline_mode<synchronous>, transform_indices = @transform_3, window_bounds = array<i64: 32, 256>}, {pipeline_mode = #tpu.pipeline_mode<synchronous>, transform_indices = @transform_4, window_bounds = array<i64: 1, 256>}, {pipeline_mode = #tpu.pipeline_mode<synchronous>, transform_indices = @transform_5, window_bounds = array<i64: 1152, 256>}, {pipeline_mode = #tpu.pipeline_mode<synchronous>, transform_indices = @transform_6, window_bounds = array<i64: 1, 256>}, {pipeline_mode = #tpu.pipeline_mode<synchronous>, transform_indices = @transform_7, window_bounds = array<i64: 1152, 128>}, {pipeline_mode = #tpu.pipeline_mode<synchronous>, transform_indices = @transform_8, window_bounds = array<i64: 1, 128>}, {transform_indices = @transform_9, window_bounds = array<i64: 1, 16, 16, 128>}, {transform_indices = @transform_10, window_bounds = array<i64: 1, 16, 16, 128>}, {transform_indices = @transform_11, window_bounds = array<i64: 1, 16, 16, 128>}, {transform_indices = @transform_12, window_bounds = array<i64: 1, 16, 16, 128>}]} {
    %cst = arith.constant 0.000000e+00 : f32
    %0 = vector.broadcast %cst : f32 to vector<18x18x128xf32>
    %c0 = arith.constant 0 : index
    %c0_0 = arith.constant 0 : index
    %c0_1 = arith.constant 0 : index
    %1 = vector.load %arg14[%c0, %c0_0, %c0_1] : memref<18x18x128xf32, #tpu.memory_space<vmem>>, vector<18x18x128xf32>
    tpu.vector_store %arg14[%c0, %c0_0, %c0_1], %0 {strides = array<i32>} : memref<18x18x128xf32, #tpu.memory_space<vmem>>, vector<18x18x128xf32>,
    %cst_2 = arith.constant 0.000000e+00 : f32
    %2 = vector.broadcast %cst_2 : f32 to vector<18x18x128xf32>
    %c0_3 = arith.constant 0 : index
    %c0_4 = arith.constant 0 : index
    %c0_5 = arith.constant 0 : index
    %3 = vector.load %arg15[%c0_3, %c0_4, %c0_5] : memref<18x18x128xf32, #tpu.memory_space<vmem>>, vector<18x18x128xf32>
    tpu.vector_store %arg15[%c0_3, %c0_4, %c0_5], %2 {strides = array<i32>} : memref<18x18x128xf32, #tpu.memory_space<vmem>>, vector<18x18x128xf32>,
    %c0_6 = arith.constant 0 : index
    %c0_7 = arith.constant 0 : index
    %c0_8 = arith.constant 0 : index
    %c0_9 = arith.constant 0 : index
    %4 = vector.load %arg1[%c0_6, %c0_7, %c0_8, %c0_9] : memref<1x18x18x32xbf16, #tpu.memory_space<vmem>>, vector<1x18x18x32xbf16>
    %5 = vector.shape_cast %4 : vector<1x18x18x32xbf16> to vector<18x18x32xbf16>
    %6 = arith.extf %5 : vector<18x18x32xbf16> to vector<18x18x32xf32>
    %7 = vector.extract_strided_slice %6 {offsets = [0, 0, 0], sizes = [16, 18, 32], strides = [1, 1, 1]} : vector<18x18x32xf32> to vector<16x18x32xf32>
    %8 = vector.extract_strided_slice %6 {offsets = [1, 0, 0], sizes = [16, 18, 32], strides = [1, 1, 1]} : vector<18x18x32xf32> to vector<16x18x32xf32>
    %9 = arith.addf %7, %8 : vector<16x18x32xf32>
    %10 = vector.extract_strided_slice %6 {offsets = [2, 0, 0], sizes = [16, 18, 32], strides = [1, 1, 1]} : vector<18x18x32xf32> to vector<16x18x32xf32>
    %11 = arith.addf %9, %10 : vector<16x18x32xf32>
    %12 = vector.extract_strided_slice %11 {offsets = [0, 0, 0], sizes = [16, 16, 32], strides = [1, 1, 1]} : vector<16x18x32xf32> to vector<16x16x32xf32>
    %13 = vector.extract_strided_slice %11 {offsets = [0, 1, 0], sizes = [16, 16, 32], strides = [1, 1, 1]} : vector<16x18x32xf32> to vector<16x16x32xf32>
    %14 = arith.addf %12, %13 : vector<16x16x32xf32>
    %15 = vector.extract_strided_slice %11 {offsets = [0, 2, 0], sizes = [16, 16, 32], strides = [1, 1, 1]} : vector<16x18x32xf32> to vector<16x16x32xf32>
    %16 = arith.addf %14, %15 : vector<16x16x32xf32>
    %17 = vector.shape_cast %16 : vector<16x16x32xf32> to vector<256x32xf32>
    %18 = arith.truncf %17 : vector<256x32xf32> to vector<256x32xbf16>
    %c0_10 = arith.constant 0 : index
    %c0_11 = arith.constant 0 : index
    %19 = vector.load %arg2[%c0_10, %c0_11] : memref<32x128xbf16, #tpu.memory_space<vmem>>, vector<32x128xbf16>
    %cst_12 = arith.constant dense<0.000000e+00> : vector<256x128xf32>
    %20 = tpu.matmul %18, %19, %cst_12 {dimension_numbers = #tpu.dot_dimension_numbers<[1], [0], [0], [1], [0, 0, 1, 1], [], []>} : vector<256x32xbf16>, vector<32x128xbf16>, vector<256x128xf32> -> vector<256x128xf32>
    %c0_13 = arith.constant 0 : index
    %c0_14 = arith.constant 0 : index
    %21 = vector.load %arg3[%c0_13, %c0_14] : memref<1x128xf32, #tpu.memory_space<vmem>>, vector<1x128xf32>
    %22 = vector.broadcast %21 : vector<1x128xf32> to vector<256x128xf32>
    %23 = arith.addf %20, %22 : vector<256x128xf32>
    %cst_15 = arith.constant 0.000000e+00 : f32
    %24 = vector.broadcast %cst_15 : f32 to vector<256x128xf32>
    %25 = arith.maximumf %23, %24 : vector<256x128xf32>
    %26 = vector.shape_cast %25 : vector<256x128xf32> to vector<1x16x16x128xf32>
    %c0_16 = arith.constant 0 : index
    %c0_17 = arith.constant 0 : index
    %c0_18 = arith.constant 0 : index
    %c0_19 = arith.constant 0 : index
    %27 = vector.load %arg10[%c0_16, %c0_17, %c0_18, %c0_19] : memref<1x16x16x128xf32, #tpu.memory_space<vmem>>, vector<1x16x16x128xf32>
    tpu.vector_store %arg10[%c0_16, %c0_17, %c0_18, %c0_19], %26 {strides = array<i32>} : memref<1x16x16x128xf32, #tpu.memory_space<vmem>>, vector<1x16x16x128xf32>,
    %28 = vector.extract_strided_slice %5 {offsets = [1, 1, 0], sizes = [16, 16, 32], strides = [1, 1, 1]} : vector<18x18x32xbf16> to vector<16x16x32xbf16>
    %29 = vector.shape_cast %28 : vector<16x16x32xbf16> to vector<256x32xbf16>
    %c0_20 = arith.constant 0 : index
    %c0_21 = arith.constant 0 : index
    %30 = vector.load %arg4[%c0_20, %c0_21] : memref<32x256xbf16, #tpu.memory_space<vmem>>, vector<32x256xbf16>
    %cst_22 = arith.constant dense<0.000000e+00> : vector<256x256xf32>
    %31 = tpu.matmul %29, %30, %cst_22 {dimension_numbers = #tpu.dot_dimension_numbers<[1], [0], [0], [1], [0, 0, 1, 1], [], []>} : vector<256x32xbf16>, vector<32x256xbf16>, vector<256x256xf32> -> vector<256x256xf32>
    %c0_23 = arith.constant 0 : index
    %c0_24 = arith.constant 0 : index
    %32 = vector.load %arg5[%c0_23, %c0_24] : memref<1x256xf32, #tpu.memory_space<vmem>>, vector<1x256xf32>
    %33 = vector.broadcast %32 : vector<1x256xf32> to vector<256x256xf32>
    %34 = arith.addf %31, %33 : vector<256x256xf32>
    %cst_25 = arith.constant 0.000000e+00 : f32
    %35 = vector.broadcast %cst_25 : f32 to vector<256x256xf32>
    %36 = arith.maximumf %34, %35 : vector<256x256xf32>
    %37 = vector.extract_strided_slice %36 {offsets = [0, 0], sizes = [256, 128], strides = [1, 1]} : vector<256x256xf32> to vector<256x128xf32>
    %38 = vector.shape_cast %37 : vector<256x128xf32> to vector<1x16x16x128xf32>
    %c0_26 = arith.constant 0 : index
    %c0_27 = arith.constant 0 : index
    %c0_28 = arith.constant 0 : index
    %c0_29 = arith.constant 0 : index
    %39 = vector.load %arg11[%c0_26, %c0_27, %c0_28, %c0_29] : memref<1x16x16x128xf32, #tpu.memory_space<vmem>>, vector<1x16x16x128xf32>
    tpu.vector_store %arg11[%c0_26, %c0_27, %c0_28, %c0_29], %38 {strides = array<i32>} : memref<1x16x16x128xf32, #tpu.memory_space<vmem>>, vector<1x16x16x128xf32>,
    %40 = vector.extract_strided_slice %36 {offsets = [0, 128], sizes = [256, 128], strides = [1, 1]} : vector<256x256xf32> to vector<256x128xf32>
    %41 = vector.shape_cast %40 : vector<256x128xf32> to vector<16x16x128xf32>
    %c1 = arith.constant 1 : index
    %c1_30 = arith.constant 1 : index
    %c0_31 = arith.constant 0 : index
    %42 = vector.load %arg14[%c1, %c1_30, %c0_31] : memref<18x18x128xf32, #tpu.memory_space<vmem>>, vector<16x16x128xf32>
    tpu.vector_store %arg14[%c1, %c1_30, %c0_31], %41 {strides = array<i32>} : memref<18x18x128xf32, #tpu.memory_space<vmem>>, vector<16x16x128xf32>,
    %c0_32 = arith.constant 0 : index
    %c0_33 = arith.constant 0 : index
    %c0_34 = arith.constant 0 : index
    %43 = vector.load %arg14[%c0_32, %c0_33, %c0_34] : memref<18x18x128xf32, #tpu.memory_space<vmem>>, vector<18x18x128xf32>
    %44 = vector.extract_strided_slice %43 {offsets = [0, 0, 0], sizes = [16, 16, 128], strides = [1, 1, 1]} : vector<18x18x128xf32> to vector<16x16x128xf32>
    %45 = vector.extract_strided_slice %43 {offsets = [0, 1, 0], sizes = [16, 16, 128], strides = [1, 1, 1]} : vector<18x18x128xf32> to vector<16x16x128xf32>
    %46 = vector.extract_strided_slice %43 {offsets = [0, 2, 0], sizes = [16, 16, 128], strides = [1, 1, 1]} : vector<18x18x128xf32> to vector<16x16x128xf32>
    %47 = vector.extract_strided_slice %43 {offsets = [1, 0, 0], sizes = [16, 16, 128], strides = [1, 1, 1]} : vector<18x18x128xf32> to vector<16x16x128xf32>
    %48 = vector.extract_strided_slice %43 {offsets = [1, 1, 0], sizes = [16, 16, 128], strides = [1, 1, 1]} : vector<18x18x128xf32> to vector<16x16x128xf32>
    %49 = vector.extract_strided_slice %43 {offsets = [1, 2, 0], sizes = [16, 16, 128], strides = [1, 1, 1]} : vector<18x18x128xf32> to vector<16x16x128xf32>
    %50 = vector.extract_strided_slice %43 {offsets = [2, 0, 0], sizes = [16, 16, 128], strides = [1, 1, 1]} : vector<18x18x128xf32> to vector<16x16x128xf32>
    %51 = vector.extract_strided_slice %43 {offsets = [2, 1, 0], sizes = [16, 16, 128], strides = [1, 1, 1]} : vector<18x18x128xf32> to vector<16x16x128xf32>
    %52 = vector.extract_strided_slice %43 {offsets = [2, 2, 0], sizes = [16, 16, 128], strides = [1, 1, 1]} : vector<18x18x128xf32> to vector<16x16x128xf32>
    %53 = tpu.concatenate %44, %45, %46, %47, %48, %49, %50, %51, %52 in 2 : vector<16x16x128xf32>, vector<16x16x128xf32>, vector<16x16x128xf32>, vector<16x16x128xf32>, vector<16x16x128xf32>, vector<16x16x128xf32>, vector<16x16x128xf32>, vector<16x16x128xf32>, vector<16x16x128xf32> -> vector<16x16x1152xf32>
    %54 = vector.shape_cast %53 : vector<16x16x1152xf32> to vector<256x1152xf32>
    %55 = arith.truncf %54 : vector<256x1152xf32> to vector<256x1152xbf16>
    %c0_35 = arith.constant 0 : index
    %c0_36 = arith.constant 0 : index
    %56 = vector.load %arg6[%c0_35, %c0_36] : memref<1152x256xbf16, #tpu.memory_space<vmem>>, vector<1152x256xbf16>
    %cst_37 = arith.constant dense<0.000000e+00> : vector<256x256xf32>
    %57 = tpu.matmul %55, %56, %cst_37 {dimension_numbers = #tpu.dot_dimension_numbers<[1], [0], [0], [1], [0, 0, 1, 1], [], []>} : vector<256x1152xbf16>, vector<1152x256xbf16>, vector<256x256xf32> -> vector<256x256xf32>
    %c0_38 = arith.constant 0 : index
    %c0_39 = arith.constant 0 : index
    %58 = vector.load %arg7[%c0_38, %c0_39] : memref<1x256xf32, #tpu.memory_space<vmem>>, vector<1x256xf32>
    %59 = vector.broadcast %58 : vector<1x256xf32> to vector<256x256xf32>
    %60 = arith.addf %57, %59 : vector<256x256xf32>
    %cst_40 = arith.constant 0.000000e+00 : f32
    %61 = vector.broadcast %cst_40 : f32 to vector<256x256xf32>
    %62 = arith.maximumf %60, %61 : vector<256x256xf32>
    %63 = vector.extract_strided_slice %62 {offsets = [0, 0], sizes = [256, 128], strides = [1, 1]} : vector<256x256xf32> to vector<256x128xf32>
    %64 = vector.shape_cast %63 : vector<256x128xf32> to vector<1x16x16x128xf32>
    %c0_41 = arith.constant 0 : index
    %c0_42 = arith.constant 0 : index
    %c0_43 = arith.constant 0 : index
    %c0_44 = arith.constant 0 : index
    %65 = vector.load %arg12[%c0_41, %c0_42, %c0_43, %c0_44] : memref<1x16x16x128xf32, #tpu.memory_space<vmem>>, vector<1x16x16x128xf32>
    tpu.vector_store %arg12[%c0_41, %c0_42, %c0_43, %c0_44], %64 {strides = array<i32>} : memref<1x16x16x128xf32, #tpu.memory_space<vmem>>, vector<1x16x16x128xf32>,
    %66 = vector.extract_strided_slice %62 {offsets = [0, 128], sizes = [256, 128], strides = [1, 1]} : vector<256x256xf32> to vector<256x128xf32>
    %67 = vector.shape_cast %66 : vector<256x128xf32> to vector<16x16x128xf32>
    %c1_45 = arith.constant 1 : index
    %c1_46 = arith.constant 1 : index
    %c0_47 = arith.constant 0 : index
    %68 = vector.load %arg15[%c1_45, %c1_46, %c0_47] : memref<18x18x128xf32, #tpu.memory_space<vmem>>, vector<16x16x128xf32>
    tpu.vector_store %arg15[%c1_45, %c1_46, %c0_47], %67 {strides = array<i32>} : memref<18x18x128xf32, #tpu.memory_space<vmem>>, vector<16x16x128xf32>,
    %c0_48 = arith.constant 0 : index
    %c0_49 = arith.constant 0 : index
    %c0_50 = arith.constant 0 : index
    %69 = vector.load %arg15[%c0_48, %c0_49, %c0_50] : memref<18x18x128xf32, #tpu.memory_space<vmem>>, vector<18x18x128xf32>
    %70 = vector.extract_strided_slice %69 {offsets = [0, 0, 0], sizes = [16, 16, 128], strides = [1, 1, 1]} : vector<18x18x128xf32> to vector<16x16x128xf32>
    %71 = vector.extract_strided_slice %69 {offsets = [0, 1, 0], sizes = [16, 16, 128], strides = [1, 1, 1]} : vector<18x18x128xf32> to vector<16x16x128xf32>
    %72 = vector.extract_strided_slice %69 {offsets = [0, 2, 0], sizes = [16, 16, 128], strides = [1, 1, 1]} : vector<18x18x128xf32> to vector<16x16x128xf32>
    %73 = vector.extract_strided_slice %69 {offsets = [1, 0, 0], sizes = [16, 16, 128], strides = [1, 1, 1]} : vector<18x18x128xf32> to vector<16x16x128xf32>
    %74 = vector.extract_strided_slice %69 {offsets = [1, 1, 0], sizes = [16, 16, 128], strides = [1, 1, 1]} : vector<18x18x128xf32> to vector<16x16x128xf32>
    %75 = vector.extract_strided_slice %69 {offsets = [1, 2, 0], sizes = [16, 16, 128], strides = [1, 1, 1]} : vector<18x18x128xf32> to vector<16x16x128xf32>
    %76 = vector.extract_strided_slice %69 {offsets = [2, 0, 0], sizes = [16, 16, 128], strides = [1, 1, 1]} : vector<18x18x128xf32> to vector<16x16x128xf32>
    %77 = vector.extract_strided_slice %69 {offsets = [2, 1, 0], sizes = [16, 16, 128], strides = [1, 1, 1]} : vector<18x18x128xf32> to vector<16x16x128xf32>
    %78 = vector.extract_strided_slice %69 {offsets = [2, 2, 0], sizes = [16, 16, 128], strides = [1, 1, 1]} : vector<18x18x128xf32> to vector<16x16x128xf32>
    %79 = tpu.concatenate %70, %71, %72, %73, %74, %75, %76, %77, %78 in 2 : vector<16x16x128xf32>, vector<16x16x128xf32>, vector<16x16x128xf32>, vector<16x16x128xf32>, vector<16x16x128xf32>, vector<16x16x128xf32>, vector<16x16x128xf32>, vector<16x16x128xf32>, vector<16x16x128xf32> -> vector<16x16x1152xf32>
    %80 = vector.shape_cast %79 : vector<16x16x1152xf32> to vector<256x1152xf32>
    %81 = arith.truncf %80 : vector<256x1152xf32> to vector<256x1152xbf16>
    %c0_51 = arith.constant 0 : index
    %c0_52 = arith.constant 0 : index
    %82 = vector.load %arg8[%c0_51, %c0_52] : memref<1152x128xbf16, #tpu.memory_space<vmem>>, vector<1152x128xbf16>
    %cst_53 = arith.constant dense<0.000000e+00> : vector<256x128xf32>
    %83 = tpu.matmul %81, %82, %cst_53 {dimension_numbers = #tpu.dot_dimension_numbers<[1], [0], [0], [1], [0, 0, 1, 1], [], []>} : vector<256x1152xbf16>, vector<1152x128xbf16>, vector<256x128xf32> -> vector<256x128xf32>
    %c0_54 = arith.constant 0 : index
    %c0_55 = arith.constant 0 : index
    %84 = vector.load %arg9[%c0_54, %c0_55] : memref<1x128xf32, #tpu.memory_space<vmem>>, vector<1x128xf32>
    %85 = vector.broadcast %84 : vector<1x128xf32> to vector<256x128xf32>
    %86 = arith.addf %83, %85 : vector<256x128xf32>
    %cst_56 = arith.constant 0.000000e+00 : f32
    %87 = vector.broadcast %cst_56 : f32 to vector<256x128xf32>
    %88 = arith.maximumf %86, %87 : vector<256x128xf32>
    %89 = vector.shape_cast %88 : vector<256x128xf32> to vector<1x16x16x128xf32>
    %c0_57 = arith.constant 0 : index
    %c0_58 = arith.constant 0 : index
    %c0_59 = arith.constant 0 : index
    %c0_60 = arith.constant 0 : index
    %90 = vector.load %arg13[%c0_57, %c0_58, %c0_59, %c0_60] : memref<1x16x16x128xf32, #tpu.memory_space<vmem>>, vector<1x16x16x128xf32>
    tpu.vector_store %arg13[%c0_57, %c0_58, %c0_59, %c0_60], %89 {strides = array<i32>} : memref<1x16x16x128xf32, #tpu.memory_space<vmem>>, vector<1x16x16x128xf32>,
    return
  }
  func.func @transform_0(%arg0: i32) -> (i32, i32, i32, i32) {
    %c0_i32 = arith.constant 0 : i32
    %c0_i32_0 = arith.constant 0 : i32
    %c0_i32_1 = arith.constant 0 : i32
    %c0_i32_2 = arith.constant 0 : i32
    return %arg0, %c0_i32, %c0_i32_0, %c0_i32_1 : i32, i32, i32, i32
  }
  func.func @transform_1(%arg0: i32) -> (i32, i32) {
    %c0_i32 = arith.constant 0 : i32
    %c0_i32_0 = arith.constant 0 : i32
    %c0_i32_1 = arith.constant 0 : i32
    return %c0_i32, %c0_i32_0 : i32, i32
  }
  func.func @transform_2(%arg0: i32) -> (i32, i32) {
    %c0_i32 = arith.constant 0 : i32
    %c0_i32_0 = arith.constant 0 : i32
    %c0_i32_1 = arith.constant 0 : i32
    return %c0_i32, %c0_i32_0 : i32, i32
  }
  func.func @transform_3(%arg0: i32) -> (i32, i32) {
    %c0_i32 = arith.constant 0 : i32
    %c0_i32_0 = arith.constant 0 : i32
    %c0_i32_1 = arith.constant 0 : i32
    return %c0_i32, %c0_i32_0 : i32, i32
  }
  func.func @transform_4(%arg0: i32) -> (i32, i32) {
    %c0_i32 = arith.constant 0 : i32
    %c0_i32_0 = arith.constant 0 : i32
    %c0_i32_1 = arith.constant 0 : i32
    return %c0_i32, %c0_i32_0 : i32, i32
  }
  func.func @transform_5(%arg0: i32) -> (i32, i32) {
    %c0_i32 = arith.constant 0 : i32
    %c0_i32_0 = arith.constant 0 : i32
    %c0_i32_1 = arith.constant 0 : i32
    return %c0_i32, %c0_i32_0 : i32, i32
  }
  func.func @transform_6(%arg0: i32) -> (i32, i32) {
    %c0_i32 = arith.constant 0 : i32
    %c0_i32_0 = arith.constant 0 : i32
    %c0_i32_1 = arith.constant 0 : i32
    return %c0_i32, %c0_i32_0 : i32, i32
  }
  func.func @transform_7(%arg0: i32) -> (i32, i32) {
    %c0_i32 = arith.constant 0 : i32
    %c0_i32_0 = arith.constant 0 : i32
    %c0_i32_1 = arith.constant 0 : i32
    return %c0_i32, %c0_i32_0 : i32, i32
  }
  func.func @transform_8(%arg0: i32) -> (i32, i32) {
    %c0_i32 = arith.constant 0 : i32
    %c0_i32_0 = arith.constant 0 : i32
    %c0_i32_1 = arith.constant 0 : i32
    return %c0_i32, %c0_i32_0 : i32, i32
  }
  func.func @transform_9(%arg0: i32) -> (i32, i32, i32, i32) {
    %c0_i32 = arith.constant 0 : i32
    %c0_i32_0 = arith.constant 0 : i32
    %c0_i32_1 = arith.constant 0 : i32
    %c0_i32_2 = arith.constant 0 : i32
    return %arg0, %c0_i32, %c0_i32_0, %c0_i32_1 : i32, i32, i32, i32
  }
  func.func @transform_10(%arg0: i32) -> (i32, i32, i32, i32) {
    %c0_i32 = arith.constant 0 : i32
    %c0_i32_0 = arith.constant 0 : i32
    %c0_i32_1 = arith.constant 0 : i32
    %c0_i32_2 = arith.constant 0 : i32
    return %arg0, %c0_i32, %c0_i32_0, %c0_i32_1 : i32, i32, i32, i32
  }
  func.func @transform_11(%arg0: i32) -> (i32, i32, i32, i32) {
    %c0_i32 = arith.constant 0 : i32
    %c0_i32_0 = arith.constant 0 : i32
    %c0_i32_1 = arith.constant 0 : i32
    %c0_i32_2 = arith.constant 0 : i32
    return %arg0, %c0_i32, %c0_i32_0, %c0_i32_1 : i32, i32, i32, i32
  }
  func.func @transform_12(%arg0: i32) -> (i32, i32, i32, i32) {
    %c0_i32 = arith.constant 0 : i32
    %c0_i32_0 = arith.constant 0 : i32
    %c0_i32_1 = arith.constant 0 : i32
    %c0_i32_2 = arith.constant 0 : i32
    return %arg0, %c0_i32, %c0_i32_0, %c0_i32_1 : i32, i32, i32, i32
  }
}

</mosaic_0001>

<llo_original>
// kernel: inception_a_forward.1
$region0: #{inception_a_forward.1}
  #allocation0 [shape = 'u32[]', space=smem, size = 0x4, offset = 0x4, fixed_abs, tag = 'smem constant byte address 0x4 - core index']
  #allocation1 [shape = 'u32[144,128]{1,0:T(1,128)}', space=vmem, size = 0x12000, scoped, tag = 'internal scratch']
  #allocation2 [shape = 'f32[18,18,128]{2,1,0:T(8,128)}', space=vmem, size = 0x36000, scoped, tag = 'scratch operand']
  #allocation3 [shape = 'f32[18,18,128]{2,1,0:T(8,128)}', space=vmem, size = 0x36000, scoped, tag = 'scratch operand']
  %s0 = inlined_call_operand.vmem [shape: bf16[2,18,18,32], index: 0, kind: input, shape index: {}]
  %s1 = inlined_call_operand.vmem [shape: bf16[32,128], index: 1, kind: input, shape index: {}]
  %s2 = inlined_call_operand.vmem [shape: f32[1,128], index: 2, kind: input, shape index: {}]
  %s3 = inlined_call_operand.vmem [shape: bf16[32,256], index: 3, kind: input, shape index: {}]
  %s4 = inlined_call_operand.vmem [shape: f32[1,256], index: 4, kind: input, shape index: {}]
  %s5 = inlined_call_operand.vmem [shape: bf16[1152,256], index: 5, kind: input, shape index: {}]
  %s6 = inlined_call_operand.vmem [shape: f32[1,256], index: 6, kind: input, shape index: {}]
  %s7 = inlined_call_operand.hbm [shape: bf16[1152,128], index: 7, kind: input, shape index: {}]
  %s8 = inlined_call_operand.vmem [shape: f32[1,128], index: 8, kind: input, shape index: {}]
  %s9 = inlined_call_operand.vmem [shape: f32[2,16,16,128], index: 9, kind: output, shape index: {0}]
  %s10 = inlined_call_operand.vmem [shape: f32[2,16,16,128], index: 10, kind: output, shape index: {1}]
  %s11 = inlined_call_operand.vmem [shape: f32[2,16,16,128], index: 11, kind: output, shape index: {2}]
  %s12 = inlined_call_operand.vmem [shape: f32[2,16,16,128], index: 12, kind: output, shape index: {3}]
  %13 = xla_tuple %s9, %s10, %s11, %s12
  %s14 = sld [smem:[#allocation0]]
  $region97: #{inception_a_forward.1} parent=0
    _
  %s16 = ssub.s32 1, %s14
  %s17 = scalar_select 0, %s16, %s14
  $region1: #{inception_a_forward.1} parent=0
    #allocation4 [shape = 'u8[294912]{0}', space=vmem, size = 0x48000, scoped, tag = 'input window, operand 7, single buffered']
    #allocation5 [shape = 's32[2]{0}', space=sflag, size = 0x8, scoped, tag = 'scoped memory for inception_a_forward.1']
    %18 = vsyncpa [#allocation5], 0
    loop: start=0, step=1, limit=4
    $region2: #{inception_a_forward.1} parent=1 // loop_pre_header
      _
    $region3: #{inception_a_forward.1} parent=1 // loop_header
      %s20 = sphi 0, %s24
      %p21 = scmp.ge.s32.totalorder %s20, 4
      %s30 = sphi 0, %s32
      %s33 = sphi 0, %s30
      %s34 = sphi 0, %s33
      %s50 = sphi 0, %s34
      %s54 = sphi 0, %s54
      %s56 = sphi 0, %s54
      %s57 = sphi 0, %s56
      %s71 = sphi 0, %s57
      %s75 = sphi 0, %s75
      %s77 = sphi 0, %s75
      %s78 = sphi 0, %s77
      %s92 = sphi 0, %s78
      %s96 = sphi 0, %s96
      %s98 = sphi 0, %s96
      %s99 = sphi 0, %s98
      %s113 = sphi 0, %s99
      %s117 = sphi 0, %s117
      %s119 = sphi 0, %s117
      %s120 = sphi 0, %s119
      %s134 = sphi 0, %s120
      %s138 = sphi 0, %s138
      %s140 = sphi 0, %s138
      %s141 = sphi 0, %s140
      %s155 = sphi 0, %s141
      %s159 = sphi 0, %s159
      %s161 = sphi 0, %s159
      %s162 = sphi 0, %s161
      %s176 = sphi 0, %s162
      %s180 = sphi 0, %s180
      %s182 = sphi 0, %s180
      %s183 = sphi 0, %s182
      %s197 = sphi 0, %s183
      %s201 = sphi 0, %s201
      %s203 = sphi 0, %s201
      %s204 = sphi 0, %s203
      %s218 = sphi 0, %s204
      %s224 = sphi 0, %s226
      %s227 = sphi 0, %s224
      %s228 = sphi 0, %s227
      %s244 = sphi 0, %s228
      %s250 = sphi 0, %s252
      %s253 = sphi 0, %s250
      %s254 = sphi 0, %s253
      %s270 = sphi 0, %s254
      %s276 = sphi 0, %s278
      %s279 = sphi 0, %s276
      %s280 = sphi 0, %s279
      %s296 = sphi 0, %s280
      %s302 = sphi 0, %s304
      %s305 = sphi 0, %s302
      %s306 = sphi 0, %s305
      %s322 = sphi 0, %s306
    $region4: #{inception_a_forward.1} parent=1 // loop_header_branch
      %23 = sbr.rel (%p21) target = $region8
    $region5: #{inception_a_forward.1} parent=1 // loop_body
      %s25 = ssub.s32 %s20, 1
      %s26 = ssub.s32 %s20, 2
      %s27 = sadd.s32 %s20, 1
      %s28 = ssub.s32 %s20, %s27
      %p29 = scmp.eq.s32.totalorder %s28, 0
      %s31 = sadd.s32 %s30, 1
      %s32 = scalar_select %p29, %s30, %s31
      %p35 = pneg %p29
      %p36 = scmp.eq.s32.totalorder %s20, 1
      %p37 = por %p35, %p36
      %p38 = scmp.ne.s32.totalorder %s30, %s33
      %p39 = scmp.eq.s32.totalorder %s20, 0
      %p40 = por %p38, %p39
      %p41 = scmp.ne.s32.totalorder %s30, %s33
      %p42 = scmp.eq.s32.totalorder %s25, 1
      %p43 = por %p41, %p42
      %p44 = scmp.ne.s32.totalorder %s33, %s34
      %p45 = scmp.eq.s32.totalorder %s25, 0
      %p46 = por %p44, %p45
      %p47 = scmp.ne.s32.totalorder %s33, %s34
      %p48 = scmp.eq.s32.totalorder %s26, 1
      %p49 = por %p47, %p48
      %p51 = scmp.ne.s32.totalorder %s34, %s50
      %p52 = scmp.eq.s32.totalorder %s26, 0
      %p53 = por %p51, %p52
      %s55 = sadd.s32 %s54, 1
      %p58 = scmp.eq.s32.totalorder %s20, 1
      %p59 = scmp.ne.s32.totalorder %s54, %s56
      %p60 = scmp.eq.s32.totalorder %s20, 0
      %p61 = por %p59, %p60
      %p62 = scmp.ne.s32.totalorder %s54, %s56
      %p63 = scmp.eq.s32.totalorder %s25, 1
      %p64 = por %p62, %p63
      %p65 = scmp.ne.s32.totalorder %s56, %s57
      %p66 = scmp.eq.s32.totalorder %s25, 0
      %p67 = por %p65, %p66
      %p68 = scmp.ne.s32.totalorder %s56, %s57
      %p69 = scmp.eq.s32.totalorder %s26, 1
      %p70 = por %p68, %p69
      %p72 = scmp.ne.s32.totalorder %s57, %s71
      %p73 = scmp.eq.s32.totalorder %s26, 0
      %p74 = por %p72, %p73
      %s76 = sadd.s32 %s75, 1
      %p79 = scmp.eq.s32.totalorder %s20, 1
      %p80 = scmp.ne.s32.totalorder %s75, %s77
      %p81 = scmp.eq.s32.totalorder %s20, 0
      %p82 = por %p80, %p81
      %p83 = scmp.ne.s32.totalorder %s75, %s77
      %p84 = scmp.eq.s32.totalorder %s25, 1
      %p85 = por %p83, %p84
      %p86 = scmp.ne.s32.totalorder %s77, %s78
      %p87 = scmp.eq.s32.totalorder %s25, 0
      %p88 = por %p86, %p87
      %p89 = scmp.ne.s32.totalorder %s77, %s78
      %p90 = scmp.eq.s32.totalorder %s26, 1
      %p91 = por %p89, %p90
      %p93 = scmp.ne.s32.totalorder %s78, %s92
      %p94 = scmp.eq.s32.totalorder %s26, 0
      %p95 = por %p93, %p94
      %s97 = sadd.s32 %s96, 1
      %p100 = scmp.eq.s32.totalorder %s20, 1
      %p101 = scmp.ne.s32.totalorder %s96, %s98
      %p102 = scmp.eq.s32.totalorder %s20, 0
      %p103 = por %p101, %p102
      %p104 = scmp.ne.s32.totalorder %s96, %s98
      %p105 = scmp.eq.s32.totalorder %s25, 1
      %p106 = por %p104, %p105
      %p107 = scmp.ne.s32.totalorder %s98, %s99
      %p108 = scmp.eq.s32.totalorder %s25, 0
      %p109 = por %p107, %p108
      %p110 = scmp.ne.s32.totalorder %s98, %s99
      %p111 = scmp.eq.s32.totalorder %s26, 1
      %p112 = por %p110, %p111
      %p114 = scmp.ne.s32.totalorder %s99, %s113
      %p115 = scmp.eq.s32.totalorder %s26, 0
      %p116 = por %p114, %p115
      %s118 = sadd.s32 %s117, 1
      %p121 = scmp.eq.s32.totalorder %s20, 1
      %p122 = scmp.ne.s32.totalorder %s117, %s119
      %p123 = scmp.eq.s32.totalorder %s20, 0
      %p124 = por %p122, %p123
      %p125 = scmp.ne.s32.totalorder %s117, %s119
      %p126 = scmp.eq.s32.totalorder %s25, 1
      %p127 = por %p125, %p126
      %p128 = scmp.ne.s32.totalorder %s119, %s120
      %p129 = scmp.eq.s32.totalorder %s25, 0
      %p130 = por %p128, %p129
      %p131 = scmp.ne.s32.totalorder %s119, %s120
      %p132 = scmp.eq.s32.totalorder %s26, 1
      %p133 = por %p131, %p132
      %p135 = scmp.ne.s32.totalorder %s120, %s134
      %p136 = scmp.eq.s32.totalorder %s26, 0
      %p137 = por %p135, %p136
      %s139 = sadd.s32 %s138, 1
      %p142 = scmp.eq.s32.totalorder %s20, 1
      %p143 = scmp.ne.s32.totalorder %s138, %s140
      %p144 = scmp.eq.s32.totalorder %s20, 0
      %p145 = por %p143, %p144
      %p146 = scmp.ne.s32.totalorder %s138, %s140
      %p147 = scmp.eq.s32.totalorder %s25, 1
      %p148 = por %p146, %p147
      %p149 = scmp.ne.s32.totalorder %s140, %s141
      %p150 = scmp.eq.s32.totalorder %s25, 0
      %p151 = por %p149, %p150
      %p152 = scmp.ne.s32.totalorder %s140, %s141
      %p153 = scmp.eq.s32.totalorder %s26, 1
      %p154 = por %p152, %p153
      %p156 = scmp.ne.s32.totalorder %s141, %s155
      %p157 = scmp.eq.s32.totalorder %s26, 0
      %p158 = por %p156, %p157
      %s160 = sadd.s32 %s159, 1
      %p163 = scmp.eq.s32.totalorder %s20, 1
      %p164 = scmp.ne.s32.totalorder %s159, %s161
      %p165 = scmp.eq.s32.totalorder %s20, 0
      %p166 = por %p164, %p165
      %p167 = scmp.ne.s32.totalorder %s159, %s161
      %p168 = scmp.eq.s32.totalorder %s25, 1
      %p169 = por %p167, %p168
      %p170 = scmp.ne.s32.totalorder %s161, %s162
      %p171 = scmp.eq.s32.totalorder %s25, 0
      %p172 = por %p170, %p171
      %p173 = scmp.ne.s32.totalorder %s161, %s162
      %p174 = scmp.eq.s32.totalorder %s26, 1
      %p175 = por %p173, %p174
      %p177 = scmp.ne.s32.totalorder %s162, %s176
      %p178 = scmp.eq.s32.totalorder %s26, 0
      %p179 = por %p177, %p178
      %s181 = sadd.s32 %s180, 1
      %p184 = scmp.eq.s32.totalorder %s20, 1
      %p185 = scmp.ne.s32.totalorder %s180, %s182
      %p186 = scmp.eq.s32.totalorder %s20, 0
      %p187 = por %p185, %p186
      %p188 = scmp.ne.s32.totalorder %s180, %s182
      %p189 = scmp.eq.s32.totalorder %s25, 1
      %p190 = por %p188, %p189
      %p191 = scmp.ne.s32.totalorder %s182, %s183
      %p192 = scmp.eq.s32.totalorder %s25, 0
      %p193 = por %p191, %p192
      %p194 = scmp.ne.s32.totalorder %s182, %s183
      %p195 = scmp.eq.s32.totalorder %s26, 1
      %p196 = por %p194, %p195
      %p198 = scmp.ne.s32.totalorder %s183, %s197
      %p199 = scmp.eq.s32.totalorder %s26, 0
      %p200 = por %p198, %p199
      %s202 = sadd.s32 %s201, 1
      %p205 = scmp.eq.s32.totalorder %s20, 1
      %p206 = scmp.ne.s32.totalorder %s201, %s203
      %p207 = scmp.eq.s32.totalorder %s20, 0
      %p208 = por %p206, %p207
      %p209 = scmp.ne.s32.totalorder %s201, %s203
      %p210 = scmp.eq.s32.totalorder %s25, 1
      %p211 = por %p209, %p210
      %p212 = scmp.ne.s32.totalorder %s203, %s204
      %p213 = scmp.eq.s32.totalorder %s25, 0
      %p214 = por %p212, %p213
      %p215 = scmp.ne.s32.totalorder %s203, %s204
      %p216 = scmp.eq.s32.totalorder %s26, 1
      %p217 = por %p215, %p216
      %p219 = scmp.ne.s32.totalorder %s204, %s218
      %p220 = scmp.eq.s32.totalorder %s26, 0
      %p221 = por %p219, %p220
      %s222 = ssub.s32 %s20, %s27
      %p223 = scmp.eq.s32.totalorder %s222, 0
      %s225 = sadd.s32 %s224, 1
      %s226 = scalar_select %p223, %s224, %s225
      %p229 = pneg %p223
      %p230 = scmp.eq.s32.totalorder %s20, 1
      %p231 = por %p229, %p230
      %p232 = scmp.ne.s32.totalorder %s224, %s227
      %p233 = scmp.eq.s32.totalorder %s20, 0
      %p234 = por %p232, %p233
      %p235 = scmp.ne.s32.totalorder %s224, %s227
      %p236 = scmp.eq.s32.totalorder %s25, 1
      %p237 = por %p235, %p236
      %p238 = scmp.ne.s32.totalorder %s227, %s228
      %p239 = scmp.eq.s32.totalorder %s25, 0
      %p240 = por %p238, %p239
      %p241 = scmp.ne.s32.totalorder %s227, %s228
      %p242 = scmp.eq.s32.totalorder %s26, 1
      %p243 = por %p241, %p242
      %p245 = scmp.ne.s32.totalorder %s228, %s244
      %p246 = scmp.eq.s32.totalorder %s26, 0
      %p247 = por %p245, %p246
      %s248 = ssub.s32 %s20, %s27
      %p249 = scmp.eq.s32.totalorder %s248, 0
      %s251 = sadd.s32 %s250, 1
      %s252 = scalar_select %p249, %s250, %s251
      %p255 = pneg %p249
      %p256 = scmp.eq.s32.totalorder %s20, 1
      %p257 = por %p255, %p256
      %p258 = scmp.ne.s32.totalorder %s250, %s253
      %p259 = scmp.eq.s32.totalorder %s20, 0
      %p260 = por %p258, %p259
      %p261 = scmp.ne.s32.totalorder %s250, %s253
      %p262 = scmp.eq.s32.totalorder %s25, 1
      %p263 = por %p261, %p262
      %p264 = scmp.ne.s32.totalorder %s253, %s254
      %p265 = scmp.eq.s32.totalorder %s25, 0
      %p266 = por %p264, %p265
      %p267 = scmp.ne.s32.totalorder %s253, %s254
      %p268 = scmp.eq.s32.totalorder %s26, 1
      %p269 = por %p267, %p268
      %p271 = scmp.ne.s32.totalorder %s254, %s270
      %p272 = scmp.eq.s32.totalorder %s26, 0
      %p273 = por %p271, %p272
      %s274 = ssub.s32 %s20, %s27
      %p275 = scmp.eq.s32.totalorder %s274, 0
      %s277 = sadd.s32 %s276, 1
      %s278 = scalar_select %p275, %s276, %s277
      %p281 = pneg %p275
      %p282 = scmp.eq.s32.totalorder %s20, 1
      %p283 = por %p281, %p282
      %p284 = scmp.ne.s32.totalorder %s276, %s279
      %p285 = scmp.eq.s32.totalorder %s20, 0
      %p286 = por %p284, %p285
      %p287 = scmp.ne.s32.totalorder %s276, %s279
      %p288 = scmp.eq.s32.totalorder %s25, 1
      %p289 = por %p287, %p288
      %p290 = scmp.ne.s32.totalorder %s279, %s280
      %p291 = scmp.eq.s32.totalorder %s25, 0
      %p292 = por %p290, %p291
      %p293 = scmp.ne.s32.totalorder %s279, %s280
      %p294 = scmp.eq.s32.totalorder %s26, 1
      %p295 = por %p293, %p294
      %p297 = scmp.ne.s32.totalorder %s280, %s296
      %p298 = scmp.eq.s32.totalorder %s26, 0
      %p299 = por %p297, %p298
      %s300 = ssub.s32 %s20, %s27
      %p301 = scmp.eq.s32.totalorder %s300, 0
      %s303 = sadd.s32 %s302, 1
      %s304 = scalar_select %p301, %s302, %s303
      %p307 = pneg %p301
      %p308 = scmp.eq.s32.totalorder %s20, 1
      %p309 = por %p307, %p308
      %p310 = scmp.ne.s32.totalorder %s302, %s305
      %p311 = scmp.eq.s32.totalorder %s20, 0
      %p312 = por %p310, %p311
      %p313 = scmp.ne.s32.totalorder %s302, %s305
      %p314 = scmp.eq.s32.totalorder %s25, 1
      %p315 = por %p313, %p314
      %p316 = scmp.ne.s32.totalorder %s305, %s306
      %p317 = scmp.eq.s32.totalorder %s25, 0
      %p318 = por %p316, %p317
      %p319 = scmp.ne.s32.totalorder %s305, %s306
      %p320 = scmp.eq.s32.totalorder %s26, 1
      %p321 = por %p319, %p320
      %p323 = scmp.ne.s32.totalorder %s306, %s322
      %p324 = scmp.eq.s32.totalorder %s26, 0
      %p325 = por %p323, %p324
      %p326 = scmp.le.s32.totalorder 1, %s20
      %p327 = scmp.lt.s32.totalorder %s20, 3
      %p328 = pnand %p326, %p327
      %p329 = pneg %p328
      // Predicated region
      $region9: #{inception_a_forward.1} parent=5 // pred_check
        _
      $region10: #{inception_a_forward.1} parent=5 // pred_check_branch
        %331 = sbr.rel (%p328) target = $region12
      $region11: #{inception_a_forward.1} parent=5 // pred_region
        %s332 = ssub.s32 %s20, 1
        // Predicated region
        $region13: #{inception_a_forward.1} parent=11 // pred_check
          %p333 = pneg %p67
        $region14: #{inception_a_forward.1} parent=11 // pred_check_branch
          %335 = sbr.rel (%p333) target = $region16
        $region15: #{inception_a_forward.1} parent=11 // pred_region
          _
        $region16: #{inception_a_forward.1} parent=11 // pred_fallthru
          _
        // Predicated region
        $region17: #{inception_a_forward.1} parent=11 // pred_check
          %p336 = pneg %p88
        $region18: #{inception_a_forward.1} parent=11 // pred_check_branch
          %338 = sbr.rel (%p336) target = $region20
        $region19: #{inception_a_forward.1} parent=11 // pred_region
          _
        $region20: #{inception_a_forward.1} parent=11 // pred_fallthru
          _
        // Predicated region
        $region21: #{inception_a_forward.1} parent=11 // pred_check
          %p339 = pneg %p109
        $region22: #{inception_a_forward.1} parent=11 // pred_check_branch
          %341 = sbr.rel (%p339) target = $region24
        $region23: #{inception_a_forward.1} parent=11 // pred_region
          _
        $region24: #{inception_a_forward.1} parent=11 // pred_fallthru
          _
        // Predicated region
        $region25: #{inception_a_forward.1} parent=11 // pred_check
          %p342 = pneg %p130
        $region26: #{inception_a_forward.1} parent=11 // pred_check_branch
          %344 = sbr.rel (%p342) target = $region28
        $region27: #{inception_a_forward.1} parent=11 // pred_region
          _
        $region28: #{inception_a_forward.1} parent=11 // pred_fallthru
          _
        // Predicated region
        $region29: #{inception_a_forward.1} parent=11 // pred_check
          %p345 = pneg %p151
        $region30: #{inception_a_forward.1} parent=11 // pred_check_branch
          %347 = sbr.rel (%p345) target = $region32
        $region31: #{inception_a_forward.1} parent=11 // pred_region
          _
        $region32: #{inception_a_forward.1} parent=11 // pred_fallthru
          _
        // Predicated region
        $region33: #{inception_a_forward.1} parent=11 // pred_check
          %p348 = pneg %p172
        $region34: #{inception_a_forward.1} parent=11 // pred_check_branch
          %350 = sbr.rel (%p348) target = $region36
        $region35: #{inception_a_forward.1} parent=11 // pred_region
          _
        $region36: #{inception_a_forward.1} parent=11 // pred_fallthru
          _
        // Predicated region
        $region37: #{inception_a_forward.1} parent=11 // pred_check
          %p351 = pneg %p193
        $region38: #{inception_a_forward.1} parent=11 // pred_check_branch
          %353 = sbr.rel (%p351) target = $region40
        $region39: #{inception_a_forward.1} parent=11 // pred_region
          %s355 = ssub.s32 9216, 9216
          %356 = vsyncadd [#allocation5], %s355
          %s357 = sshll.u32 [#allocation4], 4
          %s358 = int_to_ptr.vmem [resolvable:$true] %s357
          %363 = dma.hbm_to_vmem [thread:$0]  %s7, 9216, %s358, [#allocation5], 64, 64, 4
        $region40: #{inception_a_forward.1} parent=11 // pred_fallthru
          _
        // Predicated region
        $region41: #{inception_a_forward.1} parent=11 // pred_check
          %p364 = pneg %p214
        $region42: #{inception_a_forward.1} parent=11 // pred_check_branch
          %366 = sbr.rel (%p364) target = $region44
        $region43: #{inception_a_forward.1} parent=11 // pred_region
          _
        $region44: #{inception_a_forward.1} parent=11 // pred_fallthru
          _
      $region12: #{inception_a_forward.1} parent=5 // pred_fallthru
        _
      %p367 = scmp.lt.s32.totalorder %s20, 2
      // Predicated region
      $region45: #{inception_a_forward.1} parent=5 // pred_check
        %p368 = pneg %p367
      $region46: #{inception_a_forward.1} parent=5 // pred_check_branch
        %370 = sbr.rel (%p368) target = $region48
      $region47: #{inception_a_forward.1} parent=5 // pred_region
        // Predicated region
        $region49: #{inception_a_forward.1} parent=47 // pred_check
          %p371 = pneg %p40
        $region50: #{inception_a_forward.1} parent=47 // pred_check_branch
          %373 = sbr.rel (%p371) target = $region52
        $region51: #{inception_a_forward.1} parent=47 // pred_region
          %p374 = scmp.lt.s32.totalorder %s20, 1
          %s375 = scalar_select %p374, %s20, 1
          %s376 = smul.addr %s375, 54
          %s377 = smul.addr %s376, 4
          %s378 = scalar_lea.vmem %s0, %s377
        $region52: #{inception_a_forward.1} parent=47 // pred_fallthru
          _
      $region48: #{inception_a_forward.1} parent=5 // pred_fallthru
        _
      %p379 = scmp.le.s32.totalorder 1, %s20
      %p380 = scmp.lt.s32.totalorder %s20, 3
      %p381 = pnand %p379, %p380
      %p382 = pneg %p381
      // Predicated region
      $region53: #{inception_a_forward.1} parent=5 // pred_check
        _
      $region54: #{inception_a_forward.1} parent=5 // pred_check_branch
        %384 = sbr.rel (%p381) target = $region56
      $region55: #{inception_a_forward.1} parent=5 // pred_region
        %s385 = ssub.s32 %s20, 1
        // Predicated region
        $region57: #{inception_a_forward.1} parent=55 // pred_check
          %p386 = pneg %p193
        $region58: #{inception_a_forward.1} parent=55 // pred_check_branch
          %388 = sbr.rel (%p386) target = $region60
        $region59: #{inception_a_forward.1} parent=55 // pred_region
          %389 = dma.done [#allocation5], 9216
        $region60: #{inception_a_forward.1} parent=55 // pred_fallthru
          _
        %p390 = scmp.lt.s32.totalorder %s25, 1
        %s391 = scalar_select %p390, %s25, 1
        %s392 = smul.addr %s391, 54
        %s393 = smul.addr %s392, 4
        %s394 = scalar_lea.vmem %s0, %s393
        %p395 = pneg %p46
        %p396 = pneg %p43
        %p397 = pneg %p67
        %p398 = pneg %p64
        %p399 = pneg %p88
        %p400 = pneg %p85
        %p401 = pneg %p109
        %p402 = pneg %p106
        %p403 = pneg %p130
        %p404 = pneg %p127
        %p405 = pneg %p151
        %p406 = pneg %p148
        %p407 = pneg %p172
        %p408 = pneg %p169
        %p409 = pneg %p193
        %p410 = pneg %p190
        %p411 = pneg %p214
        %p412 = pneg %p211
        %p413 = pneg %p240
        %p414 = pneg %p237
        %p415 = scmp.lt.s32.totalorder %s25, 1
        %s416 = scalar_select %p415, %s25, 1
        %s417 = smul.addr %s416, 32
        %s418 = smul.addr %s417, 8
        %s419 = scalar_lea.vmem %s9, %s418
        %p420 = pneg %p266
        %p421 = pneg %p263
        %p422 = scmp.lt.s32.totalorder %s25, 1
        %s423 = scalar_select %p422, %s25, 1
        %s424 = smul.addr %s423, 32
        %s425 = smul.addr %s424, 8
        %s426 = scalar_lea.vmem %s10, %s425
        %p427 = pneg %p292
        %p428 = pneg %p289
        %p429 = scmp.lt.s32.totalorder %s25, 1
        %s430 = scalar_select %p429, %s25, 1
        %s431 = smul.addr %s430, 32
        %s432 = smul.addr %s431, 8
        %s433 = scalar_lea.vmem %s11, %s432
        %p434 = pneg %p318
        %p435 = pneg %p315
        %p436 = scmp.lt.s32.totalorder %s25, 1
        %s437 = scalar_select %p436, %s25, 1
        %s438 = smul.addr %s437, 32
        %s439 = smul.addr %s438, 8
        %s440 = scalar_lea.vmem %s12, %s439
        %p441 = scmp.lt.s32.totalorder %s25, 1
        %s442 = scalar_select %p441, %s25, 1
        %s443 = smul.addr %s442, 54
        %s444 = smul.addr %s443, 4
        %s445 = scalar_lea.vmem %s0, %s444
        %p446 = scmp.lt.s32.totalorder %s25, 1
        %s447 = scalar_select %p446, %s25, 1
        %s448 = smul.addr %s447, 32
        %s449 = smul.addr %s448, 8
        %s450 = scalar_lea.vmem %s9, %s449
        %p451 = scmp.lt.s32.totalorder %s25, 1
        %s452 = scalar_select %p451, %s25, 1
        %s453 = smul.addr %s452, 32
        %s454 = smul.addr %s453, 8
        %s455 = scalar_lea.vmem %s10, %s454
        %p456 = scmp.lt.s32.totalorder %s25, 1
        %s457 = scalar_select %p456, %s25, 1
        %s458 = smul.addr %s457, 32
        %s459 = smul.addr %s458, 8
        %s460 = scalar_lea.vmem %s11, %s459
        %p461 = scmp.lt.s32.totalorder %s25, 1
        %s462 = scalar_select %p461, %s25, 1
        %s463 = smul.addr %s462, 32
        %s464 = smul.addr %s463, 8
        %s465 = scalar_lea.vmem %s12, %s464
        %467 = vst [vmem:[#allocation2] sm:$0xff] 0.0
        %468 = vst [vmem:[#allocation2 + $0x8] sm:$0xff] 0.0
        %469 = vst [vmem:[#allocation2 + $0x10] sm:$0x3] 0.0
        %470 = vst [vmem:[#allocation2 + $0x18] sm:$0xff] 0.0
        %471 = vst [vmem:[#allocation2 + $0x20] sm:$0xff] 0.0
        %472 = vst [vmem:[#allocation2 + $0x28] sm:$0x3] 0.0
        %473 = vst [vmem:[#allocation2 + $0x30] sm:$0xff] 0.0
        %474 = vst [vmem:[#allocation2 + $0x38] sm:$0xff] 0.0
        %475 = vst [vmem:[#allocation2 + $0x40] sm:$0x3] 0.0
        %476 = vst [vmem:[#allocation2 + $0x48] sm:$0xff] 0.0
        %477 = vst [vmem:[#allocation2 + $0x50] sm:$0xff] 0.0
        %478 = vst [vmem:[#allocation2 + $0x58] sm:$0x3] 0.0
        %479 = vst [vmem:[#allocation2 + $0x60] sm:$0xff] 0.0
        %480 = vst [vmem:[#allocation2 + $0x68] sm:$0xff] 0.0
        %481 = vst [vmem:[#allocation2 + $0x70] sm:$0x3] 0.0
        %482 = vst [vmem:[#allocation2 + $0x78] sm:$0xff] 0.0
        %483 = vst [vmem:[#allocation2 + $0x80] sm:$0xff] 0.0
        %484 = vst [vmem:[#allocation2 + $0x88] sm:$0x3] 0.0
        %485 = vst [vmem:[#allocation2 + $0x90] sm:$0xff] 0.0
        %486 = vst [vmem:[#allocation2 + $0x98] sm:$0xff] 0.0
        %487 = vst [vmem:[#allocation2 + $0xa0] sm:$0x3] 0.0
        %488 = vst [vmem:[#allocation2 + $0xa8] sm:$0xff] 0.0
        %489 = vst [vmem:[#allocation2 + $0xb0] sm:$0xff] 0.0
        %490 = vst [vmem:[#allocation2 + $0xb8] sm:$0x3] 0.0
        %491 = vst [vmem:[#allocation2 + $0xc0] sm:$0xff] 0.0
        %492 = vst [vmem:[#allocation2 + $0xc8] sm:$0xff] 0.0
        %493 = vst [vmem:[#allocation2 + $0xd0] sm:$0x3] 0.0
        %494 = vst [vmem:[#allocation2 + $0xd8] sm:$0xff] 0.0
        %495 = vst [vmem:[#allocation2 + $0xe0] sm:$0xff] 0.0
        %496 = vst [vmem:[#allocation2 + $0xe8] sm:$0x3] 0.0
        %497 = vst [vmem:[#allocation2 + $0xf0] sm:$0xff] 0.0
        %498 = vst [vmem:[#allocation2 + $0xf8] sm:$0xff] 0.0
        %499 = vst [vmem:[#allocation2 + $0x100] sm:$0x3] 0.0
        %500 = vst [vmem:[#allocation2 + $0x108] sm:$0xff] 0.0
        %501 = vst [vmem:[#allocation2 + $0x110] sm:$0xff] 0.0
        %502 = vst [vmem:[#allocation2 + $0x118] sm:$0x3] 0.0
        %503 = vst [vmem:[#allocation2 + $0x120] sm:$0xff] 0.0
        %504 = vst [vmem:[#allocation2 + $0x128] sm:$0xff] 0.0
        %505 = vst [vmem:[#allocation2 + $0x130] sm:$0x3] 0.0
        %506 = vst [vmem:[#allocation2 + $0x138] sm:$0xff] 0.0
        %507 = vst [vmem:[#allocation2 + $0x140] sm:$0xff] 0.0
        %508 = vst [vmem:[#allocation2 + $0x148] sm:$0x3] 0.0
        %509 = vst [vmem:[#allocation2 + $0x150] sm:$0xff] 0.0
        %510 = vst [vmem:[#allocation2 + $0x158] sm:$0xff] 0.0
        %511 = vst [vmem:[#allocation2 + $0x160] sm:$0x3] 0.0
        %512 = vst [vmem:[#allocation2 + $0x168] sm:$0xff] 0.0
        %513 = vst [vmem:[#allocation2 + $0x170] sm:$0xff] 0.0
        %514 = vst [vmem:[#allocation2 + $0x178] sm:$0x3] 0.0
        %515 = vst [vmem:[#allocation2 + $0x180] sm:$0xff] 0.0
        %516 = vst [vmem:[#allocation2 + $0x188] sm:$0xff] 0.0
        %517 = vst [vmem:[#allocation2 + $0x190] sm:$0x3] 0.0
        %518 = vst [vmem:[#allocation2 + $0x198] sm:$0xff] 0.0
        %519 = vst [vmem:[#allocation2 + $0x1a0] sm:$0xff] 0.0
        %520 = vst [vmem:[#allocation2 + $0x1a8] sm:$0x3] 0.0
        %521 = vst [vmem:[#allocation3] sm:$0xff] 0.0
        %522 = vst [vmem:[#allocation3 + $0x8] sm:$0xff] 0.0
        %523 = vst [vmem:[#allocation3 + $0x10] sm:$0x3] 0.0
        %524 = vst [vmem:[#allocation3 + $0x18] sm:$0xff] 0.0
        %525 = vst [vmem:[#allocation3 + $0x20] sm:$0xff] 0.0
        %526 = vst [vmem:[#allocation3 + $0x28] sm:$0x3] 0.0
        %527 = vst [vmem:[#allocation3 + $0x30] sm:$0xff] 0.0
        %528 = vst [vmem:[#allocation3 + $0x38] sm:$0xff] 0.0
        %529 = vst [vmem:[#allocation3 + $0x40] sm:$0x3] 0.0
        %530 = vst [vmem:[#allocation3 + $0x48] sm:$0xff] 0.0
        %531 = vst [vmem:[#allocation3 + $0x50] sm:$0xff] 0.0
        %532 = vst [vmem:[#allocation3 + $0x58] sm:$0x3] 0.0
        %533 = vst [vmem:[#allocation3 + $0x60] sm:$0xff] 0.0
        %534 = vst [vmem:[#allocation3 + $0x68] sm:$0xff] 0.0
        %535 = vst [vmem:[#allocation3 + $0x70] sm:$0x3] 0.0
        %536 = vst [vmem:[#allocation3 + $0x78] sm:$0xff] 0.0
        %537 = vst [vmem:[#allocation3 + $0x80] sm:$0xff] 0.0
        %538 = vst [vmem:[#allocation3 + $0x88] sm:$0x3] 0.0
        %539 = vst [vmem:[#allocation3 + $0x90] sm:$0xff] 0.0
        %540 = vst [vmem:[#allocation3 + $0x98] sm:$0xff] 0.0
        %541 = vst [vmem:[#allocation3 + $0xa0] sm:$0x3] 0.0
        %542 = vst [vmem:[#allocation3 + $0xa8] sm:$0xff] 0.0
        %543 = vst [vmem:[#allocation3 + $0xb0] sm:$0xff] 0.0
        %544 = vst [vmem:[#allocation3 + $0xb8] sm:$0x3] 0.0
        %545 = vst [vmem:[#allocation3 + $0xc0] sm:$0xff] 0.0
        %546 = vst [vmem:[#allocation3 + $0xc8] sm:$0xff] 0.0
        %547 = vst [vmem:[#allocation3 + $0xd0] sm:$0x3] 0.0
        %548 = vst [vmem:[#allocation3 + $0xd8] sm:$0xff] 0.0
        %549 = vst [vmem:[#allocation3 + $0xe0] sm:$0xff] 0.0
        %550 = vst [vmem:[#allocation3 + $0xe8] sm:$0x3] 0.0
        %551 = vst [vmem:[#allocation3 + $0xf0] sm:$0xff] 0.0
        %552 = vst [vmem:[#allocation3 + $0xf8] sm:$0xff] 0.0
        %553 = vst [vmem:[#allocation3 + $0x100] sm:$0x3] 0.0
        %554 = vst [vmem:[#allocation3 + $0x108] sm:$0xff] 0.0
        %555 = vst [vmem:[#allocation3 + $0x110] sm:$0xff] 0.0
        %556 = vst [vmem:[#allocation3 + $0x118] sm:$0x3] 0.0
        %557 = vst [vmem:[#allocation3 + $0x120] sm:$0xff] 0.0
        %558 = vst [vmem:[#allocation3 + $0x128] sm:$0xff] 0.0
        %559 = vst [vmem:[#allocation3 + $0x130] sm:$0x3] 0.0
        %560 = vst [vmem:[#allocation3 + $0x138] sm:$0xff] 0.0
        %561 = vst [vmem:[#allocation3 + $0x140] sm:$0xff] 0.0
        %562 = vst [vmem:[#allocation3 + $0x148] sm:$0x3] 0.0
        %563 = vst [vmem:[#allocation3 + $0x150] sm:$0xff] 0.0
        %564 = vst [vmem:[#allocation3 + $0x158] sm:$0xff] 0.0
        %565 = vst [vmem:[#allocation3 + $0x160] sm:$0x3] 0.0
        %566 = vst [vmem:[#allocation3 + $0x168] sm:$0xff] 0.0
        %567 = vst [vmem:[#allocation3 + $0x170] sm:$0xff] 0.0
        %568 = vst [vmem:[#allocation3 + $0x178] sm:$0x3] 0.0
        %569 = vst [vmem:[#allocation3 + $0x180] sm:$0xff] 0.0
        %570 = vst [vmem:[#allocation3 + $0x188] sm:$0xff] 0.0
        %571 = vst [vmem:[#allocation3 + $0x190] sm:$0x3] 0.0
        %572 = vst [vmem:[#allocation3 + $0x198] sm:$0xff] 0.0
        %573 = vst [vmem:[#allocation3 + $0x1a0] sm:$0xff] 0.0
        %574 = vst [vmem:[#allocation3 + $0x1a8] sm:$0x3] 0.0
        %v575 = vld [vmem:[%s445] sm:$0xf]
        %v576 = vld [vmem:[%s445 + $0x4] sm:$0xf]
        %v577 = vld [vmem:[%s445 + $0x8] sm:$0x1]
        %v578 = vld [vmem:[%s445 + $0xc] sm:$0xf]
        %v579 = vld [vmem:[%s445 + $0x10] sm:$0xf]
        %v580 = vld [vmem:[%s445 + $0x14] sm:$0x1]
        %v581 = vld [vmem:[%s445 + $0x18] sm:$0xf]
        %v582 = vld [vmem:[%s445 + $0x1c] sm:$0xf]
        %v583 = vld [vmem:[%s445 + $0x20] sm:$0x1]
        %v584 = vld [vmem:[%s445 + $0x24] sm:$0xf]
        %v585 = vld [vmem:[%s445 + $0x28] sm:$0xf]
        %v586 = vld [vmem:[%s445 + $0x2c] sm:$0x1]
        %v587 = vld [vmem:[%s445 + $0x30] sm:$0xf]
        %v588 = vld [vmem:[%s445 + $0x34] sm:$0xf]
        %v589 = vld [vmem:[%s445 + $0x38] sm:$0x1]
        %v590 = vld [vmem:[%s445 + $0x3c] sm:$0xf]
        %v591 = vld [vmem:[%s445 + $0x40] sm:$0xf]
        %v592 = vld [vmem:[%s445 + $0x44] sm:$0x1]
        %v593 = vld [vmem:[%s445 + $0x48] sm:$0xf]
        %v594 = vld [vmem:[%s445 + $0x4c] sm:$0xf]
        %v595 = vld [vmem:[%s445 + $0x50] sm:$0x1]
        %v596 = vld [vmem:[%s445 + $0x54] sm:$0xf]
        %v597 = vld [vmem:[%s445 + $0x58] sm:$0xf]
        %v598 = vld [vmem:[%s445 + $0x5c] sm:$0x1]
        %v599 = vld [vmem:[%s445 + $0x60] sm:$0xf]
        %v600 = vld [vmem:[%s445 + $0x64] sm:$0xf]
        %v601 = vld [vmem:[%s445 + $0x68] sm:$0x1]
        %v602 = vld [vmem:[%s445 + $0x6c] sm:$0xf]
        %v603 = vld [vmem:[%s445 + $0x70] sm:$0xf]
        %v604 = vld [vmem:[%s445 + $0x74] sm:$0x1]
        %v605 = vld [vmem:[%s445 + $0x78] sm:$0xf]
        %v606 = vld [vmem:[%s445 + $0x7c] sm:$0xf]
        %v607 = vld [vmem:[%s445 + $0x80] sm:$0x1]
        %v608 = vld [vmem:[%s445 + $0x84] sm:$0xf]
        %v609 = vld [vmem:[%s445 + $0x88] sm:$0xf]
        %v610 = vld [vmem:[%s445 + $0x8c] sm:$0x1]
        %v611 = vld [vmem:[%s445 + $0x90] sm:$0xf]
        %v612 = vld [vmem:[%s445 + $0x94] sm:$0xf]
        %v613 = vld [vmem:[%s445 + $0x98] sm:$0x1]
        %v614 = vld [vmem:[%s445 + $0x9c] sm:$0xf]
        %v615 = vld [vmem:[%s445 + $0xa0] sm:$0xf]
        %v616 = vld [vmem:[%s445 + $0xa4] sm:$0x1]
        %v617 = vld [vmem:[%s445 + $0xa8] sm:$0xf]
        %v618 = vld [vmem:[%s445 + $0xac] sm:$0xf]
        %v619 = vld [vmem:[%s445 + $0xb0] sm:$0x1]
        %v620 = vld [vmem:[%s445 + $0xb4] sm:$0xf]
        %v621 = vld [vmem:[%s445 + $0xb8] sm:$0xf]
        %v622 = vld [vmem:[%s445 + $0xbc] sm:$0x1]
        %v623 = vld [vmem:[%s445 + $0xc0] sm:$0xf]
        %v624 = vld [vmem:[%s445 + $0xc4] sm:$0xf]
        %v625 = vld [vmem:[%s445 + $0xc8] sm:$0x1]
        %v626 = vld [vmem:[%s445 + $0xcc] sm:$0xf]
        %v627 = vld [vmem:[%s445 + $0xd0] sm:$0xf]
        %v628 = vld [vmem:[%s445 + $0xd4] sm:$0x1]
        %v629 = vunpack.c.l.bf16 %v575
        %v630 = vunpack.c.l.bf16 %v576
        %v631 = vunpack.c.l.bf16 %v577
        %v632 = vunpack.c.l.bf16 %v578
        %v633 = vunpack.c.l.bf16 %v579
        %v634 = vunpack.c.l.bf16 %v580
        %v635 = vunpack.c.l.bf16 %v581
        %v636 = vunpack.c.l.bf16 %v582
        %v637 = vunpack.c.l.bf16 %v583
        %v638 = vunpack.c.l.bf16 %v584
        %v639 = vunpack.c.l.bf16 %v585
        %v640 = vunpack.c.l.bf16 %v586
        %v641 = vunpack.c.l.bf16 %v587
        %v642 = vunpack.c.l.bf16 %v588
        %v643 = vunpack.c.l.bf16 %v589
        %v644 = vunpack.c.l.bf16 %v590
        %v645 = vunpack.c.l.bf16 %v591
        %v646 = vunpack.c.l.bf16 %v592
        %v647 = vunpack.c.l.bf16 %v593
        %v648 = vunpack.c.l.bf16 %v594
        %v649 = vunpack.c.l.bf16 %v595
        %v650 = vunpack.c.l.bf16 %v596
        %v651 = vunpack.c.l.bf16 %v597
        %v652 = vunpack.c.l.bf16 %v598
        %v653 = vunpack.c.l.bf16 %v599
        %v654 = vunpack.c.l.bf16 %v600
        %v655 = vunpack.c.l.bf16 %v601
        %v656 = vunpack.c.l.bf16 %v602
        %v657 = vunpack.c.l.bf16 %v603
        %v658 = vunpack.c.l.bf16 %v604
        %v659 = vunpack.c.l.bf16 %v605
        %v660 = vunpack.c.l.bf16 %v606
        %v661 = vunpack.c.l.bf16 %v607
        %v662 = vunpack.c.l.bf16 %v608
        %v663 = vunpack.c.l.bf16 %v609
        %v664 = vunpack.c.l.bf16 %v610
        %v665 = vunpack.c.l.bf16 %v611
        %v666 = vunpack.c.l.bf16 %v612
        %v667 = vunpack.c.l.bf16 %v613
        %v668 = vunpack.c.l.bf16 %v614
        %v669 = vunpack.c.l.bf16 %v615
        %v670 = vunpack.c.l.bf16 %v616
        %v671 = vunpack.c.l.bf16 %v617
        %v672 = vunpack.c.l.bf16 %v618
        %v673 = vunpack.c.l.bf16 %v619
        %v674 = vunpack.c.l.bf16 %v620
        %v675 = vunpack.c.l.bf16 %v621
        %v676 = vunpack.c.l.bf16 %v622
        %v677 = vunpack.c.l.bf16 %v623
        %v678 = vunpack.c.l.bf16 %v624
        %v679 = vunpack.c.l.bf16 %v625
        %v680 = vunpack.c.l.bf16 %v626
        %v681 = vunpack.c.l.bf16 %v627
        %v682 = vunpack.c.l.bf16 %v628
        %v683 = vadd.f32 %v629, %v632
        %v684 = vadd.f32 %v630, %v633
        %v685 = vadd.f32 %v631, %v634
        %v686 = vadd.f32 %v632, %v635
        %v687 = vadd.f32 %v633, %v636
        %v688 = vadd.f32 %v634, %v637
        %v689 = vadd.f32 %v635, %v638
        %v690 = vadd.f32 %v636, %v639
        %v691 = vadd.f32 %v637, %v640
        %v692 = vadd.f32 %v638, %v641
        %v693 = vadd.f32 %v639, %v642
        %v694 = vadd.f32 %v640, %v643
        %v695 = vadd.f32 %v641, %v644
        %v696 = vadd.f32 %v642, %v645
        %v697 = vadd.f32 %v643, %v646
        %v698 = vadd.f32 %v644, %v647
        %v699 = vadd.f32 %v645, %v648
        %v700 = vadd.f32 %v646, %v649
        %v701 = vadd.f32 %v647, %v650
        %v702 = vadd.f32 %v648, %v651
        %v703 = vadd.f32 %v649, %v652
        %v704 = vadd.f32 %v650, %v653
        %v705 = vadd.f32 %v651, %v654
        %v706 = vadd.f32 %v652, %v655
        %v707 = vadd.f32 %v653, %v656
        %v708 = vadd.f32 %v654, %v657
        %v709 = vadd.f32 %v655, %v658
        %v710 = vadd.f32 %v656, %v659
        %v711 = vadd.f32 %v657, %v660
        %v712 = vadd.f32 %v658, %v661
        %v713 = vadd.f32 %v659, %v662
        %v714 = vadd.f32 %v660, %v663
        %v715 = vadd.f32 %v661, %v664
        %v716 = vadd.f32 %v662, %v665
        %v717 = vadd.f32 %v663, %v666
        %v718 = vadd.f32 %v664, %v667
        %v719 = vadd.f32 %v665, %v668
        %v720 = vadd.f32 %v666, %v669
        %v721 = vadd.f32 %v667, %v670
        %v722 = vadd.f32 %v668, %v671
        %v723 = vadd.f32 %v669, %v672
        %v724 = vadd.f32 %v670, %v673
        %v725 = vadd.f32 %v671, %v674
        %v726 = vadd.f32 %v672, %v675
        %v727 = vadd.f32 %v673, %v676
        %v728 = vadd.f32 %v674, %v677
        %v729 = vadd.f32 %v675, %v678
        %v730 = vadd.f32 %v676, %v679
        %v731 = vadd.f32 %v683, %v635
        %v732 = vadd.f32 %v684, %v636
        %v733 = vadd.f32 %v685, %v637
        %v734 = vadd.f32 %v686, %v638
        %v735 = vadd.f32 %v687, %v639
        %v736 = vadd.f32 %v688, %v640
        %v737 = vadd.f32 %v689, %v641
        %v738 = vadd.f32 %v690, %v642
        %v739 = vadd.f32 %v691, %v643
        %v740 = vadd.f32 %v692, %v644
        %v741 = vadd.f32 %v693, %v645
        %v742 = vadd.f32 %v694, %v646
        %v743 = vadd.f32 %v695, %v647
        %v744 = vadd.f32 %v696, %v648
        %v745 = vadd.f32 %v697, %v649
        %v746 = vadd.f32 %v698, %v650
        %v747 = vadd.f32 %v699, %v651
        %v748 = vadd.f32 %v700, %v652
        %v749 = vadd.f32 %v701, %v653
        %v750 = vadd.f32 %v702, %v654
        %v751 = vadd.f32 %v703, %v655
        %v752 = vadd.f32 %v704, %v656
        %v753 = vadd.f32 %v705, %v657
        %v754 = vadd.f32 %v706, %v658
        %v755 = vadd.f32 %v707, %v659
        %v756 = vadd.f32 %v708, %v660
        %v757 = vadd.f32 %v709, %v661
        %v758 = vadd.f32 %v710, %v662
        %v759 = vadd.f32 %v711, %v663
        %v760 = vadd.f32 %v712, %v664
        %v761 = vadd.f32 %v713, %v665
        %v762 = vadd.f32 %v714, %v666
        %v763 = vadd.f32 %v715, %v667
        %v764 = vadd.f32 %v716, %v668
        %v765 = vadd.f32 %v717, %v669
        %v766 = vadd.f32 %v718, %v670
        %v767 = vadd.f32 %v719, %v671
        %v768 = vadd.f32 %v720, %v672
        %v769 = vadd.f32 %v721, %v673
        %v770 = vadd.f32 %v722, %v674
        %v771 = vadd.f32 %v723, %v675
        %v772 = vadd.f32 %v724, %v676
        %v773 = vadd.f32 %v725, %v677
        %v774 = vadd.f32 %v726, %v678
        %v775 = vadd.f32 %v727, %v679
        %v776 = vadd.f32 %v728, %v680
        %v777 = vadd.f32 %v729, %v681
        %v778 = vadd.f32 %v730, %v682
        %vm827 = vcmask 1046528
        %v828 = vrot.slane %v731, 1
        %v829 = vrot.slane %v732, 1
        %v830 = vsel %vm827, %v828, %v829
        %v831 = vrot.slane %v733, 1
        %v832 = vsel %vm827, %v829, %v831
        %v833 = vrot.slane %v734, 1
        %v834 = vrot.slane %v735, 1
        %v835 = vsel %vm827, %v833, %v834
        %v836 = vrot.slane %v736, 1
        %v837 = vsel %vm827, %v834, %v836
        %v838 = vrot.slane %v737, 1
        %v839 = vrot.slane %v738, 1
        %v840 = vsel %vm827, %v838, %v839
        %v841 = vrot.slane %v739, 1
        %v842 = vsel %vm827, %v839, %v841
        %v843 = vrot.slane %v740, 1
        %v844 = vrot.slane %v741, 1
        %v845 = vsel %vm827, %v843, %v844
        %v846 = vrot.slane %v742, 1
        %v847 = vsel %vm827, %v844, %v846
        %v848 = vrot.slane %v743, 1
        %v849 = vrot.slane %v744, 1
        %v850 = vsel %vm827, %v848, %v849
        %v851 = vrot.slane %v745, 1
        %v852 = vsel %vm827, %v849, %v851
        %v853 = vrot.slane %v746, 1
        %v854 = vrot.slane %v747, 1
        %v855 = vsel %vm827, %v853, %v854
        %v856 = vrot.slane %v748, 1
        %v857 = vsel %vm827, %v854, %v856
        %v858 = vrot.slane %v749, 1
        %v859 = vrot.slane %v750, 1
        %v860 = vsel %vm827, %v858, %v859
        %v861 = vrot.slane %v751, 1
        %v862 = vsel %vm827, %v859, %v861
        %v863 = vrot.slane %v752, 1
        %v864 = vrot.slane %v753, 1
        %v865 = vsel %vm827, %v863, %v864
        %v866 = vrot.slane %v754, 1
        %v867 = vsel %vm827, %v864, %v866
        %v868 = vrot.slane %v755, 1
        %v869 = vrot.slane %v756, 1
        %v870 = vsel %vm827, %v868, %v869
        %v871 = vrot.slane %v757, 1
        %v872 = vsel %vm827, %v869, %v871
        %v873 = vrot.slane %v758, 1
        %v874 = vrot.slane %v759, 1
        %v875 = vsel %vm827, %v873, %v874
        %v876 = vrot.slane %v760, 1
        %v877 = vsel %vm827, %v874, %v876
        %v878 = vrot.slane %v761, 1
        %v879 = vrot.slane %v762, 1
        %v880 = vsel %vm827, %v878, %v879
        %v881 = vrot.slane %v763, 1
        %v882 = vsel %vm827, %v879, %v881
        %v883 = vrot.slane %v764, 1
        %v884 = vrot.slane %v765, 1
        %v885 = vsel %vm827, %v883, %v884
        %v886 = vrot.slane %v766, 1
        %v887 = vsel %vm827, %v884, %v886
        %v888 = vrot.slane %v767, 1
        %v889 = vrot.slane %v768, 1
        %v890 = vsel %vm827, %v888, %v889
        %v891 = vrot.slane %v769, 1
        %v892 = vsel %vm827, %v889, %v891
        %v893 = vrot.slane %v770, 1
        %v894 = vrot.slane %v771, 1
        %v895 = vsel %vm827, %v893, %v894
        %v896 = vrot.slane %v772, 1
        %v897 = vsel %vm827, %v894, %v896
        %v898 = vrot.slane %v773, 1
        %v899 = vrot.slane %v774, 1
        %v900 = vsel %vm827, %v898, %v899
        %v901 = vrot.slane %v775, 1
        %v902 = vsel %vm827, %v899, %v901
        %v903 = vrot.slane %v776, 1
        %v904 = vrot.slane %v777, 1
        %v905 = vsel %vm827, %v903, %v904
        %v906 = vrot.slane %v778, 1
        %v907 = vsel %vm827, %v904, %v906
        %v940 = vadd.f32 %v731, %v830
        %v941 = vadd.f32 %v732, %v832
        %v942 = vadd.f32 %v734, %v835
        %v943 = vadd.f32 %v735, %v837
        %v944 = vadd.f32 %v737, %v840
        %v945 = vadd.f32 %v738, %v842
        %v946 = vadd.f32 %v740, %v845
        %v947 = vadd.f32 %v741, %v847
        %v948 = vadd.f32 %v743, %v850
        %v949 = vadd.f32 %v744, %v852
        %v950 = vadd.f32 %v746, %v855
        %v951 = vadd.f32 %v747, %v857
        %v952 = vadd.f32 %v749, %v860
        %v953 = vadd.f32 %v750, %v862
        %v954 = vadd.f32 %v752, %v865
        %v955 = vadd.f32 %v753, %v867
        %v956 = vadd.f32 %v755, %v870
        %v957 = vadd.f32 %v756, %v872
        %v958 = vadd.f32 %v758, %v875
        %v959 = vadd.f32 %v759, %v877
        %v960 = vadd.f32 %v761, %v880
        %v961 = vadd.f32 %v762, %v882
        %v962 = vadd.f32 %v764, %v885
        %v963 = vadd.f32 %v765, %v887
        %v964 = vadd.f32 %v767, %v890
        %v965 = vadd.f32 %v768, %v892
        %v966 = vadd.f32 %v770, %v895
        %v967 = vadd.f32 %v771, %v897
        %v968 = vadd.f32 %v773, %v900
        %v969 = vadd.f32 %v774, %v902
        %v970 = vadd.f32 %v776, %v905
        %v971 = vadd.f32 %v777, %v907
        %vm972 = vcmask 1045504
        %v973 = vrot.slane %v731, 2
        %v974 = vrot.slane %v732, 2
        %v975 = vsel %vm972, %v973, %v974
        %v976 = vrot.slane %v733, 2
        %v977 = vsel %vm972, %v974, %v976
        %v978 = vrot.slane %v734, 2
        %v979 = vrot.slane %v735, 2
        %v980 = vsel %vm972, %v978, %v979
        %v981 = vrot.slane %v736, 2
        %v982 = vsel %vm972, %v979, %v981
        %v983 = vrot.slane %v737, 2
        %v984 = vrot.slane %v738, 2
        %v985 = vsel %vm972, %v983, %v984
        %v986 = vrot.slane %v739, 2
        %v987 = vsel %vm972, %v984, %v986
        %v988 = vrot.slane %v740, 2
        %v989 = vrot.slane %v741, 2
        %v990 = vsel %vm972, %v988, %v989
        %v991 = vrot.slane %v742, 2
        %v992 = vsel %vm972, %v989, %v991
        %v993 = vrot.slane %v743, 2
        %v994 = vrot.slane %v744, 2
        %v995 = vsel %vm972, %v993, %v994
        %v996 = vrot.slane %v745, 2
        %v997 = vsel %vm972, %v994, %v996
        %v998 = vrot.slane %v746, 2
        %v999 = vrot.slane %v747, 2
        %v1000 = vsel %vm972, %v998, %v999
        %v1001 = vrot.slane %v748, 2
        %v1002 = vsel %vm972, %v999, %v1001
        %v1003 = vrot.slane %v749, 2
        %v1004 = vrot.slane %v750, 2
        %v1005 = vsel %vm972, %v1003, %v1004
        %v1006 = vrot.slane %v751, 2
        %v1007 = vsel %vm972, %v1004, %v1006
        %v1008 = vrot.slane %v752, 2
        %v1009 = vrot.slane %v753, 2
        %v1010 = vsel %vm972, %v1008, %v1009
        %v1011 = vrot.slane %v754, 2
        %v1012 = vsel %vm972, %v1009, %v1011
        %v1013 = vrot.slane %v755, 2
        %v1014 = vrot.slane %v756, 2
        %v1015 = vsel %vm972, %v1013, %v1014
        %v1016 = vrot.slane %v757, 2
        %v1017 = vsel %vm972, %v1014, %v1016
        %v1018 = vrot.slane %v758, 2
        %v1019 = vrot.slane %v759, 2
        %v1020 = vsel %vm972, %v1018, %v1019
        %v1021 = vrot.slane %v760, 2
        %v1022 = vsel %vm972, %v1019, %v1021
        %v1023 = vrot.slane %v761, 2
        %v1024 = vrot.slane %v762, 2
        %v1025 = vsel %vm972, %v1023, %v1024
        %v1026 = vrot.slane %v763, 2
        %v1027 = vsel %vm972, %v1024, %v1026
        %v1028 = vrot.slane %v764, 2
        %v1029 = vrot.slane %v765, 2
        %v1030 = vsel %vm972, %v1028, %v1029
        %v1031 = vrot.slane %v766, 2
        %v1032 = vsel %vm972, %v1029, %v1031
        %v1033 = vrot.slane %v767, 2
        %v1034 = vrot.slane %v768, 2
        %v1035 = vsel %vm972, %v1033, %v1034
        %v1036 = vrot.slane %v769, 2
        %v1037 = vsel %vm972, %v1034, %v1036
        %v1038 = vrot.slane %v770, 2
        %v1039 = vrot.slane %v771, 2
        %v1040 = vsel %vm972, %v1038, %v1039
        %v1041 = vrot.slane %v772, 2
        %v1042 = vsel %vm972, %v1039, %v1041
        %v1043 = vrot.slane %v773, 2
        %v1044 = vrot.slane %v774, 2
        %v1045 = vsel %vm972, %v1043, %v1044
        %v1046 = vrot.slane %v775, 2
        %v1047 = vsel %vm972, %v1044, %v1046
        %v1048 = vrot.slane %v776, 2
        %v1049 = vrot.slane %v777, 2
        %v1050 = vsel %vm972, %v1048, %v1049
        %v1051 = vrot.slane %v778, 2
        %v1052 = vsel %vm972, %v1049, %v1051
        %v1085 = vadd.f32 %v940, %v975
        %v1086 = vadd.f32 %v941, %v977
        %v1087 = vadd.f32 %v942, %v980
        %v1088 = vadd.f32 %v943, %v982
        %v1089 = vadd.f32 %v944, %v985
        %v1090 = vadd.f32 %v945, %v987
        %v1091 = vadd.f32 %v946, %v990
        %v1092 = vadd.f32 %v947, %v992
        %v1093 = vadd.f32 %v948, %v995
        %v1094 = vadd.f32 %v949, %v997
        %v1095 = vadd.f32 %v950, %v1000
        %v1096 = vadd.f32 %v951, %v1002
        %v1097 = vadd.f32 %v952, %v1005
        %v1098 = vadd.f32 %v953, %v1007
        %v1099 = vadd.f32 %v954, %v1010
        %v1100 = vadd.f32 %v955, %v1012
        %v1101 = vadd.f32 %v956, %v1015
        %v1102 = vadd.f32 %v957, %v1017
        %v1103 = vadd.f32 %v958, %v1020
        %v1104 = vadd.f32 %v959, %v1022
        %v1105 = vadd.f32 %v960, %v1025
        %v1106 = vadd.f32 %v961, %v1027
        %v1107 = vadd.f32 %v962, %v1030
        %v1108 = vadd.f32 %v963, %v1032
        %v1109 = vadd.f32 %v964, %v1035
        %v1110 = vadd.f32 %v965, %v1037
        %v1111 = vadd.f32 %v966, %v1040
        %v1112 = vadd.f32 %v967, %v1042
        %v1113 = vadd.f32 %v968, %v1045
        %v1114 = vadd.f32 %v969, %v1047
        %v1115 = vadd.f32 %v970, %v1050
        %v1116 = vadd.f32 %v971, %v1052
        %v1117 = vpack.c.bf16 %v1086, %v1085
        %v1118 = vpack.c.bf16 %v1088, %v1087
        %v1119 = vpack.c.bf16 %v1090, %v1089
        %v1120 = vpack.c.bf16 %v1092, %v1091
        %v1121 = vpack.c.bf16 %v1094, %v1093
        %v1122 = vpack.c.bf16 %v1096, %v1095
        %v1123 = vpack.c.bf16 %v1098, %v1097
        %v1124 = vpack.c.bf16 %v1100, %v1099
        %v1125 = vpack.c.bf16 %v1102, %v1101
        %v1126 = vpack.c.bf16 %v1104, %v1103
        %v1127 = vpack.c.bf16 %v1106, %v1105
        %v1128 = vpack.c.bf16 %v1108, %v1107
        %v1129 = vpack.c.bf16 %v1110, %v1109
        %v1130 = vpack.c.bf16 %v1112, %v1111
        %v1131 = vpack.c.bf16 %v1114, %v1113
        %v1132 = vpack.c.bf16 %v1116, %v1115
        %v1133 = vld [vmem:[%s1] sm:$0xf]
        %v1134 = vld [vmem:[%s1 + $0x4] sm:$0xf]
        %v1135 = vld [vmem:[%s1 + $0x8] sm:$0xf]
        %v1136 = vld [vmem:[%s1 + $0xc] sm:$0xf]
        %v1137 = vld [vmem:[%s2] sm:$0x1]
        %v1139 = vlaneseq
        %v1140 = vshrl.u32 %v1139, 7
        %v1141 = vsub.s32 0, %v1140
        %v1142 = vrot.slane %v1137, %v1141
        %v1148 = vunpack.c.l.b16 %v1133
        %v1149 = vunpack.c.l.b16 %v1134
        %v1150 = vunpack.c.l.b16 %v1135
        %v1151 = vunpack.c.l.b16 %v1136
        %v1152 = vpack.c.b16 %v1149, %v1148
        %v1153 = vpack.c.b16 %v1151, %v1150
        %vm1156 = vcmask 261120
        %v1158 = vsel %vm1156, %v1117, 0
        %v1161 = vsel %vm1156, %v1118, 0
        %v1164 = vsel %vm1156, %v1119, 0
        %v1167 = vsel %vm1156, %v1120, 0
        %v1170 = vsel %vm1156, %v1121, 0
        %v1173 = vsel %vm1156, %v1122, 0
        %v1176 = vsel %vm1156, %v1123, 0
        %v1179 = vsel %vm1156, %v1124, 0
        %v1182 = vsel %vm1156, %v1125, 0
        %v1185 = vsel %vm1156, %v1126, 0
        %v1188 = vsel %vm1156, %v1127, 0
        %v1191 = vsel %vm1156, %v1128, 0
        %v1194 = vsel %vm1156, %v1129, 0
        %v1197 = vsel %vm1156, %v1130, 0
        %v1200 = vsel %vm1156, %v1131, 0
        %v1203 = vsel %vm1156, %v1132, 0
        %1205 = vmatprep.subr.bf16.mxu0 0
        %1206 = vmatpush1.bf16.msra.mxu0 0
        %1207 = vmatprep.subr.bf16.mxu0 0
        %1208 = vmatpush1.bf16.msra.mxu0 0
        %1209 = vmatprep.subr.bf16.mxu0 0
        %1210 = vmatpush1.bf16.msra.mxu0 0
        %1211 = vmatprep.subr.bf16.mxu0 0
        %1212 = vmatpush1.bf16.msra.mxu0 0
        %1213 = vmatprep.subr.bf16.mxu0 0
        %1214 = vmatpush1.bf16.msra.mxu0 0
        %1215 = vmatprep.subr.bf16.mxu0 0
        %1216 = vmatpush1.bf16.msra.mxu0 0
        %1217 = vmatprep.subr.bf16.mxu0 0
        %1218 = vmatpush1.bf16.msra.mxu0 %v1153
        %1219 = vmatprep.subr.bf16.mxu0 0
        %1220 = vmatpush1.bf16.msra.mxu0 %v1152
        %1221 = vmatprep.subr.bf16.mxu0 0
        %1222 = vmatpush2.bf16.msra.mxu0 0
        %1223 = vmatprep.subr.bf16.mxu0 0
        %1224 = vmatpush2.bf16.msra.mxu0 0
        %1225 = vmatprep.subr.bf16.mxu0 0
        %1226 = vmatpush2.bf16.msra.mxu0 0
        %1227 = vmatprep.subr.bf16.mxu0 0
        %1228 = vmatpush2.bf16.msra.mxu0 0
        %1229 = vmatprep.subr.bf16.mxu0 0
        %1230 = vmatpush2.bf16.msra.mxu0 0
        %1231 = vmatprep.subr.bf16.mxu0 0
        %1232 = vmatpush2.bf16.msra.mxu0 0
        %1233 = vmatprep.subr.bf16.mxu0 0
        %1234 = vmatpush2.bf16.msra.mxu0 0
        %1235 = vmatprep.subr.bf16.mxu0 0
        %1236 = vmatpush2.bf16.msra.mxu0 0
        %1237 = vmatprep.mubr.bf16.mxu0 0
        %1238 = vmatmul.mubr.bf16.gmra.mxu0 %v1158
        %v1239 = vpop.f32.mrf.mxu0
        %v1240 = vadd.f32 %v1142, %v1239
        %v1241 = vpop.f32.mrf.mxu0
        %v1242 = vpop.f32.mrf.mxu0
        %v1243 = vadd.f32 %v1142, %v1242
        %v1244 = vpop.f32.mrf.mxu0
        %1245 = vmatprep.mubr.bf16.mxu0 0
        %1246 = vmatmul.mubr.bf16.gmra.mxu0 %v1161
        %v1247 = vpop.f32.mrf.mxu0
        %v1248 = vadd.f32 %v1142, %v1247
        %v1249 = vpop.f32.mrf.mxu0
        %v1250 = vpop.f32.mrf.mxu0
        %v1251 = vadd.f32 %v1142, %v1250
        %v1252 = vpop.f32.mrf.mxu0
        %1253 = vmatprep.mubr.bf16.mxu0 0
        %1254 = vmatmul.mubr.bf16.gmra.mxu0 %v1164
        %v1255 = vpop.f32.mrf.mxu0
        %v1256 = vadd.f32 %v1142, %v1255
        %v1257 = vpop.f32.mrf.mxu0
        %v1258 = vpop.f32.mrf.mxu0
        %v1259 = vadd.f32 %v1142, %v1258
        %v1260 = vpop.f32.mrf.mxu0
        %1261 = vmatprep.mubr.bf16.mxu0 0
        %1262 = vmatmul.mubr.bf16.gmra.mxu0 %v1167
        %v1263 = vpop.f32.mrf.mxu0
        %v1264 = vadd.f32 %v1142, %v1263
        %v1265 = vpop.f32.mrf.mxu0
        %v1266 = vpop.f32.mrf.mxu0
        %v1267 = vadd.f32 %v1142, %v1266
        %v1268 = vpop.f32.mrf.mxu0
        %1269 = vmatprep.mubr.bf16.mxu0 0
        %1270 = vmatmul.mubr.bf16.gmra.mxu0 %v1170
        %v1271 = vpop.f32.mrf.mxu0
        %v1272 = vadd.f32 %v1142, %v1271
        %v1273 = vpop.f32.mrf.mxu0
        %v1274 = vpop.f32.mrf.mxu0
        %v1275 = vadd.f32 %v1142, %v1274
        %v1276 = vpop.f32.mrf.mxu0
        %1277 = vmatprep.mubr.bf16.mxu0 0
        %1278 = vmatmul.mubr.bf16.gmra.mxu0 %v1173
        %v1279 = vpop.f32.mrf.mxu0
        %v1280 = vadd.f32 %v1142, %v1279
        %v1281 = vpop.f32.mrf.mxu0
        %v1282 = vpop.f32.mrf.mxu0
        %v1283 = vadd.f32 %v1142, %v1282
        %v1284 = vpop.f32.mrf.mxu0
        %1285 = vmatprep.mubr.bf16.mxu0 0
        %1286 = vmatmul.mubr.bf16.gmra.mxu0 %v1176
        %v1287 = vpop.f32.mrf.mxu0
        %v1288 = vadd.f32 %v1142, %v1287
        %v1289 = vpop.f32.mrf.mxu0
        %v1290 = vpop.f32.mrf.mxu0
        %v1291 = vadd.f32 %v1142, %v1290
        %v1292 = vpop.f32.mrf.mxu0
        %1293 = vmatprep.mubr.bf16.mxu0 0
        %1294 = vmatmul.mubr.bf16.gmra.mxu0 %v1179
        %v1295 = vpop.f32.mrf.mxu0
        %v1296 = vadd.f32 %v1142, %v1295
        %v1297 = vpop.f32.mrf.mxu0
        %v1298 = vpop.f32.mrf.mxu0
        %v1299 = vadd.f32 %v1142, %v1298
        %v1300 = vpop.f32.mrf.mxu0
        %1301 = vmatprep.mubr.bf16.mxu0 0
        %1302 = vmatmul.mubr.bf16.gmra.mxu0 %v1182
        %v1303 = vpop.f32.mrf.mxu0
        %v1304 = vadd.f32 %v1142, %v1303
        %v1305 = vpop.f32.mrf.mxu0
        %v1306 = vpop.f32.mrf.mxu0
        %v1307 = vadd.f32 %v1142, %v1306
        %v1308 = vpop.f32.mrf.mxu0
        %1309 = vmatprep.mubr.bf16.mxu0 0
        %1310 = vmatmul.mubr.bf16.gmra.mxu0 %v1185
        %v1311 = vpop.f32.mrf.mxu0
        %v1312 = vadd.f32 %v1142, %v1311
        %v1313 = vpop.f32.mrf.mxu0
        %v1314 = vpop.f32.mrf.mxu0
        %v1315 = vadd.f32 %v1142, %v1314
        %v1316 = vpop.f32.mrf.mxu0
        %1317 = vmatprep.mubr.bf16.mxu0 0
        %1318 = vmatmul.mubr.bf16.gmra.mxu0 %v1188
        %v1319 = vpop.f32.mrf.mxu0
        %v1320 = vadd.f32 %v1142, %v1319
        %v1321 = vpop.f32.mrf.mxu0
        %v1322 = vpop.f32.mrf.mxu0
        %v1323 = vadd.f32 %v1142, %v1322
        %v1324 = vpop.f32.mrf.mxu0
        %1325 = vmatprep.mubr.bf16.mxu0 0
        %1326 = vmatmul.mubr.bf16.gmra.mxu0 %v1191
        %v1327 = vpop.f32.mrf.mxu0
        %v1328 = vadd.f32 %v1142, %v1327
        %v1329 = vpop.f32.mrf.mxu0
        %v1330 = vpop.f32.mrf.mxu0
        %v1331 = vadd.f32 %v1142, %v1330
        %v1332 = vpop.f32.mrf.mxu0
        %1333 = vmatprep.mubr.bf16.mxu0 0
        %1334 = vmatmul.mubr.bf16.gmra.mxu0 %v1194
        %v1335 = vpop.f32.mrf.mxu0
        %v1336 = vadd.f32 %v1142, %v1335
        %v1337 = vpop.f32.mrf.mxu0
        %v1338 = vpop.f32.mrf.mxu0
        %v1339 = vadd.f32 %v1142, %v1338
        %v1340 = vpop.f32.mrf.mxu0
        %1341 = vmatprep.mubr.bf16.mxu0 0
        %1342 = vmatmul.mubr.bf16.gmra.mxu0 %v1197
        %v1343 = vpop.f32.mrf.mxu0
        %v1344 = vadd.f32 %v1142, %v1343
        %v1345 = vpop.f32.mrf.mxu0
        %v1346 = vpop.f32.mrf.mxu0
        %v1347 = vadd.f32 %v1142, %v1346
        %v1348 = vpop.f32.mrf.mxu0
        %1349 = vmatprep.mubr.bf16.mxu0 0
        %1350 = vmatmul.mubr.bf16.gmra.mxu0 %v1200
        %v1351 = vpop.f32.mrf.mxu0
        %v1352 = vadd.f32 %v1142, %v1351
        %v1353 = vpop.f32.mrf.mxu0
        %v1354 = vpop.f32.mrf.mxu0
        %v1355 = vadd.f32 %v1142, %v1354
        %v1356 = vpop.f32.mrf.mxu0
        %1357 = vmatprep.mubr.bf16.mxu0 0
        %1358 = vmatmul.mubr.bf16.gmra.mxu0 %v1203
        %v1359 = vpop.f32.mrf.mxu0
        %v1360 = vadd.f32 %v1142, %v1359
        %v1361 = vpop.f32.mrf.mxu0
        %v1362 = vpop.f32.mrf.mxu0
        %v1363 = vadd.f32 %v1142, %v1362
        %v1364 = vpop.f32.mrf.mxu0
        %1365 = vdwg.mxu0
        %v1366 = vmax.f32 %v1240, 0.0
        %v1367 = vmax.f32 %v1243, 0.0
        %v1368 = vmax.f32 %v1248, 0.0
        %v1369 = vmax.f32 %v1251, 0.0
        %v1370 = vmax.f32 %v1256, 0.0
        %v1371 = vmax.f32 %v1259, 0.0
        %v1372 = vmax.f32 %v1264, 0.0
        %v1373 = vmax.f32 %v1267, 0.0
        %v1374 = vmax.f32 %v1272, 0.0
        %v1375 = vmax.f32 %v1275, 0.0
        %v1376 = vmax.f32 %v1280, 0.0
        %v1377 = vmax.f32 %v1283, 0.0
        %v1378 = vmax.f32 %v1288, 0.0
        %v1379 = vmax.f32 %v1291, 0.0
        %v1380 = vmax.f32 %v1296, 0.0
        %v1381 = vmax.f32 %v1299, 0.0
        %v1382 = vmax.f32 %v1304, 0.0
        %v1383 = vmax.f32 %v1307, 0.0
        %v1384 = vmax.f32 %v1312, 0.0
        %v1385 = vmax.f32 %v1315, 0.0
        %v1386 = vmax.f32 %v1320, 0.0
        %v1387 = vmax.f32 %v1323, 0.0
        %v1388 = vmax.f32 %v1328, 0.0
        %v1389 = vmax.f32 %v1331, 0.0
        %v1390 = vmax.f32 %v1336, 0.0
        %v1391 = vmax.f32 %v1339, 0.0
        %v1392 = vmax.f32 %v1344, 0.0
        %v1393 = vmax.f32 %v1347, 0.0
        %v1394 = vmax.f32 %v1352, 0.0
        %v1395 = vmax.f32 %v1355, 0.0
        %v1396 = vmax.f32 %v1360, 0.0
        %v1397 = vmax.f32 %v1363, 0.0
        %1398 = vst [vmem:[%s450] sm:$0xff] %v1366
        %1399 = vst [vmem:[%s450 + $0x8] sm:$0xff] %v1367
        %1400 = vst [vmem:[%s450 + $0x10] sm:$0xff] %v1368
        %1401 = vst [vmem:[%s450 + $0x18] sm:$0xff] %v1369
        %1402 = vst [vmem:[%s450 + $0x20] sm:$0xff] %v1370
        %1403 = vst [vmem:[%s450 + $0x28] sm:$0xff] %v1371
        %1404 = vst [vmem:[%s450 + $0x30] sm:$0xff] %v1372
        %1405 = vst [vmem:[%s450 + $0x38] sm:$0xff] %v1373
        %1406 = vst [vmem:[%s450 + $0x40] sm:$0xff] %v1374
        %1407 = vst [vmem:[%s450 + $0x48] sm:$0xff] %v1375
        %1408 = vst [vmem:[%s450 + $0x50] sm:$0xff] %v1376
        %1409 = vst [vmem:[%s450 + $0x58] sm:$0xff] %v1377
        %1410 = vst [vmem:[%s450 + $0x60] sm:$0xff] %v1378
        %1411 = vst [vmem:[%s450 + $0x68] sm:$0xff] %v1379
        %1412 = vst [vmem:[%s450 + $0x70] sm:$0xff] %v1380
        %1413 = vst [vmem:[%s450 + $0x78] sm:$0xff] %v1381
        %1414 = vst [vmem:[%s450 + $0x80] sm:$0xff] %v1382
        %1415 = vst [vmem:[%s450 + $0x88] sm:$0xff] %v1383
        %1416 = vst [vmem:[%s450 + $0x90] sm:$0xff] %v1384
        %1417 = vst [vmem:[%s450 + $0x98] sm:$0xff] %v1385
        %1418 = vst [vmem:[%s450 + $0xa0] sm:$0xff] %v1386
        %1419 = vst [vmem:[%s450 + $0xa8] sm:$0xff] %v1387
        %1420 = vst [vmem:[%s450 + $0xb0] sm:$0xff] %v1388
        %1421 = vst [vmem:[%s450 + $0xb8] sm:$0xff] %v1389
        %1422 = vst [vmem:[%s450 + $0xc0] sm:$0xff] %v1390
        %1423 = vst [vmem:[%s450 + $0xc8] sm:$0xff] %v1391
        %1424 = vst [vmem:[%s450 + $0xd0] sm:$0xff] %v1392
        %1425 = vst [vmem:[%s450 + $0xd8] sm:$0xff] %v1393
        %1426 = vst [vmem:[%s450 + $0xe0] sm:$0xff] %v1394
        %1427 = vst [vmem:[%s450 + $0xe8] sm:$0xff] %v1395
        %1428 = vst [vmem:[%s450 + $0xf0] sm:$0xff] %v1396
        %1429 = vst [vmem:[%s450 + $0xf8] sm:$0xff] %v1397
        %vm1430 = vsmask.f32 3328
        %vm1431 = vsmask.f32 7440
        %vm1432 = vmor %vm1430, %vm1431
        %v1434 = vshrl.u32 %v578, 16
        %v1436 = vrot.slane %v1434, 4
        %v1437 = vshll.u32 %v578, 16
        %v1439 = vrot.slane %v1437, 5
        %v1440 = vor.u32 %v1436, %v1439
        %v1441 = vrot.slane %v1440, 4
        %v1443 = vshll.u32 %v579, 16
        %v1445 = vrot.slane %v1443, 5
        %v1446 = vsel %vm1432, %v1441, %v1445
        %v1447 = vshrl.u32 %v579, 16
        %v1449 = vrot.slane %v1447, 4
        %v1450 = vor.u32 %v1449, %v1445
        %v1451 = vrot.slane %v1450, 4
        %v1453 = vshll.u32 %v580, 16
        %v1455 = vrot.slane %v1453, 5
        %v1456 = vsel %vm1432, %v1451, %v1455
        %v1458 = vshrl.u32 %v581, 16
        %v1460 = vrot.slane %v1458, 4
        %v1461 = vshll.u32 %v581, 16
        %v1463 = vrot.slane %v1461, 5
        %v1464 = vor.u32 %v1460, %v1463
        %v1465 = vrot.slane %v1464, 4
        %v1467 = vshll.u32 %v582, 16
        %v1469 = vrot.slane %v1467, 5
        %v1470 = vsel %vm1432, %v1465, %v1469
        %v1471 = vshrl.u32 %v582, 16
        %v1473 = vrot.slane %v1471, 4
        %v1474 = vor.u32 %v1473, %v1469
        %v1475 = vrot.slane %v1474, 4
        %v1477 = vshll.u32 %v583, 16
        %v1479 = vrot.slane %v1477, 5
        %v1480 = vsel %vm1432, %v1475, %v1479
        %v1482 = vshrl.u32 %v584, 16
        %v1484 = vrot.slane %v1482, 4
        %v1485 = vshll.u32 %v584, 16
        %v1487 = vrot.slane %v1485, 5
        %v1488 = vor.u32 %v1484, %v1487
        %v1489 = vrot.slane %v1488, 4
        %v1491 = vshll.u32 %v585, 16
        %v1493 = vrot.slane %v1491, 5
        %v1494 = vsel %vm1432, %v1489, %v1493
        %v1495 = vshrl.u32 %v585, 16
        %v1497 = vrot.slane %v1495, 4
        %v1498 = vor.u32 %v1497, %v1493
        %v1499 = vrot.slane %v1498, 4
        %v1501 = vshll.u32 %v586, 16
        %v1503 = vrot.slane %v1501, 5
        %v1504 = vsel %vm1432, %v1499, %v1503
        %v1506 = vshrl.u32 %v587, 16
        %v1508 = vrot.slane %v1506, 4
        %v1509 = vshll.u32 %v587, 16
        %v1511 = vrot.slane %v1509, 5
        %v1512 = vor.u32 %v1508, %v1511
        %v1513 = vrot.slane %v1512, 4
        %v1515 = vshll.u32 %v588, 16
        %v1517 = vrot.slane %v1515, 5
        %v1518 = vsel %vm1432, %v1513, %v1517
        %v1519 = vshrl.u32 %v588, 16
        %v1521 = vrot.slane %v1519, 4
        %v1522 = vor.u32 %v1521, %v1517
        %v1523 = vrot.slane %v1522, 4
        %v1525 = vshll.u32 %v589, 16
        %v1527 = vrot.slane %v1525, 5
        %v1528 = vsel %vm1432, %v1523, %v1527
        %v1530 = vshrl.u32 %v590, 16
        %v1532 = vrot.slane %v1530, 4
        %v1533 = vshll.u32 %v590, 16
        %v1535 = vrot.slane %v1533, 5
        %v1536 = vor.u32 %v1532, %v1535
        %v1537 = vrot.slane %v1536, 4
        %v1539 = vshll.u32 %v591, 16
        %v1541 = vrot.slane %v1539, 5
        %v1542 = vsel %vm1432, %v1537, %v1541
        %v1543 = vshrl.u32 %v591, 16
        %v1545 = vrot.slane %v1543, 4
        %v1546 = vor.u32 %v1545, %v1541
        %v1547 = vrot.slane %v1546, 4
        %v1549 = vshll.u32 %v592, 16
        %v1551 = vrot.slane %v1549, 5
        %v1552 = vsel %vm1432, %v1547, %v1551
        %v1554 = vshrl.u32 %v593, 16
        %v1556 = vrot.slane %v1554, 4
        %v1557 = vshll.u32 %v593, 16
        %v1559 = vrot.slane %v1557, 5
        %v1560 = vor.u32 %v1556, %v1559
        %v1561 = vrot.slane %v1560, 4
        %v1563 = vshll.u32 %v594, 16
        %v1565 = vrot.slane %v1563, 5
        %v1566 = vsel %vm1432, %v1561, %v1565
        %v1567 = vshrl.u32 %v594, 16
        %v1569 = vrot.slane %v1567, 4
        %v1570 = vor.u32 %v1569, %v1565
        %v1571 = vrot.slane %v1570, 4
        %v1573 = vshll.u32 %v595, 16
        %v1575 = vrot.slane %v1573, 5
        %v1576 = vsel %vm1432, %v1571, %v1575
        %v1578 = vshrl.u32 %v596, 16
        %v1580 = vrot.slane %v1578, 4
        %v1581 = vshll.u32 %v596, 16
        %v1583 = vrot.slane %v1581, 5
        %v1584 = vor.u32 %v1580, %v1583
        %v1585 = vrot.slane %v1584, 4
        %v1587 = vshll.u32 %v597, 16
        %v1589 = vrot.slane %v1587, 5
        %v1590 = vsel %vm1432, %v1585, %v1589
        %v1591 = vshrl.u32 %v597, 16
        %v1593 = vrot.slane %v1591, 4
        %v1594 = vor.u32 %v1593, %v1589
        %v1595 = vrot.slane %v1594, 4
        %v1597 = vshll.u32 %v598, 16
        %v1599 = vrot.slane %v1597, 5
        %v1600 = vsel %vm1432, %v1595, %v1599
        %v1602 = vshrl.u32 %v599, 16
        %v1604 = vrot.slane %v1602, 4
        %v1605 = vshll.u32 %v599, 16
        %v1607 = vrot.slane %v1605, 5
        %v1608 = vor.u32 %v1604, %v1607
        %v1609 = vrot.slane %v1608, 4
        %v1611 = vshll.u32 %v600, 16
        %v1613 = vrot.slane %v1611, 5
        %v1614 = vsel %vm1432, %v1609, %v1613
        %v1615 = vshrl.u32 %v600, 16
        %v1617 = vrot.slane %v1615, 4
        %v1618 = vor.u32 %v1617, %v1613
        %v1619 = vrot.slane %v1618, 4
        %v1621 = vshll.u32 %v601, 16
        %v1623 = vrot.slane %v1621, 5
        %v1624 = vsel %vm1432, %v1619, %v1623
        %v1626 = vshrl.u32 %v602, 16
        %v1628 = vrot.slane %v1626, 4
        %v1629 = vshll.u32 %v602, 16
        %v1631 = vrot.slane %v1629, 5
        %v1632 = vor.u32 %v1628, %v1631
        %v1633 = vrot.slane %v1632, 4
        %v1635 = vshll.u32 %v603, 16
        %v1637 = vrot.slane %v1635, 5
        %v1638 = vsel %vm1432, %v1633, %v1637
        %v1639 = vshrl.u32 %v603, 16
        %v1641 = vrot.slane %v1639, 4
        %v1642 = vor.u32 %v1641, %v1637
        %v1643 = vrot.slane %v1642, 4
        %v1645 = vshll.u32 %v604, 16
        %v1647 = vrot.slane %v1645, 5
        %v1648 = vsel %vm1432, %v1643, %v1647
        %v1650 = vshrl.u32 %v605, 16
        %v1652 = vrot.slane %v1650, 4
        %v1653 = vshll.u32 %v605, 16
        %v1655 = vrot.slane %v1653, 5
        %v1656 = vor.u32 %v1652, %v1655
        %v1657 = vrot.slane %v1656, 4
        %v1659 = vshll.u32 %v606, 16
        %v1661 = vrot.slane %v1659, 5
        %v1662 = vsel %vm1432, %v1657, %v1661
        %v1663 = vshrl.u32 %v606, 16
        %v1665 = vrot.slane %v1663, 4
        %v1666 = vor.u32 %v1665, %v1661
        %v1667 = vrot.slane %v1666, 4
        %v1669 = vshll.u32 %v607, 16
        %v1671 = vrot.slane %v1669, 5
        %v1672 = vsel %vm1432, %v1667, %v1671
        %v1674 = vshrl.u32 %v608, 16
        %v1676 = vrot.slane %v1674, 4
        %v1677 = vshll.u32 %v608, 16
        %v1679 = vrot.slane %v1677, 5
        %v1680 = vor.u32 %v1676, %v1679
        %v1681 = vrot.slane %v1680, 4
        %v1683 = vshll.u32 %v609, 16
        %v1685 = vrot.slane %v1683, 5
        %v1686 = vsel %vm1432, %v1681, %v1685
        %v1687 = vshrl.u32 %v609, 16
        %v1689 = vrot.slane %v1687, 4
        %v1690 = vor.u32 %v1689, %v1685
        %v1691 = vrot.slane %v1690, 4
        %v1693 = vshll.u32 %v610, 16
        %v1695 = vrot.slane %v1693, 5
        %v1696 = vsel %vm1432, %v1691, %v1695
        %v1698 = vshrl.u32 %v611, 16
        %v1700 = vrot.slane %v1698, 4
        %v1701 = vshll.u32 %v611, 16
        %v1703 = vrot.slane %v1701, 5
        %v1704 = vor.u32 %v1700, %v1703
        %v1705 = vrot.slane %v1704, 4
        %v1707 = vshll.u32 %v612, 16
        %v1709 = vrot.slane %v1707, 5
        %v1710 = vsel %vm1432, %v1705, %v1709
        %v1711 = vshrl.u32 %v612, 16
        %v1713 = vrot.slane %v1711, 4
        %v1714 = vor.u32 %v1713, %v1709
        %v1715 = vrot.slane %v1714, 4
        %v1717 = vshll.u32 %v613, 16
        %v1719 = vrot.slane %v1717, 5
        %v1720 = vsel %vm1432, %v1715, %v1719
        %v1722 = vshrl.u32 %v614, 16
        %v1724 = vrot.slane %v1722, 4
        %v1725 = vshll.u32 %v614, 16
        %v1727 = vrot.slane %v1725, 5
        %v1728 = vor.u32 %v1724, %v1727
        %v1729 = vrot.slane %v1728, 4
        %v1731 = vshll.u32 %v615, 16
        %v1733 = vrot.slane %v1731, 5
        %v1734 = vsel %vm1432, %v1729, %v1733
        %v1735 = vshrl.u32 %v615, 16
        %v1737 = vrot.slane %v1735, 4
        %v1738 = vor.u32 %v1737, %v1733
        %v1739 = vrot.slane %v1738, 4
        %v1741 = vshll.u32 %v616, 16
        %v1743 = vrot.slane %v1741, 5
        %v1744 = vsel %vm1432, %v1739, %v1743
        %v1746 = vshrl.u32 %v617, 16
        %v1748 = vrot.slane %v1746, 4
        %v1749 = vshll.u32 %v617, 16
        %v1751 = vrot.slane %v1749, 5
        %v1752 = vor.u32 %v1748, %v1751
        %v1753 = vrot.slane %v1752, 4
        %v1755 = vshll.u32 %v618, 16
        %v1757 = vrot.slane %v1755, 5
        %v1758 = vsel %vm1432, %v1753, %v1757
        %v1759 = vshrl.u32 %v618, 16
        %v1761 = vrot.slane %v1759, 4
        %v1762 = vor.u32 %v1761, %v1757
        %v1763 = vrot.slane %v1762, 4
        %v1765 = vshll.u32 %v619, 16
        %v1767 = vrot.slane %v1765, 5
        %v1768 = vsel %vm1432, %v1763, %v1767
        %v1770 = vshrl.u32 %v620, 16
        %v1772 = vrot.slane %v1770, 4
        %v1773 = vshll.u32 %v620, 16
        %v1775 = vrot.slane %v1773, 5
        %v1776 = vor.u32 %v1772, %v1775
        %v1777 = vrot.slane %v1776, 4
        %v1779 = vshll.u32 %v621, 16
        %v1781 = vrot.slane %v1779, 5
        %v1782 = vsel %vm1432, %v1777, %v1781
        %v1783 = vshrl.u32 %v621, 16
        %v1785 = vrot.slane %v1783, 4
        %v1786 = vor.u32 %v1785, %v1781
        %v1787 = vrot.slane %v1786, 4
        %v1789 = vshll.u32 %v622, 16
        %v1791 = vrot.slane %v1789, 5
        %v1792 = vsel %vm1432, %v1787, %v1791
        %v1794 = vshrl.u32 %v623, 16
        %v1796 = vrot.slane %v1794, 4
        %v1797 = vshll.u32 %v623, 16
        %v1799 = vrot.slane %v1797, 5
        %v1800 = vor.u32 %v1796, %v1799
        %v1801 = vrot.slane %v1800, 4
        %v1803 = vshll.u32 %v624, 16
        %v1805 = vrot.slane %v1803, 5
        %v1806 = vsel %vm1432, %v1801, %v1805
        %v1807 = vshrl.u32 %v624, 16
        %v1809 = vrot.slane %v1807, 4
        %v1810 = vor.u32 %v1809, %v1805
        %v1811 = vrot.slane %v1810, 4
        %v1813 = vshll.u32 %v625, 16
        %v1815 = vrot.slane %v1813, 5
        %v1816 = vsel %vm1432, %v1811, %v1815
        %v1817 = vld [vmem:[%s3] sm:$0xff]
        %v1818 = vld [vmem:[%s3 + $0x8] sm:$0xff]
        %v1819 = vld [vmem:[%s3 + $0x10] sm:$0xff]
        %v1820 = vld [vmem:[%s3 + $0x18] sm:$0xff]
        %v1821 = vld [vmem:[%s4] sm:$0x3]
        %v1823 = vlaneseq
        %v1824 = vshrl.u32 %v1823, 7
        %v1825 = vsub.s32 0, %v1824
        %v1826 = vrot.slane %v1821, %v1825
        %v1827 = vlaneseq
        %v1828 = vshrl.u32 %v1827, 7
        %v1829 = vsub.s32 1, %v1828
        %v1830 = vrot.slane %v1821, %v1829
        %v1833 = vunpack.c.l.b16 %v1446
        %v1834 = vunpack.c.l.b16 %v1456
        %v1835 = vunpack.c.l.b16 %v1470
        %v1836 = vunpack.c.l.b16 %v1480
        %v1837 = vunpack.c.l.b16 %v1494
        %v1838 = vunpack.c.l.b16 %v1504
        %v1839 = vunpack.c.l.b16 %v1518
        %v1840 = vunpack.c.l.b16 %v1528
        %v1841 = vunpack.c.l.b16 %v1542
        %v1842 = vunpack.c.l.b16 %v1552
        %v1843 = vunpack.c.l.b16 %v1566
        %v1844 = vunpack.c.l.b16 %v1576
        %v1845 = vunpack.c.l.b16 %v1590
        %v1846 = vunpack.c.l.b16 %v1600
        %v1847 = vunpack.c.l.b16 %v1614
        %v1848 = vunpack.c.l.b16 %v1624
        %v1849 = vunpack.c.l.b16 %v1638
        %v1850 = vunpack.c.l.b16 %v1648
        %v1851 = vunpack.c.l.b16 %v1662
        %v1852 = vunpack.c.l.b16 %v1672
        %v1853 = vunpack.c.l.b16 %v1686
        %v1854 = vunpack.c.l.b16 %v1696
        %v1855 = vunpack.c.l.b16 %v1710
        %v1856 = vunpack.c.l.b16 %v1720
        %v1857 = vunpack.c.l.b16 %v1734
        %v1858 = vunpack.c.l.b16 %v1744
        %v1859 = vunpack.c.l.b16 %v1758
        %v1860 = vunpack.c.l.b16 %v1768
        %v1861 = vunpack.c.l.b16 %v1782
        %v1862 = vunpack.c.l.b16 %v1792
        %v1863 = vunpack.c.l.b16 %v1806
        %v1864 = vunpack.c.l.b16 %v1816
        %v1865 = vpack.c.b16 %v1834, %v1833
        %v1866 = vpack.c.b16 %v1836, %v1835
        %v1867 = vpack.c.b16 %v1838, %v1837
        %v1868 = vpack.c.b16 %v1840, %v1839
        %v1869 = vpack.c.b16 %v1842, %v1841
        %v1870 = vpack.c.b16 %v1844, %v1843
        %v1871 = vpack.c.b16 %v1846, %v1845
        %v1872 = vpack.c.b16 %v1848, %v1847
        %v1873 = vpack.c.b16 %v1850, %v1849
        %v1874 = vpack.c.b16 %v1852, %v1851
        %v1875 = vpack.c.b16 %v1854, %v1853
        %v1876 = vpack.c.b16 %v1856, %v1855
        %v1877 = vpack.c.b16 %v1858, %v1857
        %v1878 = vpack.c.b16 %v1860, %v1859
        %v1879 = vpack.c.b16 %v1862, %v1861
        %v1880 = vpack.c.b16 %v1864, %v1863
        %v1885 = vunpack.c.l.b16 %v1817
        %v1886 = vunpack.c.h.b16 %v1817
        %v1887 = vunpack.c.l.b16 %v1818
        %v1888 = vunpack.c.h.b16 %v1818
        %v1889 = vunpack.c.l.b16 %v1819
        %v1890 = vunpack.c.h.b16 %v1819
        %v1891 = vunpack.c.l.b16 %v1820
        %v1892 = vunpack.c.h.b16 %v1820
        %v1893 = vpack.c.b16 %v1887, %v1885
        %v1894 = vpack.c.b16 %v1888, %v1886
        %v1895 = vpack.c.b16 %v1891, %v1889
        %v1896 = vpack.c.b16 %v1892, %v1890
        %v1902 = vsel %vm1156, %v1865, 0
        %v1905 = vsel %vm1156, %v1866, 0
        %v1908 = vsel %vm1156, %v1867, 0
        %v1911 = vsel %vm1156, %v1868, 0
        %v1914 = vsel %vm1156, %v1869, 0
        %v1917 = vsel %vm1156, %v1870, 0
        %v1920 = vsel %vm1156, %v1871, 0
        %v1923 = vsel %vm1156, %v1872, 0
        %v1926 = vsel %vm1156, %v1873, 0
        %v1929 = vsel %vm1156, %v1874, 0
        %v1932 = vsel %vm1156, %v1875, 0
        %v1935 = vsel %vm1156, %v1876, 0
        %v1938 = vsel %vm1156, %v1877, 0
        %v1941 = vsel %vm1156, %v1878, 0
        %v1944 = vsel %vm1156, %v1879, 0
        %v1947 = vsel %vm1156, %v1880, 0
        %1949 = vmatprep.subr.bf16.mxu0 0
        %1950 = vmatpush1.bf16.msra.mxu0 0
        %1951 = vmatprep.subr.bf16.mxu0 0
        %1952 = vmatpush1.bf16.msra.mxu0 0
        %1953 = vmatprep.subr.bf16.mxu0 0
        %1954 = vmatpush1.bf16.msra.mxu0 0
        %1955 = vmatprep.subr.bf16.mxu0 0
        %1956 = vmatpush1.bf16.msra.mxu0 0
        %1957 = vmatprep.subr.bf16.mxu0 0
        %1958 = vmatpush1.bf16.msra.mxu0 0
        %1959 = vmatprep.subr.bf16.mxu0 0
        %1960 = vmatpush1.bf16.msra.mxu0 0
        %1961 = vmatprep.subr.bf16.mxu0 %v1896
        %1962 = vmatpush1.bf16.msra.mxu0 %v1895
        %1963 = vmatprep.subr.bf16.mxu0 %v1894
        %1964 = vmatpush1.bf16.msra.mxu0 %v1893
        %1965 = vmatprep.subr.bf16.mxu0 0
        %1966 = vmatpush2.bf16.msra.mxu0 0
        %1967 = vmatprep.subr.bf16.mxu0 0
        %1968 = vmatpush2.bf16.msra.mxu0 0
        %1969 = vmatprep.subr.bf16.mxu0 0
        %1970 = vmatpush2.bf16.msra.mxu0 0
        %1971 = vmatprep.subr.bf16.mxu0 0
        %1972 = vmatpush2.bf16.msra.mxu0 0
        %1973 = vmatprep.subr.bf16.mxu0 0
        %1974 = vmatpush2.bf16.msra.mxu0 0
        %1975 = vmatprep.subr.bf16.mxu0 0
        %1976 = vmatpush2.bf16.msra.mxu0 0
        %1977 = vmatprep.subr.bf16.mxu0 0
        %1978 = vmatpush2.bf16.msra.mxu0 0
        %1979 = vmatprep.subr.bf16.mxu0 0
        %1980 = vmatpush2.bf16.msra.mxu0 0
        %1981 = vmatprep.mubr.bf16.mxu0 0
        %1982 = vmatmul.mubr.bf16.gmra.mxu0 %v1902
        %v1983 = vpop.f32.mrf.mxu0
        %v1984 = vadd.f32 %v1826, %v1983
        %v1985 = vpop.f32.mrf.mxu0
        %v1986 = vadd.f32 %v1830, %v1985
        %v1987 = vpop.f32.mrf.mxu0
        %v1988 = vadd.f32 %v1826, %v1987
        %v1989 = vpop.f32.mrf.mxu0
        %v1990 = vadd.f32 %v1830, %v1989
        %1991 = vmatprep.mubr.bf16.mxu0 0
        %1992 = vmatmul.mubr.bf16.gmra.mxu0 %v1905
        %v1993 = vpop.f32.mrf.mxu0
        %v1994 = vadd.f32 %v1826, %v1993
        %v1995 = vpop.f32.mrf.mxu0
        %v1996 = vadd.f32 %v1830, %v1995
        %v1997 = vpop.f32.mrf.mxu0
        %v1998 = vadd.f32 %v1826, %v1997
        %v1999 = vpop.f32.mrf.mxu0
        %v2000 = vadd.f32 %v1830, %v1999
        %2001 = vmatprep.mubr.bf16.mxu0 0
        %2002 = vmatmul.mubr.bf16.gmra.mxu0 %v1908
        %v2003 = vpop.f32.mrf.mxu0
        %v2004 = vadd.f32 %v1826, %v2003
        %v2005 = vpop.f32.mrf.mxu0
        %v2006 = vadd.f32 %v1830, %v2005
        %v2007 = vpop.f32.mrf.mxu0
        %v2008 = vadd.f32 %v1826, %v2007
        %v2009 = vpop.f32.mrf.mxu0
        %v2010 = vadd.f32 %v1830, %v2009
        %2011 = vmatprep.mubr.bf16.mxu0 0
        %2012 = vmatmul.mubr.bf16.gmra.mxu0 %v1911
        %v2013 = vpop.f32.mrf.mxu0
        %v2014 = vadd.f32 %v1826, %v2013
        %v2015 = vpop.f32.mrf.mxu0
        %v2016 = vadd.f32 %v1830, %v2015
        %v2017 = vpop.f32.mrf.mxu0
        %v2018 = vadd.f32 %v1826, %v2017
        %v2019 = vpop.f32.mrf.mxu0
        %v2020 = vadd.f32 %v1830, %v2019
        %2021 = vmatprep.mubr.bf16.mxu0 0
        %2022 = vmatmul.mubr.bf16.gmra.mxu0 %v1914
        %v2023 = vpop.f32.mrf.mxu0
        %v2024 = vadd.f32 %v1826, %v2023
        %v2025 = vpop.f32.mrf.mxu0
        %v2026 = vadd.f32 %v1830, %v2025
        %v2027 = vpop.f32.mrf.mxu0
        %v2028 = vadd.f32 %v1826, %v2027
        %v2029 = vpop.f32.mrf.mxu0
        %v2030 = vadd.f32 %v1830, %v2029
        %2031 = vmatprep.mubr.bf16.mxu0 0
        %2032 = vmatmul.mubr.bf16.gmra.mxu0 %v1917
        %v2033 = vpop.f32.mrf.mxu0
        %v2034 = vadd.f32 %v1826, %v2033
        %v2035 = vpop.f32.mrf.mxu0
        %v2036 = vadd.f32 %v1830, %v2035
        %v2037 = vpop.f32.mrf.mxu0
        %v2038 = vadd.f32 %v1826, %v2037
        %v2039 = vpop.f32.mrf.mxu0
        %v2040 = vadd.f32 %v1830, %v2039
        %2041 = vmatprep.mubr.bf16.mxu0 0
        %2042 = vmatmul.mubr.bf16.gmra.mxu0 %v1920
        %v2043 = vpop.f32.mrf.mxu0
        %v2044 = vadd.f32 %v1826, %v2043
        %v2045 = vpop.f32.mrf.mxu0
        %v2046 = vadd.f32 %v1830, %v2045
        %v2047 = vpop.f32.mrf.mxu0
        %v2048 = vadd.f32 %v1826, %v2047
        %v2049 = vpop.f32.mrf.mxu0
        %v2050 = vadd.f32 %v1830, %v2049
        %2051 = vmatprep.mubr.bf16.mxu0 0
        %2052 = vmatmul.mubr.bf16.gmra.mxu0 %v1923
        %v2053 = vpop.f32.mrf.mxu0
        %v2054 = vadd.f32 %v1826, %v2053
        %v2055 = vpop.f32.mrf.mxu0
        %v2056 = vadd.f32 %v1830, %v2055
        %v2057 = vpop.f32.mrf.mxu0
        %v2058 = vadd.f32 %v1826, %v2057
        %v2059 = vpop.f32.mrf.mxu0
        %v2060 = vadd.f32 %v1830, %v2059
        %2061 = vmatprep.mubr.bf16.mxu0 0
        %2062 = vmatmul.mubr.bf16.gmra.mxu0 %v1926
        %v2063 = vpop.f32.mrf.mxu0
        %v2064 = vadd.f32 %v1826, %v2063
        %v2065 = vpop.f32.mrf.mxu0
        %v2066 = vadd.f32 %v1830, %v2065
        %v2067 = vpop.f32.mrf.mxu0
        %v2068 = vadd.f32 %v1826, %v2067
        %v2069 = vpop.f32.mrf.mxu0
        %v2070 = vadd.f32 %v1830, %v2069
        %2071 = vmatprep.mubr.bf16.mxu0 0
        %2072 = vmatmul.mubr.bf16.gmra.mxu0 %v1929
        %v2073 = vpop.f32.mrf.mxu0
        %v2074 = vadd.f32 %v1826, %v2073
        %v2075 = vpop.f32.mrf.mxu0
        %v2076 = vadd.f32 %v1830, %v2075
        %v2077 = vpop.f32.mrf.mxu0
        %v2078 = vadd.f32 %v1826, %v2077
        %v2079 = vpop.f32.mrf.mxu0
        %v2080 = vadd.f32 %v1830, %v2079
        %2081 = vmatprep.mubr.bf16.mxu0 0
        %2082 = vmatmul.mubr.bf16.gmra.mxu0 %v1932
        %v2083 = vpop.f32.mrf.mxu0
        %v2084 = vadd.f32 %v1826, %v2083
        %v2085 = vpop.f32.mrf.mxu0
        %v2086 = vadd.f32 %v1830, %v2085
        %v2087 = vpop.f32.mrf.mxu0
        %v2088 = vadd.f32 %v1826, %v2087
        %v2089 = vpop.f32.mrf.mxu0
        %v2090 = vadd.f32 %v1830, %v2089
        %2091 = vmatprep.mubr.bf16.mxu0 0
        %2092 = vmatmul.mubr.bf16.gmra.mxu0 %v1935
        %v2093 = vpop.f32.mrf.mxu0
        %v2094 = vadd.f32 %v1826, %v2093
        %v2095 = vpop.f32.mrf.mxu0
        %v2096 = vadd.f32 %v1830, %v2095
        %v2097 = vpop.f32.mrf.mxu0
        %v2098 = vadd.f32 %v1826, %v2097
        %v2099 = vpop.f32.mrf.mxu0
        %v2100 = vadd.f32 %v1830, %v2099
        %2101 = vmatprep.mubr.bf16.mxu0 0
        %2102 = vmatmul.mubr.bf16.gmra.mxu0 %v1938
        %v2103 = vpop.f32.mrf.mxu0
        %v2104 = vadd.f32 %v1826, %v2103
        %v2105 = vpop.f32.mrf.mxu0
        %v2106 = vadd.f32 %v1830, %v2105
        %v2107 = vpop.f32.mrf.mxu0
        %v2108 = vadd.f32 %v1826, %v2107
        %v2109 = vpop.f32.mrf.mxu0
        %v2110 = vadd.f32 %v1830, %v2109
        %2111 = vmatprep.mubr.bf16.mxu0 0
        %2112 = vmatmul.mubr.bf16.gmra.mxu0 %v1941
        %v2113 = vpop.f32.mrf.mxu0
        %v2114 = vadd.f32 %v1826, %v2113
        %v2115 = vpop.f32.mrf.mxu0
        %v2116 = vadd.f32 %v1830, %v2115
        %v2117 = vpop.f32.mrf.mxu0
        %v2118 = vadd.f32 %v1826, %v2117
        %v2119 = vpop.f32.mrf.mxu0
        %v2120 = vadd.f32 %v1830, %v2119
        %2121 = vmatprep.mubr.bf16.mxu0 0
        %2122 = vmatmul.mubr.bf16.gmra.mxu0 %v1944
        %v2123 = vpop.f32.mrf.mxu0
        %v2124 = vadd.f32 %v1826, %v2123
        %v2125 = vpop.f32.mrf.mxu0
        %v2126 = vadd.f32 %v1830, %v2125
        %v2127 = vpop.f32.mrf.mxu0
        %v2128 = vadd.f32 %v1826, %v2127
        %v2129 = vpop.f32.mrf.mxu0
        %v2130 = vadd.f32 %v1830, %v2129
        %2131 = vmatprep.mubr.bf16.mxu0 0
        %2132 = vmatmul.mubr.bf16.gmra.mxu0 %v1947
        %v2133 = vpop.f32.mrf.mxu0
        %v2134 = vadd.f32 %v1826, %v2133
        %v2135 = vpop.f32.mrf.mxu0
        %v2136 = vadd.f32 %v1830, %v2135
        %v2137 = vpop.f32.mrf.mxu0
        %v2138 = vadd.f32 %v1826, %v2137
        %v2139 = vpop.f32.mrf.mxu0
        %v2140 = vadd.f32 %v1830, %v2139
        %2141 = vdwg.mxu0
        %v2142 = vmax.f32 %v1984, 0.0
        %v2143 = vmax.f32 %v1986, 0.0
        %v2144 = vmax.f32 %v1988, 0.0
        %v2145 = vmax.f32 %v1990, 0.0
        %v2146 = vmax.f32 %v1994, 0.0
        %v2147 = vmax.f32 %v1996, 0.0
        %v2148 = vmax.f32 %v1998, 0.0
        %v2149 = vmax.f32 %v2000, 0.0
        %v2150 = vmax.f32 %v2004, 0.0
        %v2151 = vmax.f32 %v2006, 0.0
        %v2152 = vmax.f32 %v2008, 0.0
        %v2153 = vmax.f32 %v2010, 0.0
        %v2154 = vmax.f32 %v2014, 0.0
        %v2155 = vmax.f32 %v2016, 0.0
        %v2156 = vmax.f32 %v2018, 0.0
        %v2157 = vmax.f32 %v2020, 0.0
        %v2158 = vmax.f32 %v2024, 0.0
        %v2159 = vmax.f32 %v2026, 0.0
        %v2160 = vmax.f32 %v2028, 0.0
        %v2161 = vmax.f32 %v2030, 0.0
        %v2162 = vmax.f32 %v2034, 0.0
        %v2163 = vmax.f32 %v2036, 0.0
        %v2164 = vmax.f32 %v2038, 0.0
        %v2165 = vmax.f32 %v2040, 0.0
        %v2166 = vmax.f32 %v2044, 0.0
        %v2167 = vmax.f32 %v2046, 0.0
        %v2168 = vmax.f32 %v2048, 0.0
        %v2169 = vmax.f32 %v2050, 0.0
        %v2170 = vmax.f32 %v2054, 0.0
        %v2171 = vmax.f32 %v2056, 0.0
        %v2172 = vmax.f32 %v2058, 0.0
        %v2173 = vmax.f32 %v2060, 0.0
        %v2174 = vmax.f32 %v2064, 0.0
        %v2175 = vmax.f32 %v2066, 0.0
        %v2176 = vmax.f32 %v2068, 0.0
        %v2177 = vmax.f32 %v2070, 0.0
        %v2178 = vmax.f32 %v2074, 0.0
        %v2179 = vmax.f32 %v2076, 0.0
        %v2180 = vmax.f32 %v2078, 0.0
        %v2181 = vmax.f32 %v2080, 0.0
        %v2182 = vmax.f32 %v2084, 0.0
        %v2183 = vmax.f32 %v2086, 0.0
        %v2184 = vmax.f32 %v2088, 0.0
        %v2185 = vmax.f32 %v2090, 0.0
        %v2186 = vmax.f32 %v2094, 0.0
        %v2187 = vmax.f32 %v2096, 0.0
        %v2188 = vmax.f32 %v2098, 0.0
        %v2189 = vmax.f32 %v2100, 0.0
        %v2190 = vmax.f32 %v2104, 0.0
        %v2191 = vmax.f32 %v2106, 0.0
        %v2192 = vmax.f32 %v2108, 0.0
        %v2193 = vmax.f32 %v2110, 0.0
        %v2194 = vmax.f32 %v2114, 0.0
        %v2195 = vmax.f32 %v2116, 0.0
        %v2196 = vmax.f32 %v2118, 0.0
        %v2197 = vmax.f32 %v2120, 0.0
        %v2198 = vmax.f32 %v2124, 0.0
        %v2199 = vmax.f32 %v2126, 0.0
        %v2200 = vmax.f32 %v2128, 0.0
        %v2201 = vmax.f32 %v2130, 0.0
        %v2202 = vmax.f32 %v2134, 0.0
        %v2203 = vmax.f32 %v2136, 0.0
        %v2204 = vmax.f32 %v2138, 0.0
        %v2205 = vmax.f32 %v2140, 0.0
        %2206 = vst [vmem:[%s455] sm:$0xff] %v2142
        %2207 = vst [vmem:[%s455 + $0x8] sm:$0xff] %v2144
        %2208 = vst [vmem:[%s455 + $0x10] sm:$0xff] %v2146
        %2209 = vst [vmem:[%s455 + $0x18] sm:$0xff] %v2148
        %2210 = vst [vmem:[%s455 + $0x20] sm:$0xff] %v2150
        %2211 = vst [vmem:[%s455 + $0x28] sm:$0xff] %v2152
        %2212 = vst [vmem:[%s455 + $0x30] sm:$0xff] %v2154
        %2213 = vst [vmem:[%s455 + $0x38] sm:$0xff] %v2156
        %2214 = vst [vmem:[%s455 + $0x40] sm:$0xff] %v2158
        %2215 = vst [vmem:[%s455 + $0x48] sm:$0xff] %v2160
        %2216 = vst [vmem:[%s455 + $0x50] sm:$0xff] %v2162
        %2217 = vst [vmem:[%s455 + $0x58] sm:$0xff] %v2164
        %2218 = vst [vmem:[%s455 + $0x60] sm:$0xff] %v2166
        %2219 = vst [vmem:[%s455 + $0x68] sm:$0xff] %v2168
        %2220 = vst [vmem:[%s455 + $0x70] sm:$0xff] %v2170
        %2221 = vst [vmem:[%s455 + $0x78] sm:$0xff] %v2172
        %2222 = vst [vmem:[%s455 + $0x80] sm:$0xff] %v2174
        %2223 = vst [vmem:[%s455 + $0x88] sm:$0xff] %v2176
        %2224 = vst [vmem:[%s455 + $0x90] sm:$0xff] %v2178
        %2225 = vst [vmem:[%s455 + $0x98] sm:$0xff] %v2180
        %2226 = vst [vmem:[%s455 + $0xa0] sm:$0xff] %v2182
        %2227 = vst [vmem:[%s455 + $0xa8] sm:$0xff] %v2184
        %2228 = vst [vmem:[%s455 + $0xb0] sm:$0xff] %v2186
        %2229 = vst [vmem:[%s455 + $0xb8] sm:$0xff] %v2188
        %2230 = vst [vmem:[%s455 + $0xc0] sm:$0xff] %v2190
        %2231 = vst [vmem:[%s455 + $0xc8] sm:$0xff] %v2192
        %2232 = vst [vmem:[%s455 + $0xd0] sm:$0xff] %v2194
        %2233 = vst [vmem:[%s455 + $0xd8] sm:$0xff] %v2196
        %2234 = vst [vmem:[%s455 + $0xe0] sm:$0xff] %v2198
        %2235 = vst [vmem:[%s455 + $0xe8] sm:$0xff] %v2200
        %2236 = vst [vmem:[%s455 + $0xf0] sm:$0xff] %v2202
        %2237 = vst [vmem:[%s455 + $0xf8] sm:$0xff] %v2204
        %s2238 = scalar_lea.vmem [#allocation2], 24
        %2239 = vst [vmem:[%s2238 + $0x1] sm:$0xff] %v2143
        %2240 = vst [vmem:[%s2238 + $0x9] sm:$0xff] %v2145
        %2241 = vst [vmem:[%s2238 + $0x19] sm:$0xff] %v2147
        %2242 = vst [vmem:[%s2238 + $0x21] sm:$0xff] %v2149
        %2243 = vst [vmem:[%s2238 + $0x31] sm:$0xff] %v2151
        %2244 = vst [vmem:[%s2238 + $0x39] sm:$0xff] %v2153
        %2245 = vst [vmem:[%s2238 + $0x49] sm:$0xff] %v2155
        %2246 = vst [vmem:[%s2238 + $0x51] sm:$0xff] %v2157
        %2247 = vst [vmem:[%s2238 + $0x61] sm:$0xff] %v2159
        %2248 = vst [vmem:[%s2238 + $0x69] sm:$0xff] %v2161
        %2249 = vst [vmem:[%s2238 + $0x79] sm:$0xff] %v2163
        %2250 = vst [vmem:[%s2238 + $0x81] sm:$0xff] %v2165
        %2251 = vst [vmem:[%s2238 + $0x91] sm:$0xff] %v2167
        %2252 = vst [vmem:[%s2238 + $0x99] sm:$0xff] %v2169
        %2253 = vst [vmem:[%s2238 + $0xa9] sm:$0xff] %v2171
        %2254 = vst [vmem:[%s2238 + $0xb1] sm:$0xff] %v2173
        %2255 = vst [vmem:[%s2238 + $0xc1] sm:$0xff] %v2175
        %2256 = vst [vmem:[%s2238 + $0xc9] sm:$0xff] %v2177
        %2257 = vst [vmem:[%s2238 + $0xd9] sm:$0xff] %v2179
        %2258 = vst [vmem:[%s2238 + $0xe1] sm:$0xff] %v2181
        %2259 = vst [vmem:[%s2238 + $0xf1] sm:$0xff] %v2183
        %2260 = vst [vmem:[%s2238 + $0xf9] sm:$0xff] %v2185
        %2261 = vst [vmem:[%s2238 + $0x109] sm:$0xff] %v2187
        %2262 = vst [vmem:[%s2238 + $0x111] sm:$0xff] %v2189
        %2263 = vst [vmem:[%s2238 + $0x121] sm:$0xff] %v2191
        %2264 = vst [vmem:[%s2238 + $0x129] sm:$0xff] %v2193
        %2265 = vst [vmem:[%s2238 + $0x139] sm:$0xff] %v2195
        %2266 = vst [vmem:[%s2238 + $0x141] sm:$0xff] %v2197
        %2267 = vst [vmem:[%s2238 + $0x151] sm:$0xff] %v2199
        %2268 = vst [vmem:[%s2238 + $0x159] sm:$0xff] %v2201
        %2269 = vst [vmem:[%s2238 + $0x169] sm:$0xff] %v2203
        %2270 = vst [vmem:[%s2238 + $0x171] sm:$0xff] %v2205
        %v2271 = vld [vmem:[#allocation2] sm:$0xff]
        %v2272 = vld [vmem:[#allocation2 + $0x8] sm:$0xff]
        %v2273 = vld [vmem:[#allocation2 + $0x10] sm:$0x3]
        %v2274 = vld [vmem:[#allocation2 + $0x18] sm:$0xff]
        %v2275 = vld [vmem:[#allocation2 + $0x20] sm:$0xff]
        %v2276 = vld [vmem:[#allocation2 + $0x28] sm:$0x3]
        %v2277 = vld [vmem:[#allocation2 + $0x30] sm:$0xff]
        %v2278 = vld [vmem:[#allocation2 + $0x38] sm:$0xff]
        %v2279 = vld [vmem:[#allocation2 + $0x40] sm:$0x3]
        %v2280 = vld [vmem:[#allocation2 + $0x48] sm:$0xff]
        %v2281 = vld [vmem:[#allocation2 + $0x50] sm:$0xff]
        %v2282 = vld [vmem:[#allocation2 + $0x58] sm:$0x3]
        %v2283 = vld [vmem:[#allocation2 + $0x60] sm:$0xff]
        %v2284 = vld [vmem:[#allocation2 + $0x68] sm:$0xff]
        %v2285 = vld [vmem:[#allocation2 + $0x70] sm:$0x3]
        %v2286 = vld [vmem:[#allocation2 + $0x78] sm:$0xff]
        %v2287 = vld [vmem:[#allocation2 + $0x80] sm:$0xff]
        %v2288 = vld [vmem:[#allocation2 + $0x88] sm:$0x3]
        %v2289 = vld [vmem:[#allocation2 + $0x90] sm:$0xff]
        %v2290 = vld [vmem:[#allocation2 + $0x98] sm:$0xff]
        %v2291 = vld [vmem:[#allocation2 + $0xa0] sm:$0x3]
        %v2292 = vld [vmem:[#allocation2 + $0xa8] sm:$0xff]
        %v2293 = vld [vmem:[#allocation2 + $0xb0] sm:$0xff]
        %v2294 = vld [vmem:[#allocation2 + $0xb8] sm:$0x3]
        %v2295 = vld [vmem:[#allocation2 + $0xc0] sm:$0xff]
        %v2296 = vld [vmem:[#allocation2 + $0xc8] sm:$0xff]
        %v2297 = vld [vmem:[#allocation2 + $0xd0] sm:$0x3]
        %v2298 = vld [vmem:[#allocation2 + $0xd8] sm:$0xff]
        %v2299 = vld [vmem:[#allocation2 + $0xe0] sm:$0xff]
        %v2300 = vld [vmem:[#allocation2 + $0xe8] sm:$0x3]
        %v2301 = vld [vmem:[#allocation2 + $0xf0] sm:$0xff]
        %v2302 = vld [vmem:[#allocation2 + $0xf8] sm:$0xff]
        %v2303 = vld [vmem:[#allocation2 + $0x100] sm:$0x3]
        %v2304 = vld [vmem:[#allocation2 + $0x108] sm:$0xff]
        %v2305 = vld [vmem:[#allocation2 + $0x110] sm:$0xff]
        %v2306 = vld [vmem:[#allocation2 + $0x118] sm:$0x3]
        %v2307 = vld [vmem:[#allocation2 + $0x120] sm:$0xff]
        %v2308 = vld [vmem:[#allocation2 + $0x128] sm:$0xff]
        %v2309 = vld [vmem:[#allocation2 + $0x130] sm:$0x3]
        %v2310 = vld [vmem:[#allocation2 + $0x138] sm:$0xff]
        %v2311 = vld [vmem:[#allocation2 + $0x140] sm:$0xff]
        %v2312 = vld [vmem:[#allocation2 + $0x148] sm:$0x3]
        %v2313 = vld [vmem:[#allocation2 + $0x150] sm:$0xff]
        %v2314 = vld [vmem:[#allocation2 + $0x158] sm:$0xff]
        %v2315 = vld [vmem:[#allocation2 + $0x160] sm:$0x3]
        %v2316 = vld [vmem:[#allocation2 + $0x168] sm:$0xff]
        %v2317 = vld [vmem:[#allocation2 + $0x170] sm:$0xff]
        %v2318 = vld [vmem:[#allocation2 + $0x178] sm:$0x3]
        %v2319 = vld [vmem:[#allocation2 + $0x180] sm:$0xff]
        %v2320 = vld [vmem:[#allocation2 + $0x188] sm:$0xff]
        %v2321 = vld [vmem:[#allocation2 + $0x190] sm:$0x3]
        %v2322 = vld [vmem:[#allocation2 + $0x198] sm:$0xff]
        %v2323 = vld [vmem:[#allocation2 + $0x1a0] sm:$0xff]
        %v2324 = vld [vmem:[#allocation2 + $0x1a8] sm:$0x3]
        %v2373 = vrot.slane %v2271, 1
        %v2374 = vrot.slane %v2272, 1
        %v2375 = vsel %vm827, %v2373, %v2374
        %v2376 = vrot.slane %v2273, 1
        %v2377 = vsel %vm827, %v2374, %v2376
        %v2378 = vrot.slane %v2274, 1
        %v2379 = vrot.slane %v2275, 1
        %v2380 = vsel %vm827, %v2378, %v2379
        %v2381 = vrot.slane %v2276, 1
        %v2382 = vsel %vm827, %v2379, %v2381
        %v2383 = vrot.slane %v2277, 1
        %v2384 = vrot.slane %v2278, 1
        %v2385 = vsel %vm827, %v2383, %v2384
        %v2386 = vrot.slane %v2279, 1
        %v2387 = vsel %vm827, %v2384, %v2386
        %v2388 = vrot.slane %v2280, 1
        %v2389 = vrot.slane %v2281, 1
        %v2390 = vsel %vm827, %v2388, %v2389
        %v2391 = vrot.slane %v2282, 1
        %v2392 = vsel %vm827, %v2389, %v2391
        %v2393 = vrot.slane %v2283, 1
        %v2394 = vrot.slane %v2284, 1
        %v2395 = vsel %vm827, %v2393, %v2394
        %v2396 = vrot.slane %v2285, 1
        %v2397 = vsel %vm827, %v2394, %v2396
        %v2398 = vrot.slane %v2286, 1
        %v2399 = vrot.slane %v2287, 1
        %v2400 = vsel %vm827, %v2398, %v2399
        %v2401 = vrot.slane %v2288, 1
        %v2402 = vsel %vm827, %v2399, %v2401
        %v2403 = vrot.slane %v2289, 1
        %v2404 = vrot.slane %v2290, 1
        %v2405 = vsel %vm827, %v2403, %v2404
        %v2406 = vrot.slane %v2291, 1
        %v2407 = vsel %vm827, %v2404, %v2406
        %v2408 = vrot.slane %v2292, 1
        %v2409 = vrot.slane %v2293, 1
        %v2410 = vsel %vm827, %v2408, %v2409
        %v2411 = vrot.slane %v2294, 1
        %v2412 = vsel %vm827, %v2409, %v2411
        %v2413 = vrot.slane %v2295, 1
        %v2414 = vrot.slane %v2296, 1
        %v2415 = vsel %vm827, %v2413, %v2414
        %v2416 = vrot.slane %v2297, 1
        %v2417 = vsel %vm827, %v2414, %v2416
        %v2418 = vrot.slane %v2298, 1
        %v2419 = vrot.slane %v2299, 1
        %v2420 = vsel %vm827, %v2418, %v2419
        %v2421 = vrot.slane %v2300, 1
        %v2422 = vsel %vm827, %v2419, %v2421
        %v2423 = vrot.slane %v2301, 1
        %v2424 = vrot.slane %v2302, 1
        %v2425 = vsel %vm827, %v2423, %v2424
        %v2426 = vrot.slane %v2303, 1
        %v2427 = vsel %vm827, %v2424, %v2426
        %v2428 = vrot.slane %v2304, 1
        %v2429 = vrot.slane %v2305, 1
        %v2430 = vsel %vm827, %v2428, %v2429
        %v2431 = vrot.slane %v2306, 1
        %v2432 = vsel %vm827, %v2429, %v2431
        %v2433 = vrot.slane %v2307, 1
        %v2434 = vrot.slane %v2308, 1
        %v2435 = vsel %vm827, %v2433, %v2434
        %v2436 = vrot.slane %v2309, 1
        %v2437 = vsel %vm827, %v2434, %v2436
        %v2438 = vrot.slane %v2310, 1
        %v2439 = vrot.slane %v2311, 1
        %v2440 = vsel %vm827, %v2438, %v2439
        %v2441 = vrot.slane %v2312, 1
        %v2442 = vsel %vm827, %v2439, %v2441
        %v2443 = vrot.slane %v2313, 1
        %v2444 = vrot.slane %v2314, 1
        %v2445 = vsel %vm827, %v2443, %v2444
        %v2446 = vrot.slane %v2315, 1
        %v2447 = vsel %vm827, %v2444, %v2446
        %v2448 = vrot.slane %v2316, 1
        %v2449 = vrot.slane %v2317, 1
        %v2450 = vsel %vm827, %v2448, %v2449
        %v2451 = vrot.slane %v2318, 1
        %v2452 = vsel %vm827, %v2449, %v2451
        %v2485 = vrot.slane %v2271, 2
        %v2486 = vrot.slane %v2272, 2
        %v2487 = vsel %vm972, %v2485, %v2486
        %v2488 = vrot.slane %v2273, 2
        %v2489 = vsel %vm972, %v2486, %v2488
        %v2490 = vrot.slane %v2274, 2
        %v2491 = vrot.slane %v2275, 2
        %v2492 = vsel %vm972, %v2490, %v2491
        %v2493 = vrot.slane %v2276, 2
        %v2494 = vsel %vm972, %v2491, %v2493
        %v2495 = vrot.slane %v2277, 2
        %v2496 = vrot.slane %v2278, 2
        %v2497 = vsel %vm972, %v2495, %v2496
        %v2498 = vrot.slane %v2279, 2
        %v2499 = vsel %vm972, %v2496, %v2498
        %v2500 = vrot.slane %v2280, 2
        %v2501 = vrot.slane %v2281, 2
        %v2502 = vsel %vm972, %v2500, %v2501
        %v2503 = vrot.slane %v2282, 2
        %v2504 = vsel %vm972, %v2501, %v2503
        %v2505 = vrot.slane %v2283, 2
        %v2506 = vrot.slane %v2284, 2
        %v2507 = vsel %vm972, %v2505, %v2506
        %v2508 = vrot.slane %v2285, 2
        %v2509 = vsel %vm972, %v2506, %v2508
        %v2510 = vrot.slane %v2286, 2
        %v2511 = vrot.slane %v2287, 2
        %v2512 = vsel %vm972, %v2510, %v2511
        %v2513 = vrot.slane %v2288, 2
        %v2514 = vsel %vm972, %v2511, %v2513
        %v2515 = vrot.slane %v2289, 2
        %v2516 = vrot.slane %v2290, 2
        %v2517 = vsel %vm972, %v2515, %v2516
        %v2518 = vrot.slane %v2291, 2
        %v2519 = vsel %vm972, %v2516, %v2518
        %v2520 = vrot.slane %v2292, 2
        %v2521 = vrot.slane %v2293, 2
        %v2522 = vsel %vm972, %v2520, %v2521
        %v2523 = vrot.slane %v2294, 2
        %v2524 = vsel %vm972, %v2521, %v2523
        %v2525 = vrot.slane %v2295, 2
        %v2526 = vrot.slane %v2296, 2
        %v2527 = vsel %vm972, %v2525, %v2526
        %v2528 = vrot.slane %v2297, 2
        %v2529 = vsel %vm972, %v2526, %v2528
        %v2530 = vrot.slane %v2298, 2
        %v2531 = vrot.slane %v2299, 2
        %v2532 = vsel %vm972, %v2530, %v2531
        %v2533 = vrot.slane %v2300, 2
        %v2534 = vsel %vm972, %v2531, %v2533
        %v2535 = vrot.slane %v2301, 2
        %v2536 = vrot.slane %v2302, 2
        %v2537 = vsel %vm972, %v2535, %v2536
        %v2538 = vrot.slane %v2303, 2
        %v2539 = vsel %vm972, %v2536, %v2538
        %v2540 = vrot.slane %v2304, 2
        %v2541 = vrot.slane %v2305, 2
        %v2542 = vsel %vm972, %v2540, %v2541
        %v2543 = vrot.slane %v2306, 2
        %v2544 = vsel %vm972, %v2541, %v2543
        %v2545 = vrot.slane %v2307, 2
        %v2546 = vrot.slane %v2308, 2
        %v2547 = vsel %vm972, %v2545, %v2546
        %v2548 = vrot.slane %v2309, 2
        %v2549 = vsel %vm972, %v2546, %v2548
        %v2550 = vrot.slane %v2310, 2
        %v2551 = vrot.slane %v2311, 2
        %v2552 = vsel %vm972, %v2550, %v2551
        %v2553 = vrot.slane %v2312, 2
        %v2554 = vsel %vm972, %v2551, %v2553
        %v2555 = vrot.slane %v2313, 2
        %v2556 = vrot.slane %v2314, 2
        %v2557 = vsel %vm972, %v2555, %v2556
        %v2558 = vrot.slane %v2315, 2
        %v2559 = vsel %vm972, %v2556, %v2558
        %v2560 = vrot.slane %v2316, 2
        %v2561 = vrot.slane %v2317, 2
        %v2562 = vsel %vm972, %v2560, %v2561
        %v2563 = vrot.slane %v2318, 2
        %v2564 = vsel %vm972, %v2561, %v2563
        %v2600 = vrot.slane %v2319, 1
        %v2601 = vrot.slane %v2320, 1
        %v2602 = vsel %vm827, %v2600, %v2601
        %v2603 = vrot.slane %v2321, 1
        %v2604 = vsel %vm827, %v2601, %v2603
        %v2607 = vrot.slane %v2319, 2
        %v2608 = vrot.slane %v2320, 2
        %v2609 = vsel %vm972, %v2607, %v2608
        %v2610 = vrot.slane %v2321, 2
        %v2611 = vsel %vm972, %v2608, %v2610
        %v2617 = vrot.slane %v2322, 1
        %v2618 = vrot.slane %v2323, 1
        %v2619 = vsel %vm827, %v2617, %v2618
        %v2620 = vrot.slane %v2324, 1
        %v2621 = vsel %vm827, %v2618, %v2620
        %v2624 = vrot.slane %v2322, 2
        %v2625 = vrot.slane %v2323, 2
        %v2626 = vsel %vm972, %v2624, %v2625
        %v2627 = vrot.slane %v2324, 2
        %v2628 = vsel %vm972, %v2625, %v2627
        %v2631 = vpack.c.bf16 %v2272, %v2271
        %v2632 = vpack.c.bf16 %v2377, %v2375
        %v2633 = vpack.c.bf16 %v2489, %v2487
        %v2634 = vpack.c.bf16 %v2275, %v2274
        %v2635 = vpack.c.bf16 %v2382, %v2380
        %v2636 = vpack.c.bf16 %v2494, %v2492
        %v2637 = vpack.c.bf16 %v2278, %v2277
        %v2638 = vpack.c.bf16 %v2387, %v2385
        %v2639 = vpack.c.bf16 %v2499, %v2497
        %v2640 = vpack.c.bf16 %v2281, %v2280
        %v2641 = vpack.c.bf16 %v2392, %v2390
        %v2642 = vpack.c.bf16 %v2504, %v2502
        %v2643 = vpack.c.bf16 %v2284, %v2283
        %v2644 = vpack.c.bf16 %v2397, %v2395
        %v2645 = vpack.c.bf16 %v2509, %v2507
        %v2646 = vpack.c.bf16 %v2287, %v2286
        %v2647 = vpack.c.bf16 %v2402, %v2400
        %v2648 = vpack.c.bf16 %v2514, %v2512
        %v2649 = vpack.c.bf16 %v2290, %v2289
        %v2650 = vpack.c.bf16 %v2407, %v2405
        %v2651 = vpack.c.bf16 %v2519, %v2517
        %v2652 = vpack.c.bf16 %v2293, %v2292
        %v2653 = vpack.c.bf16 %v2412, %v2410
        %v2654 = vpack.c.bf16 %v2524, %v2522
        %v2655 = vpack.c.bf16 %v2296, %v2295
        %v2656 = vpack.c.bf16 %v2417, %v2415
        %v2657 = vpack.c.bf16 %v2529, %v2527
        %v2658 = vpack.c.bf16 %v2299, %v2298
        %v2659 = vpack.c.bf16 %v2422, %v2420
        %v2660 = vpack.c.bf16 %v2534, %v2532
        %v2661 = vpack.c.bf16 %v2302, %v2301
        %v2662 = vpack.c.bf16 %v2427, %v2425
        %v2663 = vpack.c.bf16 %v2539, %v2537
        %v2664 = vpack.c.bf16 %v2305, %v2304
        %v2665 = vpack.c.bf16 %v2432, %v2430
        %v2666 = vpack.c.bf16 %v2544, %v2542
        %v2667 = vpack.c.bf16 %v2308, %v2307
        %v2668 = vpack.c.bf16 %v2437, %v2435
        %v2669 = vpack.c.bf16 %v2549, %v2547
        %v2670 = vpack.c.bf16 %v2311, %v2310
        %v2671 = vpack.c.bf16 %v2442, %v2440
        %v2672 = vpack.c.bf16 %v2554, %v2552
        %v2673 = vpack.c.bf16 %v2314, %v2313
        %v2674 = vpack.c.bf16 %v2447, %v2445
        %v2675 = vpack.c.bf16 %v2559, %v2557
        %v2676 = vpack.c.bf16 %v2317, %v2316
        %v2677 = vpack.c.bf16 %v2452, %v2450
        %v2678 = vpack.c.bf16 %v2564, %v2562
        %v2679 = vpack.c.bf16 %v2320, %v2319
        %v2680 = vpack.c.bf16 %v2604, %v2602
        %v2681 = vpack.c.bf16 %v2611, %v2609
        %v2682 = vpack.c.bf16 %v2323, %v2322
        %v2683 = vpack.c.bf16 %v2621, %v2619
        %v2684 = vpack.c.bf16 %v2628, %v2626
        %v2685 = vld [vmem:[%s5] sm:$0xff]
        %v2686 = vld [vmem:[%s5 + $0x8] sm:$0xff]
        %v2687 = vld [vmem:[%s5 + $0x10] sm:$0xff]
        %v2688 = vld [vmem:[%s5 + $0x18] sm:$0xff]
        %v2689 = vld [vmem:[%s5 + $0x20] sm:$0xff]
        %v2690 = vld [vmem:[%s5 + $0x28] sm:$0xff]
        %v2691 = vld [vmem:[%s5 + $0x30] sm:$0xff]
        %v2692 = vld [vmem:[%s5 + $0x38] sm:$0xff]
        %v2693 = vld [vmem:[%s5 + $0x40] sm:$0xff]
        %v2694 = vld [vmem:[%s5 + $0x48] sm:$0xff]
        %v2695 = vld [vmem:[%s5 + $0x50] sm:$0xff]
        %v2696 = vld [vmem:[%s5 + $0x58] sm:$0xff]
        %v2697 = vld [vmem:[%s5 + $0x60] sm:$0xff]
        %v2698 = vld [vmem:[%s5 + $0x68] sm:$0xff]
        %v2699 = vld [vmem:[%s5 + $0x70] sm:$0xff]
        %v2700 = vld [vmem:[%s5 + $0x78] sm:$0xff]
        %v2701 = vld [vmem:[%s5 + $0x80] sm:$0xff]
        %v2702 = vld [vmem:[%s5 + $0x88] sm:$0xff]
        %v2703 = vld [vmem:[%s5 + $0x90] sm:$0xff]
        %v2704 = vld [vmem:[%s5 + $0x98] sm:$0xff]
        %v2705 = vld [vmem:[%s5 + $0xa0] sm:$0xff]
        %v2706 = vld [vmem:[%s5 + $0xa8] sm:$0xff]
        %v2707 = vld [vmem:[%s5 + $0xb0] sm:$0xff]
        %v2708 = vld [vmem:[%s5 + $0xb8] sm:$0xff]
        %v2709 = vld [vmem:[%s5 + $0xc0] sm:$0xff]
        %v2710 = vld [vmem:[%s5 + $0xc8] sm:$0xff]
        %v2711 = vld [vmem:[%s5 + $0xd0] sm:$0xff]
        %v2712 = vld [vmem:[%s5 + $0xd8] sm:$0xff]
        %v2713 = vld [vmem:[%s5 + $0xe0] sm:$0xff]
        %v2714 = vld [vmem:[%s5 + $0xe8] sm:$0xff]
        %v2715 = vld [vmem:[%s5 + $0xf0] sm:$0xff]
        %v2716 = vld [vmem:[%s5 + $0xf8] sm:$0xff]
        %v2717 = vld [vmem:[%s5 + $0x100] sm:$0xff]
        %v2718 = vld [vmem:[%s5 + $0x108] sm:$0xff]
        %v2719 = vld [vmem:[%s5 + $0x110] sm:$0xff]
        %v2720 = vld [vmem:[%s5 + $0x118] sm:$0xff]
        %v2721 = vld [vmem:[%s5 + $0x120] sm:$0xff]
        %v2722 = vld [vmem:[%s5 + $0x128] sm:$0xff]
        %v2723 = vld [vmem:[%s5 + $0x130] sm:$0xff]
        %v2724 = vld [vmem:[%s5 + $0x138] sm:$0xff]
        %v2725 = vld [vmem:[%s5 + $0x140] sm:$0xff]
        %v2726 = vld [vmem:[%s5 + $0x148] sm:$0xff]
        %v2727 = vld [vmem:[%s5 + $0x150] sm:$0xff]
        %v2728 = vld [vmem:[%s5 + $0x158] sm:$0xff]
        %v2729 = vld [vmem:[%s5 + $0x160] sm:$0xff]
        %v2730 = vld [vmem:[%s5 + $0x168] sm:$0xff]
        %v2731 = vld [vmem:[%s5 + $0x170] sm:$0xff]
        %v2732 = vld [vmem:[%s5 + $0x178] sm:$0xff]
        %v2733 = vld [vmem:[%s5 + $0x180] sm:$0xff]
        %v2734 = vld [vmem:[%s5 + $0x188] sm:$0xff]
        %v2735 = vld [vmem:[%s5 + $0x190] sm:$0xff]
        %v2736 = vld [vmem:[%s5 + $0x198] sm:$0xff]
        %v2737 = vld [vmem:[%s5 + $0x1a0] sm:$0xff]
        %v2738 = vld [vmem:[%s5 + $0x1a8] sm:$0xff]
        %v2739 = vld [vmem:[%s5 + $0x1b0] sm:$0xff]
        %v2740 = vld [vmem:[%s5 + $0x1b8] sm:$0xff]
        %v2741 = vld [vmem:[%s5 + $0x1c0] sm:$0xff]
        %v2742 = vld [vmem:[%s5 + $0x1c8] sm:$0xff]
        %v2743 = vld [vmem:[%s5 + $0x1d0] sm:$0xff]
        %v2744 = vld [vmem:[%s5 + $0x1d8] sm:$0xff]
        %v2745 = vld [vmem:[%s5 + $0x1e0] sm:$0xff]
        %v2746 = vld [vmem:[%s5 + $0x1e8] sm:$0xff]
        %v2747 = vld [vmem:[%s5 + $0x1f0] sm:$0xff]
        %v2748 = vld [vmem:[%s5 + $0x1f8] sm:$0xff]
        %v2749 = vld [vmem:[%s5 + $0x200] sm:$0xff]
        %v2750 = vld [vmem:[%s5 + $0x208] sm:$0xff]
        %v2751 = vld [vmem:[%s5 + $0x210] sm:$0xff]
        %v2752 = vld [vmem:[%s5 + $0x218] sm:$0xff]
        %v2753 = vld [vmem:[%s5 + $0x220] sm:$0xff]
        %v2754 = vld [vmem:[%s5 + $0x228] sm:$0xff]
        %v2755 = vld [vmem:[%s5 + $0x230] sm:$0xff]
        %v2756 = vld [vmem:[%s5 + $0x238] sm:$0xff]
        %v2757 = vld [vmem:[%s5 + $0x240] sm:$0xff]
        %v2758 = vld [vmem:[%s5 + $0x248] sm:$0xff]
        %v2759 = vld [vmem:[%s5 + $0x250] sm:$0xff]
        %v2760 = vld [vmem:[%s5 + $0x258] sm:$0xff]
        %v2761 = vld [vmem:[%s5 + $0x260] sm:$0xff]
        %v2762 = vld [vmem:[%s5 + $0x268] sm:$0xff]
        %v2763 = vld [vmem:[%s5 + $0x270] sm:$0xff]
        %v2764 = vld [vmem:[%s5 + $0x278] sm:$0xff]
        %v2765 = vld [vmem:[%s5 + $0x280] sm:$0xff]
        %v2766 = vld [vmem:[%s5 + $0x288] sm:$0xff]
        %v2767 = vld [vmem:[%s5 + $0x290] sm:$0xff]
        %v2768 = vld [vmem:[%s5 + $0x298] sm:$0xff]
        %v2769 = vld [vmem:[%s5 + $0x2a0] sm:$0xff]
        %v2770 = vld [vmem:[%s5 + $0x2a8] sm:$0xff]
        %v2771 = vld [vmem:[%s5 + $0x2b0] sm:$0xff]
        %v2772 = vld [vmem:[%s5 + $0x2b8] sm:$0xff]
        %v2773 = vld [vmem:[%s5 + $0x2c0] sm:$0xff]
        %v2774 = vld [vmem:[%s5 + $0x2c8] sm:$0xff]
        %v2775 = vld [vmem:[%s5 + $0x2d0] sm:$0xff]
        %v2776 = vld [vmem:[%s5 + $0x2d8] sm:$0xff]
        %v2777 = vld [vmem:[%s5 + $0x2e0] sm:$0xff]
        %v2778 = vld [vmem:[%s5 + $0x2e8] sm:$0xff]
        %v2779 = vld [vmem:[%s5 + $0x2f0] sm:$0xff]
        %v2780 = vld [vmem:[%s5 + $0x2f8] sm:$0xff]
        %v2781 = vld [vmem:[%s5 + $0x300] sm:$0xff]
        %v2782 = vld [vmem:[%s5 + $0x308] sm:$0xff]
        %v2783 = vld [vmem:[%s5 + $0x310] sm:$0xff]
        %v2784 = vld [vmem:[%s5 + $0x318] sm:$0xff]
        %v2785 = vld [vmem:[%s5 + $0x320] sm:$0xff]
        %v2786 = vld [vmem:[%s5 + $0x328] sm:$0xff]
        %v2787 = vld [vmem:[%s5 + $0x330] sm:$0xff]
        %v2788 = vld [vmem:[%s5 + $0x338] sm:$0xff]
        %v2789 = vld [vmem:[%s5 + $0x340] sm:$0xff]
        %v2790 = vld [vmem:[%s5 + $0x348] sm:$0xff]
        %v2791 = vld [vmem:[%s5 + $0x350] sm:$0xff]
        %v2792 = vld [vmem:[%s5 + $0x358] sm:$0xff]
        %v2793 = vld [vmem:[%s5 + $0x360] sm:$0xff]
        %v2794 = vld [vmem:[%s5 + $0x368] sm:$0xff]
        %v2795 = vld [vmem:[%s5 + $0x370] sm:$0xff]
        %v2796 = vld [vmem:[%s5 + $0x378] sm:$0xff]
        %v2797 = vld [vmem:[%s5 + $0x380] sm:$0xff]
        %v2798 = vld [vmem:[%s5 + $0x388] sm:$0xff]
        %v2799 = vld [vmem:[%s5 + $0x390] sm:$0xff]
        %v2800 = vld [vmem:[%s5 + $0x398] sm:$0xff]
        %v2801 = vld [vmem:[%s5 + $0x3a0] sm:$0xff]
        %v2802 = vld [vmem:[%s5 + $0x3a8] sm:$0xff]
        %v2803 = vld [vmem:[%s5 + $0x3b0] sm:$0xff]
        %v2804 = vld [vmem:[%s5 + $0x3b8] sm:$0xff]
        %v2805 = vld [vmem:[%s5 + $0x3c0] sm:$0xff]
        %v2806 = vld [vmem:[%s5 + $0x3c8] sm:$0xff]
        %v2807 = vld [vmem:[%s5 + $0x3d0] sm:$0xff]
        %v2808 = vld [vmem:[%s5 + $0x3d8] sm:$0xff]
        %v2809 = vld [vmem:[%s5 + $0x3e0] sm:$0xff]
        %v2810 = vld [vmem:[%s5 + $0x3e8] sm:$0xff]
        %v2811 = vld [vmem:[%s5 + $0x3f0] sm:$0xff]
        %v2812 = vld [vmem:[%s5 + $0x3f8] sm:$0xff]
        %v2813 = vld [vmem:[%s5 + $0x400] sm:$0xff]
        %v2814 = vld [vmem:[%s5 + $0x408] sm:$0xff]
        %v2815 = vld [vmem:[%s5 + $0x410] sm:$0xff]
        %v2816 = vld [vmem:[%s5 + $0x418] sm:$0xff]
        %v2817 = vld [vmem:[%s5 + $0x420] sm:$0xff]
        %v2818 = vld [vmem:[%s5 + $0x428] sm:$0xff]
        %v2819 = vld [vmem:[%s5 + $0x430] sm:$0xff]
        %v2820 = vld [vmem:[%s5 + $0x438] sm:$0xff]
        %v2821 = vld [vmem:[%s5 + $0x440] sm:$0xff]
        %v2822 = vld [vmem:[%s5 + $0x448] sm:$0xff]
        %v2823 = vld [vmem:[%s5 + $0x450] sm:$0xff]
        %v2824 = vld [vmem:[%s5 + $0x458] sm:$0xff]
        %v2825 = vld [vmem:[%s5 + $0x460] sm:$0xff]
        %v2826 = vld [vmem:[%s5 + $0x468] sm:$0xff]
        %v2827 = vld [vmem:[%s5 + $0x470] sm:$0xff]
        %v2828 = vld [vmem:[%s5 + $0x478] sm:$0xff]
        %v2829 = vld [vmem:[%s6] sm:$0x3]
        %v2831 = vlaneseq
        %v2832 = vshrl.u32 %v2831, 7
        %v2833 = vsub.s32 0, %v2832
        %v2834 = vrot.slane %v2829, %v2833
        %v2835 = vlaneseq
        %v2836 = vshrl.u32 %v2835, 7
        %v2837 = vsub.s32 1, %v2836
        %v2838 = vrot.slane %v2829, %v2837
        %v2985 = vunpack.c.l.b16 %v2685
        %v2986 = vunpack.c.h.b16 %v2685
        %v2987 = vunpack.c.l.b16 %v2686
        %v2988 = vunpack.c.h.b16 %v2686
        %v2989 = vunpack.c.l.b16 %v2687
        %v2990 = vunpack.c.h.b16 %v2687
        %v2991 = vunpack.c.l.b16 %v2688
        %v2992 = vunpack.c.h.b16 %v2688
        %v2993 = vunpack.c.l.b16 %v2689
        %v2994 = vunpack.c.h.b16 %v2689
        %v2995 = vunpack.c.l.b16 %v2690
        %v2996 = vunpack.c.h.b16 %v2690
        %v2997 = vunpack.c.l.b16 %v2691
        %v2998 = vunpack.c.h.b16 %v2691
        %v2999 = vunpack.c.l.b16 %v2692
        %v3000 = vunpack.c.h.b16 %v2692
        %v3001 = vunpack.c.l.b16 %v2693
        %v3002 = vunpack.c.h.b16 %v2693
        %v3003 = vunpack.c.l.b16 %v2694
        %v3004 = vunpack.c.h.b16 %v2694
        %v3005 = vunpack.c.l.b16 %v2695
        %v3006 = vunpack.c.h.b16 %v2695
        %v3007 = vunpack.c.l.b16 %v2696
        %v3008 = vunpack.c.h.b16 %v2696
        %v3009 = vunpack.c.l.b16 %v2697
        %v3010 = vunpack.c.h.b16 %v2697
        %v3011 = vunpack.c.l.b16 %v2698
        %v3012 = vunpack.c.h.b16 %v2698
        %v3013 = vunpack.c.l.b16 %v2699
        %v3014 = vunpack.c.h.b16 %v2699
        %v3015 = vunpack.c.l.b16 %v2700
        %v3016 = vunpack.c.h.b16 %v2700
        %v3017 = vunpack.c.l.b16 %v2701
        %v3018 = vunpack.c.h.b16 %v2701
        %v3019 = vunpack.c.l.b16 %v2702
        %v3020 = vunpack.c.h.b16 %v2702
        %v3021 = vunpack.c.l.b16 %v2703
        %v3022 = vunpack.c.h.b16 %v2703
        %v3023 = vunpack.c.l.b16 %v2704
        %v3024 = vunpack.c.h.b16 %v2704
        %v3025 = vunpack.c.l.b16 %v2705
        %v3026 = vunpack.c.h.b16 %v2705
        %v3027 = vunpack.c.l.b16 %v2706
        %v3028 = vunpack.c.h.b16 %v2706
        %v3029 = vunpack.c.l.b16 %v2707
        %v3030 = vunpack.c.h.b16 %v2707
        %v3031 = vunpack.c.l.b16 %v2708
        %v3032 = vunpack.c.h.b16 %v2708
        %v3033 = vunpack.c.l.b16 %v2709
        %v3034 = vunpack.c.h.b16 %v2709
        %v3035 = vunpack.c.l.b16 %v2710
        %v3036 = vunpack.c.h.b16 %v2710
        %v3037 = vunpack.c.l.b16 %v2711
        %v3038 = vunpack.c.h.b16 %v2711
        %v3039 = vunpack.c.l.b16 %v2712
        %v3040 = vunpack.c.h.b16 %v2712
        %v3041 = vunpack.c.l.b16 %v2713
        %v3042 = vunpack.c.h.b16 %v2713
        %v3043 = vunpack.c.l.b16 %v2714
        %v3044 = vunpack.c.h.b16 %v2714
        %v3045 = vunpack.c.l.b16 %v2715
        %v3046 = vunpack.c.h.b16 %v2715
        %v3047 = vunpack.c.l.b16 %v2716
        %v3048 = vunpack.c.h.b16 %v2716
        %v3049 = vunpack.c.l.b16 %v2717
        %v3050 = vunpack.c.h.b16 %v2717
        %v3051 = vunpack.c.l.b16 %v2718
        %v3052 = vunpack.c.h.b16 %v2718
        %v3053 = vunpack.c.l.b16 %v2719
        %v3054 = vunpack.c.h.b16 %v2719
        %v3055 = vunpack.c.l.b16 %v2720
        %v3056 = vunpack.c.h.b16 %v2720
        %v3057 = vunpack.c.l.b16 %v2721
        %v3058 = vunpack.c.h.b16 %v2721
        %v3059 = vunpack.c.l.b16 %v2722
        %v3060 = vunpack.c.h.b16 %v2722
        %v3061 = vunpack.c.l.b16 %v2723
        %v3062 = vunpack.c.h.b16 %v2723
        %v3063 = vunpack.c.l.b16 %v2724
        %v3064 = vunpack.c.h.b16 %v2724
        %v3065 = vunpack.c.l.b16 %v2725
        %v3066 = vunpack.c.h.b16 %v2725
        %v3067 = vunpack.c.l.b16 %v2726
        %v3068 = vunpack.c.h.b16 %v2726
        %v3069 = vunpack.c.l.b16 %v2727
        %v3070 = vunpack.c.h.b16 %v2727
        %v3071 = vunpack.c.l.b16 %v2728
        %v3072 = vunpack.c.h.b16 %v2728
        %v3073 = vunpack.c.l.b16 %v2729
        %v3074 = vunpack.c.h.b16 %v2729
        %v3075 = vunpack.c.l.b16 %v2730
        %v3076 = vunpack.c.h.b16 %v2730
        %v3077 = vunpack.c.l.b16 %v2731
        %v3078 = vunpack.c.h.b16 %v2731
        %v3079 = vunpack.c.l.b16 %v2732
        %v3080 = vunpack.c.h.b16 %v2732
        %v3081 = vunpack.c.l.b16 %v2733
        %v3082 = vunpack.c.h.b16 %v2733
        %v3083 = vunpack.c.l.b16 %v2734
        %v3084 = vunpack.c.h.b16 %v2734
        %v3085 = vunpack.c.l.b16 %v2735
        %v3086 = vunpack.c.h.b16 %v2735
        %v3087 = vunpack.c.l.b16 %v2736
        %v3088 = vunpack.c.h.b16 %v2736
        %v3089 = vunpack.c.l.b16 %v2737
        %v3090 = vunpack.c.h.b16 %v2737
        %v3091 = vunpack.c.l.b16 %v2738
        %v3092 = vunpack.c.h.b16 %v2738
        %v3093 = vunpack.c.l.b16 %v2739
        %v3094 = vunpack.c.h.b16 %v2739
        %v3095 = vunpack.c.l.b16 %v2740
        %v3096 = vunpack.c.h.b16 %v2740
        %v3097 = vunpack.c.l.b16 %v2741
        %v3098 = vunpack.c.h.b16 %v2741
        %v3099 = vunpack.c.l.b16 %v2742
        %v3100 = vunpack.c.h.b16 %v2742
        %v3101 = vunpack.c.l.b16 %v2743
        %v3102 = vunpack.c.h.b16 %v2743
        %v3103 = vunpack.c.l.b16 %v2744
        %v3104 = vunpack.c.h.b16 %v2744
        %v3105 = vunpack.c.l.b16 %v2745
        %v3106 = vunpack.c.h.b16 %v2745
        %v3107 = vunpack.c.l.b16 %v2746
        %v3108 = vunpack.c.h.b16 %v2746
        %v3109 = vunpack.c.l.b16 %v2747
        %v3110 = vunpack.c.h.b16 %v2747
        %v3111 = vunpack.c.l.b16 %v2748
        %v3112 = vunpack.c.h.b16 %v2748
        %v3113 = vunpack.c.l.b16 %v2749
        %v3114 = vunpack.c.h.b16 %v2749
        %v3115 = vunpack.c.l.b16 %v2750
        %v3116 = vunpack.c.h.b16 %v2750
        %v3117 = vunpack.c.l.b16 %v2751
        %v3118 = vunpack.c.h.b16 %v2751
        %v3119 = vunpack.c.l.b16 %v2752
        %v3120 = vunpack.c.h.b16 %v2752
        %v3121 = vunpack.c.l.b16 %v2753
        %v3122 = vunpack.c.h.b16 %v2753
        %v3123 = vunpack.c.l.b16 %v2754
        %v3124 = vunpack.c.h.b16 %v2754
        %v3125 = vunpack.c.l.b16 %v2755
        %v3126 = vunpack.c.h.b16 %v2755
        %v3127 = vunpack.c.l.b16 %v2756
        %v3128 = vunpack.c.h.b16 %v2756
        %v3129 = vunpack.c.l.b16 %v2757
        %v3130 = vunpack.c.h.b16 %v2757
        %v3131 = vunpack.c.l.b16 %v2758
        %v3132 = vunpack.c.h.b16 %v2758
        %v3133 = vunpack.c.l.b16 %v2759
        %v3134 = vunpack.c.h.b16 %v2759
        %v3135 = vunpack.c.l.b16 %v2760
        %v3136 = vunpack.c.h.b16 %v2760
        %v3137 = vunpack.c.l.b16 %v2761
        %v3138 = vunpack.c.h.b16 %v2761
        %v3139 = vunpack.c.l.b16 %v2762
        %v3140 = vunpack.c.h.b16 %v2762
        %v3141 = vunpack.c.l.b16 %v2763
        %v3142 = vunpack.c.h.b16 %v2763
        %v3143 = vunpack.c.l.b16 %v2764
        %v3144 = vunpack.c.h.b16 %v2764
        %v3145 = vunpack.c.l.b16 %v2765
        %v3146 = vunpack.c.h.b16 %v2765
        %v3147 = vunpack.c.l.b16 %v2766
        %v3148 = vunpack.c.h.b16 %v2766
        %v3149 = vunpack.c.l.b16 %v2767
        %v3150 = vunpack.c.h.b16 %v2767
        %v3151 = vunpack.c.l.b16 %v2768
        %v3152 = vunpack.c.h.b16 %v2768
        %v3153 = vunpack.c.l.b16 %v2769
        %v3154 = vunpack.c.h.b16 %v2769
        %v3155 = vunpack.c.l.b16 %v2770
        %v3156 = vunpack.c.h.b16 %v2770
        %v3157 = vunpack.c.l.b16 %v2771
        %v3158 = vunpack.c.h.b16 %v2771
        %v3159 = vunpack.c.l.b16 %v2772
        %v3160 = vunpack.c.h.b16 %v2772
        %v3161 = vunpack.c.l.b16 %v2773
        %v3162 = vunpack.c.h.b16 %v2773
        %v3163 = vunpack.c.l.b16 %v2774
        %v3164 = vunpack.c.h.b16 %v2774
        %v3165 = vunpack.c.l.b16 %v2775
        %v3166 = vunpack.c.h.b16 %v2775
        %v3167 = vunpack.c.l.b16 %v2776
        %v3168 = vunpack.c.h.b16 %v2776
        %v3169 = vunpack.c.l.b16 %v2777
        %v3170 = vunpack.c.h.b16 %v2777
        %v3171 = vunpack.c.l.b16 %v2778
        %v3172 = vunpack.c.h.b16 %v2778
        %v3173 = vunpack.c.l.b16 %v2779
        %v3174 = vunpack.c.h.b16 %v2779
        %v3175 = vunpack.c.l.b16 %v2780
        %v3176 = vunpack.c.h.b16 %v2780
        %v3177 = vunpack.c.l.b16 %v2781
        %v3178 = vunpack.c.h.b16 %v2781
        %v3179 = vunpack.c.l.b16 %v2782
        %v3180 = vunpack.c.h.b16 %v2782
        %v3181 = vunpack.c.l.b16 %v2783
        %v3182 = vunpack.c.h.b16 %v2783
        %v3183 = vunpack.c.l.b16 %v2784
        %v3184 = vunpack.c.h.b16 %v2784
        %v3185 = vunpack.c.l.b16 %v2785
        %v3186 = vunpack.c.h.b16 %v2785
        %v3187 = vunpack.c.l.b16 %v2786
        %v3188 = vunpack.c.h.b16 %v2786
        %v3189 = vunpack.c.l.b16 %v2787
        %v3190 = vunpack.c.h.b16 %v2787
        %v3191 = vunpack.c.l.b16 %v2788
        %v3192 = vunpack.c.h.b16 %v2788
        %v3193 = vunpack.c.l.b16 %v2789
        %v3194 = vunpack.c.h.b16 %v2789
        %v3195 = vunpack.c.l.b16 %v2790
        %v3196 = vunpack.c.h.b16 %v2790
        %v3197 = vunpack.c.l.b16 %v2791
        %v3198 = vunpack.c.h.b16 %v2791
        %v3199 = vunpack.c.l.b16 %v2792
        %v3200 = vunpack.c.h.b16 %v2792
        %v3201 = vunpack.c.l.b16 %v2793
        %v3202 = vunpack.c.h.b16 %v2793
        %v3203 = vunpack.c.l.b16 %v2794
        %v3204 = vunpack.c.h.b16 %v2794
        %v3205 = vunpack.c.l.b16 %v2795
        %v3206 = vunpack.c.h.b16 %v2795
        %v3207 = vunpack.c.l.b16 %v2796
        %v3208 = vunpack.c.h.b16 %v2796
        %v3209 = vunpack.c.l.b16 %v2797
        %v3210 = vunpack.c.h.b16 %v2797
        %v3211 = vunpack.c.l.b16 %v2798
        %v3212 = vunpack.c.h.b16 %v2798
        %v3213 = vunpack.c.l.b16 %v2799
        %v3214 = vunpack.c.h.b16 %v2799
        %v3215 = vunpack.c.l.b16 %v2800
        %v3216 = vunpack.c.h.b16 %v2800
        %v3217 = vunpack.c.l.b16 %v2801
        %v3218 = vunpack.c.h.b16 %v2801
        %v3219 = vunpack.c.l.b16 %v2802
        %v3220 = vunpack.c.h.b16 %v2802
        %v3221 = vunpack.c.l.b16 %v2803
        %v3222 = vunpack.c.h.b16 %v2803
        %v3223 = vunpack.c.l.b16 %v2804
        %v3224 = vunpack.c.h.b16 %v2804
        %v3225 = vunpack.c.l.b16 %v2805
        %v3226 = vunpack.c.h.b16 %v2805
        %v3227 = vunpack.c.l.b16 %v2806
        %v3228 = vunpack.c.h.b16 %v2806
        %v3229 = vunpack.c.l.b16 %v2807
        %v3230 = vunpack.c.h.b16 %v2807
        %v3231 = vunpack.c.l.b16 %v2808
        %v3232 = vunpack.c.h.b16 %v2808
        %v3233 = vunpack.c.l.b16 %v2809
        %v3234 = vunpack.c.h.b16 %v2809
        %v3235 = vunpack.c.l.b16 %v2810
        %v3236 = vunpack.c.h.b16 %v2810
        %v3237 = vunpack.c.l.b16 %v2811
        %v3238 = vunpack.c.h.b16 %v2811
        %v3239 = vunpack.c.l.b16 %v2812
        %v3240 = vunpack.c.h.b16 %v2812
        %v3241 = vunpack.c.l.b16 %v2813
        %v3242 = vunpack.c.h.b16 %v2813
        %v3243 = vunpack.c.l.b16 %v2814
        %v3244 = vunpack.c.h.b16 %v2814
        %v3245 = vunpack.c.l.b16 %v2815
        %v3246 = vunpack.c.h.b16 %v2815
        %v3247 = vunpack.c.l.b16 %v2816
        %v3248 = vunpack.c.h.b16 %v2816
        %v3249 = vunpack.c.l.b16 %v2817
        %v3250 = vunpack.c.h.b16 %v2817
        %v3251 = vunpack.c.l.b16 %v2818
        %v3252 = vunpack.c.h.b16 %v2818
        %v3253 = vunpack.c.l.b16 %v2819
        %v3254 = vunpack.c.h.b16 %v2819
        %v3255 = vunpack.c.l.b16 %v2820
        %v3256 = vunpack.c.h.b16 %v2820
        %v3257 = vunpack.c.l.b16 %v2821
        %v3258 = vunpack.c.h.b16 %v2821
        %v3259 = vunpack.c.l.b16 %v2822
        %v3260 = vunpack.c.h.b16 %v2822
        %v3261 = vunpack.c.l.b16 %v2823
        %v3262 = vunpack.c.h.b16 %v2823
        %v3263 = vunpack.c.l.b16 %v2824
        %v3264 = vunpack.c.h.b16 %v2824
        %v3265 = vunpack.c.l.b16 %v2825
        %v3266 = vunpack.c.h.b16 %v2825
        %v3267 = vunpack.c.l.b16 %v2826
        %v3268 = vunpack.c.h.b16 %v2826
        %v3269 = vunpack.c.l.b16 %v2827
        %v3270 = vunpack.c.h.b16 %v2827
        %v3271 = vunpack.c.l.b16 %v2828
        %v3272 = vunpack.c.h.b16 %v2828
        %v3273 = vpack.c.b16 %v2987, %v2985
        %v3274 = vpack.c.b16 %v2988, %v2986
        %v3275 = vpack.c.b16 %v2991, %v2989
        %v3276 = vpack.c.b16 %v2992, %v2990
        %v3277 = vpack.c.b16 %v2995, %v2993
        %v3278 = vpack.c.b16 %v2996, %v2994
        %v3279 = vpack.c.b16 %v2999, %v2997
        %v3280 = vpack.c.b16 %v3000, %v2998
        %v3281 = vpack.c.b16 %v3003, %v3001
        %v3282 = vpack.c.b16 %v3004, %v3002
        %v3283 = vpack.c.b16 %v3007, %v3005
        %v3284 = vpack.c.b16 %v3008, %v3006
        %v3285 = vpack.c.b16 %v3011, %v3009
        %v3286 = vpack.c.b16 %v3012, %v3010
        %v3287 = vpack.c.b16 %v3015, %v3013
        %v3288 = vpack.c.b16 %v3016, %v3014
        %v3289 = vpack.c.b16 %v3019, %v3017
        %v3290 = vpack.c.b16 %v3020, %v3018
        %v3291 = vpack.c.b16 %v3023, %v3021
        %v3292 = vpack.c.b16 %v3024, %v3022
        %v3293 = vpack.c.b16 %v3027, %v3025
        %v3294 = vpack.c.b16 %v3028, %v3026
        %v3295 = vpack.c.b16 %v3031, %v3029
        %v3296 = vpack.c.b16 %v3032, %v3030
        %v3297 = vpack.c.b16 %v3035, %v3033
        %v3298 = vpack.c.b16 %v3036, %v3034
        %v3299 = vpack.c.b16 %v3039, %v3037
        %v3300 = vpack.c.b16 %v3040, %v3038
        %v3301 = vpack.c.b16 %v3043, %v3041
        %v3302 = vpack.c.b16 %v3044, %v3042
        %v3303 = vpack.c.b16 %v3047, %v3045
        %v3304 = vpack.c.b16 %v3048, %v3046
        %v3305 = vpack.c.b16 %v3051, %v3049
        %v3306 = vpack.c.b16 %v3052, %v3050
        %v3307 = vpack.c.b16 %v3055, %v3053
        %v3308 = vpack.c.b16 %v3056, %v3054
        %v3309 = vpack.c.b16 %v3059, %v3057
        %v3310 = vpack.c.b16 %v3060, %v3058
        %v3311 = vpack.c.b16 %v3063, %v3061
        %v3312 = vpack.c.b16 %v3064, %v3062
        %v3313 = vpack.c.b16 %v3067, %v3065
        %v3314 = vpack.c.b16 %v3068, %v3066
        %v3315 = vpack.c.b16 %v3071, %v3069
        %v3316 = vpack.c.b16 %v3072, %v3070
        %v3317 = vpack.c.b16 %v3075, %v3073
        %v3318 = vpack.c.b16 %v3076, %v3074
        %v3319 = vpack.c.b16 %v3079, %v3077
        %v3320 = vpack.c.b16 %v3080, %v3078
        %v3321 = vpack.c.b16 %v3083, %v3081
        %v3322 = vpack.c.b16 %v3084, %v3082
        %v3323 = vpack.c.b16 %v3087, %v3085
        %v3324 = vpack.c.b16 %v3088, %v3086
        %v3325 = vpack.c.b16 %v3091, %v3089
        %v3326 = vpack.c.b16 %v3092, %v3090
        %v3327 = vpack.c.b16 %v3095, %v3093
        %v3328 = vpack.c.b16 %v3096, %v3094
        %v3329 = vpack.c.b16 %v3099, %v3097
        %v3330 = vpack.c.b16 %v3100, %v3098
        %v3331 = vpack.c.b16 %v3103, %v3101
        %v3332 = vpack.c.b16 %v3104, %v3102
        %v3333 = vpack.c.b16 %v3107, %v3105
        %v3334 = vpack.c.b16 %v3108, %v3106
        %v3335 = vpack.c.b16 %v3111, %v3109
        %v3336 = vpack.c.b16 %v3112, %v3110
        %v3337 = vpack.c.b16 %v3115, %v3113
        %v3338 = vpack.c.b16 %v3116, %v3114
        %v3339 = vpack.c.b16 %v3119, %v3117
        %v3340 = vpack.c.b16 %v3120, %v3118
        %v3341 = vpack.c.b16 %v3123, %v3121
        %v3342 = vpack.c.b16 %v3124, %v3122
        %v3343 = vpack.c.b16 %v3127, %v3125
        %v3344 = vpack.c.b16 %v3128, %v3126
        %v3345 = vpack.c.b16 %v3131, %v3129
        %v3346 = vpack.c.b16 %v3132, %v3130
        %v3347 = vpack.c.b16 %v3135, %v3133
        %v3348 = vpack.c.b16 %v3136, %v3134
        %v3349 = vpack.c.b16 %v3139, %v3137
        %v3350 = vpack.c.b16 %v3140, %v3138
        %v3351 = vpack.c.b16 %v3143, %v3141
        %v3352 = vpack.c.b16 %v3144, %v3142
        %v3353 = vpack.c.b16 %v3147, %v3145
        %v3354 = vpack.c.b16 %v3148, %v3146
        %v3355 = vpack.c.b16 %v3151, %v3149
        %v3356 = vpack.c.b16 %v3152, %v3150
        %v3357 = vpack.c.b16 %v3155, %v3153
        %v3358 = vpack.c.b16 %v3156, %v3154
        %v3359 = vpack.c.b16 %v3159, %v3157
        %v3360 = vpack.c.b16 %v3160, %v3158
        %v3361 = vpack.c.b16 %v3163, %v3161
        %v3362 = vpack.c.b16 %v3164, %v3162
        %v3363 = vpack.c.b16 %v3167, %v3165
        %v3364 = vpack.c.b16 %v3168, %v3166
        %v3365 = vpack.c.b16 %v3171, %v3169
        %v3366 = vpack.c.b16 %v3172, %v3170
        %v3367 = vpack.c.b16 %v3175, %v3173
        %v3368 = vpack.c.b16 %v3176, %v3174
        %v3369 = vpack.c.b16 %v3179, %v3177
        %v3370 = vpack.c.b16 %v3180, %v3178
        %v3371 = vpack.c.b16 %v3183, %v3181
        %v3372 = vpack.c.b16 %v3184, %v3182
        %v3373 = vpack.c.b16 %v3187, %v3185
        %v3374 = vpack.c.b16 %v3188, %v3186
        %v3375 = vpack.c.b16 %v3191, %v3189
        %v3376 = vpack.c.b16 %v3192, %v3190
        %v3377 = vpack.c.b16 %v3195, %v3193
        %v3378 = vpack.c.b16 %v3196, %v3194
        %v3379 = vpack.c.b16 %v3199, %v3197
        %v3380 = vpack.c.b16 %v3200, %v3198
        %v3381 = vpack.c.b16 %v3203, %v3201
        %v3382 = vpack.c.b16 %v3204, %v3202
        %v3383 = vpack.c.b16 %v3207, %v3205
        %v3384 = vpack.c.b16 %v3208, %v3206
        %v3385 = vpack.c.b16 %v3211, %v3209
        %v3386 = vpack.c.b16 %v3212, %v3210
        %v3387 = vpack.c.b16 %v3215, %v3213
        %v3388 = vpack.c.b16 %v3216, %v3214
        %v3389 = vpack.c.b16 %v3219, %v3217
        %v3390 = vpack.c.b16 %v3220, %v3218
        %v3391 = vpack.c.b16 %v3223, %v3221
        %v3392 = vpack.c.b16 %v3224, %v3222
        %v3393 = vpack.c.b16 %v3227, %v3225
        %v3394 = vpack.c.b16 %v3228, %v3226
        %v3395 = vpack.c.b16 %v3231, %v3229
        %v3396 = vpack.c.b16 %v3232, %v3230
        %v3397 = vpack.c.b16 %v3235, %v3233
        %v3398 = vpack.c.b16 %v3236, %v3234
        %v3399 = vpack.c.b16 %v3239, %v3237
        %v3400 = vpack.c.b16 %v3240, %v3238
        %v3401 = vpack.c.b16 %v3243, %v3241
        %v3402 = vpack.c.b16 %v3244, %v3242
        %v3403 = vpack.c.b16 %v3247, %v3245
        %v3404 = vpack.c.b16 %v3248, %v3246
        %v3405 = vpack.c.b16 %v3251, %v3249
        %v3406 = vpack.c.b16 %v3252, %v3250
        %v3407 = vpack.c.b16 %v3255, %v3253
        %v3408 = vpack.c.b16 %v3256, %v3254
        %v3409 = vpack.c.b16 %v3259, %v3257
        %v3410 = vpack.c.b16 %v3260, %v3258
        %v3411 = vpack.c.b16 %v3263, %v3261
        %v3412 = vpack.c.b16 %v3264, %v3262
        %v3413 = vpack.c.b16 %v3267, %v3265
        %v3414 = vpack.c.b16 %v3268, %v3266
        %v3415 = vpack.c.b16 %v3271, %v3269
        %v3416 = vpack.c.b16 %v3272, %v3270
        %3561 = vmatprep.subr.bf16.mxu0 %v3288
        %3562 = vmatpush1.bf16.msra.mxu0 %v3287
        %3563 = vmatprep.subr.bf16.mxu0 %v3286
        %3564 = vmatpush1.bf16.msra.mxu0 %v3285
        %3565 = vmatprep.subr.bf16.mxu0 %v3284
        %3566 = vmatpush1.bf16.msra.mxu0 %v3283
        %3567 = vmatprep.subr.bf16.mxu0 %v3282
        %3568 = vmatpush1.bf16.msra.mxu0 %v3281
        %3569 = vmatprep.subr.bf16.mxu0 %v3280
        %3570 = vmatpush1.bf16.msra.mxu0 %v3279
        %3571 = vmatprep.subr.bf16.mxu0 %v3278
        %3572 = vmatpush1.bf16.msra.mxu0 %v3277
        %3573 = vmatprep.subr.bf16.mxu0 %v3276
        %3574 = vmatpush1.bf16.msra.mxu0 %v3275
        %3575 = vmatprep.subr.bf16.mxu0 %v3274
        %3576 = vmatpush1.bf16.msra.mxu0 %v3273
        %3577 = vmatprep.subr.bf16.mxu0 %v3304
        %3578 = vmatpush2.bf16.msra.mxu0 %v3303
        %3579 = vmatprep.subr.bf16.mxu0 %v3302
        %3580 = vmatpush2.bf16.msra.mxu0 %v3301
        %3581 = vmatprep.subr.bf16.mxu0 %v3300
        %3582 = vmatpush2.bf16.msra.mxu0 %v3299
        %3583 = vmatprep.subr.bf16.mxu0 %v3298
        %3584 = vmatpush2.bf16.msra.mxu0 %v3297
        %3585 = vmatprep.subr.bf16.mxu0 %v3296
        %3586 = vmatpush2.bf16.msra.mxu0 %v3295
        %3587 = vmatprep.subr.bf16.mxu0 %v3294
        %3588 = vmatpush2.bf16.msra.mxu0 %v3293
        %3589 = vmatprep.subr.bf16.mxu0 %v3292
        %3590 = vmatpush2.bf16.msra.mxu0 %v3291
        %3591 = vmatprep.subr.bf16.mxu0 %v3290
        %3592 = vmatpush2.bf16.msra.mxu0 %v3289
        %3593 = vmatprep.mubr.bf16.mxu0 %v2632
        %3594 = vmatmul.mubr.bf16.gmra.mxu0 %v2631
        %v3595 = vpop.f32.mrf.mxu0
        %v3596 = vadd.f32 %v2834, %v3595
        %v3597 = vpop.f32.mrf.mxu0
        %v3598 = vadd.f32 %v2838, %v3597
        %v3599 = vpop.f32.mrf.mxu0
        %v3600 = vadd.f32 %v2834, %v3599
        %v3601 = vpop.f32.mrf.mxu0
        %v3602 = vadd.f32 %v2838, %v3601
        %3603 = vmatprep.mubr.bf16.mxu0 %v2635
        %3604 = vmatmul.mubr.bf16.gmra.mxu0 %v2634
        %v3605 = vpop.f32.mrf.mxu0
        %v3606 = vadd.f32 %v2834, %v3605
        %v3607 = vpop.f32.mrf.mxu0
        %v3608 = vadd.f32 %v2838, %v3607
        %v3609 = vpop.f32.mrf.mxu0
        %v3610 = vadd.f32 %v2834, %v3609
        %v3611 = vpop.f32.mrf.mxu0
        %v3612 = vadd.f32 %v2838, %v3611
        %3613 = vmatprep.mubr.bf16.mxu0 %v2638
        %3614 = vmatmul.mubr.bf16.gmra.mxu0 %v2637
        %v3615 = vpop.f32.mrf.mxu0
        %v3616 = vadd.f32 %v2834, %v3615
        %v3617 = vpop.f32.mrf.mxu0
        %v3618 = vadd.f32 %v2838, %v3617
        %v3619 = vpop.f32.mrf.mxu0
        %v3620 = vadd.f32 %v2834, %v3619
        %v3621 = vpop.f32.mrf.mxu0
        %v3622 = vadd.f32 %v2838, %v3621
        %3623 = vmatprep.mubr.bf16.mxu0 %v2641
        %3624 = vmatmul.mubr.bf16.gmra.mxu0 %v2640
        %v3625 = vpop.f32.mrf.mxu0
        %v3626 = vadd.f32 %v2834, %v3625
        %v3627 = vpop.f32.mrf.mxu0
        %v3628 = vadd.f32 %v2838, %v3627
        %v3629 = vpop.f32.mrf.mxu0
        %v3630 = vadd.f32 %v2834, %v3629
        %v3631 = vpop.f32.mrf.mxu0
        %v3632 = vadd.f32 %v2838, %v3631
        %3633 = vmatprep.mubr.bf16.mxu0 %v2644
        %3634 = vmatmul.mubr.bf16.gmra.mxu0 %v2643
        %v3635 = vpop.f32.mrf.mxu0
        %v3636 = vadd.f32 %v2834, %v3635
        %v3637 = vpop.f32.mrf.mxu0
        %v3638 = vadd.f32 %v2838, %v3637
        %v3639 = vpop.f32.mrf.mxu0
        %v3640 = vadd.f32 %v2834, %v3639
        %v3641 = vpop.f32.mrf.mxu0
        %v3642 = vadd.f32 %v2838, %v3641
        %3643 = vmatprep.mubr.bf16.mxu0 %v2647
        %3644 = vmatmul.mubr.bf16.gmra.mxu0 %v2646
        %v3645 = vpop.f32.mrf.mxu0
        %v3646 = vadd.f32 %v2834, %v3645
        %v3647 = vpop.f32.mrf.mxu0
        %v3648 = vadd.f32 %v2838, %v3647
        %v3649 = vpop.f32.mrf.mxu0
        %v3650 = vadd.f32 %v2834, %v3649
        %v3651 = vpop.f32.mrf.mxu0
        %v3652 = vadd.f32 %v2838, %v3651
        %3653 = vmatprep.mubr.bf16.mxu0 %v2650
        %3654 = vmatmul.mubr.bf16.gmra.mxu0 %v2649
        %v3655 = vpop.f32.mrf.mxu0
        %v3656 = vadd.f32 %v2834, %v3655
        %v3657 = vpop.f32.mrf.mxu0
        %v3658 = vadd.f32 %v2838, %v3657
        %v3659 = vpop.f32.mrf.mxu0
        %v3660 = vadd.f32 %v2834, %v3659
        %v3661 = vpop.f32.mrf.mxu0
        %v3662 = vadd.f32 %v2838, %v3661
        %3663 = vmatprep.mubr.bf16.mxu0 %v2653
        %3664 = vmatmul.mubr.bf16.gmra.mxu0 %v2652
        %v3665 = vpop.f32.mrf.mxu0
        %v3666 = vadd.f32 %v2834, %v3665
        %v3667 = vpop.f32.mrf.mxu0
        %v3668 = vadd.f32 %v2838, %v3667
        %v3669 = vpop.f32.mrf.mxu0
        %v3670 = vadd.f32 %v2834, %v3669
        %v3671 = vpop.f32.mrf.mxu0
        %v3672 = vadd.f32 %v2838, %v3671
        %3673 = vmatprep.mubr.bf16.mxu0 %v2656
        %3674 = vmatmul.mubr.bf16.gmra.mxu0 %v2655
        %v3675 = vpop.f32.mrf.mxu0
        %v3676 = vadd.f32 %v2834, %v3675
        %v3677 = vpop.f32.mrf.mxu0
        %v3678 = vadd.f32 %v2838, %v3677
        %v3679 = vpop.f32.mrf.mxu0
        %v3680 = vadd.f32 %v2834, %v3679
        %v3681 = vpop.f32.mrf.mxu0
        %v3682 = vadd.f32 %v2838, %v3681
        %3683 = vmatprep.mubr.bf16.mxu0 %v2659
        %3684 = vmatmul.mubr.bf16.gmra.mxu0 %v2658
        %v3685 = vpop.f32.mrf.mxu0
        %v3686 = vadd.f32 %v2834, %v3685
        %v3687 = vpop.f32.mrf.mxu0
        %v3688 = vadd.f32 %v2838, %v3687
        %v3689 = vpop.f32.mrf.mxu0
        %v3690 = vadd.f32 %v2834, %v3689
        %v3691 = vpop.f32.mrf.mxu0
        %v3692 = vadd.f32 %v2838, %v3691
        %3693 = vmatprep.mubr.bf16.mxu0 %v2662
        %3694 = vmatmul.mubr.bf16.gmra.mxu0 %v2661
        %v3695 = vpop.f32.mrf.mxu0
        %v3696 = vadd.f32 %v2834, %v3695
        %v3697 = vpop.f32.mrf.mxu0
        %v3698 = vadd.f32 %v2838, %v3697
        %v3699 = vpop.f32.mrf.mxu0
        %v3700 = vadd.f32 %v2834, %v3699
        %v3701 = vpop.f32.mrf.mxu0
        %v3702 = vadd.f32 %v2838, %v3701
        %3703 = vmatprep.mubr.bf16.mxu0 %v2665
        %3704 = vmatmul.mubr.bf16.gmra.mxu0 %v2664
        %v3705 = vpop.f32.mrf.mxu0
        %v3706 = vadd.f32 %v2834, %v3705
        %v3707 = vpop.f32.mrf.mxu0
        %v3708 = vadd.f32 %v2838, %v3707
        %v3709 = vpop.f32.mrf.mxu0
        %v3710 = vadd.f32 %v2834, %v3709
        %v3711 = vpop.f32.mrf.mxu0
        %v3712 = vadd.f32 %v2838, %v3711
        %3713 = vmatprep.mubr.bf16.mxu0 %v2668
        %3714 = vmatmul.mubr.bf16.gmra.mxu0 %v2667
        %v3715 = vpop.f32.mrf.mxu0
        %v3716 = vadd.f32 %v2834, %v3715
        %v3717 = vpop.f32.mrf.mxu0
        %v3718 = vadd.f32 %v2838, %v3717
        %v3719 = vpop.f32.mrf.mxu0
        %v3720 = vadd.f32 %v2834, %v3719
        %v3721 = vpop.f32.mrf.mxu0
        %v3722 = vadd.f32 %v2838, %v3721
        %3723 = vmatprep.mubr.bf16.mxu0 %v2671
        %3724 = vmatmul.mubr.bf16.gmra.mxu0 %v2670
        %v3725 = vpop.f32.mrf.mxu0
        %v3726 = vadd.f32 %v2834, %v3725
        %v3727 = vpop.f32.mrf.mxu0
        %v3728 = vadd.f32 %v2838, %v3727
        %v3729 = vpop.f32.mrf.mxu0
        %v3730 = vadd.f32 %v2834, %v3729
        %v3731 = vpop.f32.mrf.mxu0
        %v3732 = vadd.f32 %v2838, %v3731
        %3733 = vmatprep.mubr.bf16.mxu0 %v2674
        %3734 = vmatmul.mubr.bf16.gmra.mxu0 %v2673
        %v3735 = vpop.f32.mrf.mxu0
        %v3736 = vadd.f32 %v2834, %v3735
        %v3737 = vpop.f32.mrf.mxu0
        %v3738 = vadd.f32 %v2838, %v3737
        %v3739 = vpop.f32.mrf.mxu0
        %v3740 = vadd.f32 %v2834, %v3739
        %v3741 = vpop.f32.mrf.mxu0
        %v3742 = vadd.f32 %v2838, %v3741
        %3743 = vmatprep.mubr.bf16.mxu0 %v2677
        %3744 = vmatmul.mubr.bf16.gmra.mxu0 %v2676
        %v3745 = vpop.f32.mrf.mxu0
        %v3746 = vadd.f32 %v2834, %v3745
        %v3747 = vpop.f32.mrf.mxu0
        %v3748 = vadd.f32 %v2838, %v3747
        %v3749 = vpop.f32.mrf.mxu0
        %v3750 = vadd.f32 %v2834, %v3749
        %v3751 = vpop.f32.mrf.mxu0
        %v3752 = vadd.f32 %v2838, %v3751
        %3753 = vdwg.mxu0
        %3754 = vmatprep.subr.bf16.mxu0 %v3320
        %3755 = vmatpush1.bf16.msra.mxu0 %v3319
        %3756 = vmatprep.subr.bf16.mxu0 %v3318
        %3757 = vmatpush1.bf16.msra.mxu0 %v3317
        %3758 = vmatprep.subr.bf16.mxu0 %v3316
        %3759 = vmatpush1.bf16.msra.mxu0 %v3315
        %3760 = vmatprep.subr.bf16.mxu0 %v3314
        %3761 = vmatpush1.bf16.msra.mxu0 %v3313
        %3762 = vmatprep.subr.bf16.mxu0 %v3312
        %3763 = vmatpush1.bf16.msra.mxu0 %v3311
        %3764 = vmatprep.subr.bf16.mxu0 %v3310
        %3765 = vmatpush1.bf16.msra.mxu0 %v3309
        %3766 = vmatprep.subr.bf16.mxu0 %v3308
        %3767 = vmatpush1.bf16.msra.mxu0 %v3307
        %3768 = vmatprep.subr.bf16.mxu0 %v3306
        %3769 = vmatpush1.bf16.msra.mxu0 %v3305
        %3770 = vmatprep.subr.bf16.mxu0 %v3336
        %3771 = vmatpush2.bf16.msra.mxu0 %v3335
        %3772 = vmatprep.subr.bf16.mxu0 %v3334
        %3773 = vmatpush2.bf16.msra.mxu0 %v3333
        %3774 = vmatprep.subr.bf16.mxu0 %v3332
        %3775 = vmatpush2.bf16.msra.mxu0 %v3331
        %3776 = vmatprep.subr.bf16.mxu0 %v3330
        %3777 = vmatpush2.bf16.msra.mxu0 %v3329
        %3778 = vmatprep.subr.bf16.mxu0 %v3328
        %3779 = vmatpush2.bf16.msra.mxu0 %v3327
        %3780 = vmatprep.subr.bf16.mxu0 %v3326
        %3781 = vmatpush2.bf16.msra.mxu0 %v3325
        %3782 = vmatprep.subr.bf16.mxu0 %v3324
        %3783 = vmatpush2.bf16.msra.mxu0 %v3323
        %3784 = vmatprep.subr.bf16.mxu0 %v3322
        %3785 = vmatpush2.bf16.msra.mxu0 %v3321
        %3786 = vmatprep.mubr.bf16.mxu0 %v2634
        %3787 = vmatmul.mubr.bf16.gmra.mxu0 %v2633
        %v3788 = vpop.f32.mrf.mxu0
        %v3789 = vadd.f32 %v3596, %v3788
        %v3790 = vpop.f32.mrf.mxu0
        %v3791 = vadd.f32 %v3598, %v3790
        %v3792 = vpop.f32.mrf.mxu0
        %v3793 = vadd.f32 %v3600, %v3792
        %v3794 = vpop.f32.mrf.mxu0
        %v3795 = vadd.f32 %v3602, %v3794
        %3796 = vmatprep.mubr.bf16.mxu0 %v2637
        %3797 = vmatmul.mubr.bf16.gmra.mxu0 %v2636
        %v3798 = vpop.f32.mrf.mxu0
        %v3799 = vadd.f32 %v3606, %v3798
        %v3800 = vpop.f32.mrf.mxu0
        %v3801 = vadd.f32 %v3608, %v3800
        %v3802 = vpop.f32.mrf.mxu0
        %v3803 = vadd.f32 %v3610, %v3802
        %v3804 = vpop.f32.mrf.mxu0
        %v3805 = vadd.f32 %v3612, %v3804
        %3806 = vmatprep.mubr.bf16.mxu0 %v2640
        %3807 = vmatmul.mubr.bf16.gmra.mxu0 %v2639
        %v3808 = vpop.f32.mrf.mxu0
        %v3809 = vadd.f32 %v3616, %v3808
        %v3810 = vpop.f32.mrf.mxu0
        %v3811 = vadd.f32 %v3618, %v3810
        %v3812 = vpop.f32.mrf.mxu0
        %v3813 = vadd.f32 %v3620, %v3812
        %v3814 = vpop.f32.mrf.mxu0
        %v3815 = vadd.f32 %v3622, %v3814
        %3816 = vmatprep.mubr.bf16.mxu0 %v2643
        %3817 = vmatmul.mubr.bf16.gmra.mxu0 %v2642
        %v3818 = vpop.f32.mrf.mxu0
        %v3819 = vadd.f32 %v3626, %v3818
        %v3820 = vpop.f32.mrf.mxu0
        %v3821 = vadd.f32 %v3628, %v3820
        %v3822 = vpop.f32.mrf.mxu0
        %v3823 = vadd.f32 %v3630, %v3822
        %v3824 = vpop.f32.mrf.mxu0
        %v3825 = vadd.f32 %v3632, %v3824
        %3826 = vmatprep.mubr.bf16.mxu0 %v2646
        %3827 = vmatmul.mubr.bf16.gmra.mxu0 %v2645
        %v3828 = vpop.f32.mrf.mxu0
        %v3829 = vadd.f32 %v3636, %v3828
        %v3830 = vpop.f32.mrf.mxu0
        %v3831 = vadd.f32 %v3638, %v3830
        %v3832 = vpop.f32.mrf.mxu0
        %v3833 = vadd.f32 %v3640, %v3832
        %v3834 = vpop.f32.mrf.mxu0
        %v3835 = vadd.f32 %v3642, %v3834
        %3836 = vmatprep.mubr.bf16.mxu0 %v2649
        %3837 = vmatmul.mubr.bf16.gmra.mxu0 %v2648
        %v3838 = vpop.f32.mrf.mxu0
        %v3839 = vadd.f32 %v3646, %v3838
        %v3840 = vpop.f32.mrf.mxu0
        %v3841 = vadd.f32 %v3648, %v3840
        %v3842 = vpop.f32.mrf.mxu0
        %v3843 = vadd.f32 %v3650, %v3842
        %v3844 = vpop.f32.mrf.mxu0
        %v3845 = vadd.f32 %v3652, %v3844
        %3846 = vmatprep.mubr.bf16.mxu0 %v2652
        %3847 = vmatmul.mubr.bf16.gmra.mxu0 %v2651
        %v3848 = vpop.f32.mrf.mxu0
        %v3849 = vadd.f32 %v3656, %v3848
        %v3850 = vpop.f32.mrf.mxu0
        %v3851 = vadd.f32 %v3658, %v3850
        %v3852 = vpop.f32.mrf.mxu0
        %v3853 = vadd.f32 %v3660, %v3852
        %v3854 = vpop.f32.mrf.mxu0
        %v3855 = vadd.f32 %v3662, %v3854
        %3856 = vmatprep.mubr.bf16.mxu0 %v2655
        %3857 = vmatmul.mubr.bf16.gmra.mxu0 %v2654
        %v3858 = vpop.f32.mrf.mxu0
        %v3859 = vadd.f32 %v3666, %v3858
        %v3860 = vpop.f32.mrf.mxu0
        %v3861 = vadd.f32 %v3668, %v3860
        %v3862 = vpop.f32.mrf.mxu0
        %v3863 = vadd.f32 %v3670, %v3862
        %v3864 = vpop.f32.mrf.mxu0
        %v3865 = vadd.f32 %v3672, %v3864
        %3866 = vmatprep.mubr.bf16.mxu0 %v2658
        %3867 = vmatmul.mubr.bf16.gmra.mxu0 %v2657
        %v3868 = vpop.f32.mrf.mxu0
        %v3869 = vadd.f32 %v3676, %v3868
        %v3870 = vpop.f32.mrf.mxu0
        %v3871 = vadd.f32 %v3678, %v3870
        %v3872 = vpop.f32.mrf.mxu0
        %v3873 = vadd.f32 %v3680, %v3872
        %v3874 = vpop.f32.mrf.mxu0
        %v3875 = vadd.f32 %v3682, %v3874
        %3876 = vmatprep.mubr.bf16.mxu0 %v2661
        %3877 = vmatmul.mubr.bf16.gmra.mxu0 %v2660
        %v3878 = vpop.f32.mrf.mxu0
        %v3879 = vadd.f32 %v3686, %v3878
        %v3880 = vpop.f32.mrf.mxu0
        %v3881 = vadd.f32 %v3688, %v3880
        %v3882 = vpop.f32.mrf.mxu0
        %v3883 = vadd.f32 %v3690, %v3882
        %v3884 = vpop.f32.mrf.mxu0
        %v3885 = vadd.f32 %v3692, %v3884
        %3886 = vmatprep.mubr.bf16.mxu0 %v2664
        %3887 = vmatmul.mubr.bf16.gmra.mxu0 %v2663
        %v3888 = vpop.f32.mrf.mxu0
        %v3889 = vadd.f32 %v3696, %v3888
        %v3890 = vpop.f32.mrf.mxu0
        %v3891 = vadd.f32 %v3698, %v3890
        %v3892 = vpop.f32.mrf.mxu0
        %v3893 = vadd.f32 %v3700, %v3892
        %v3894 = vpop.f32.mrf.mxu0
        %v3895 = vadd.f32 %v3702, %v3894
        %3896 = vmatprep.mubr.bf16.mxu0 %v2667
        %3897 = vmatmul.mubr.bf16.gmra.mxu0 %v2666
        %v3898 = vpop.f32.mrf.mxu0
        %v3899 = vadd.f32 %v3706, %v3898
        %v3900 = vpop.f32.mrf.mxu0
        %v3901 = vadd.f32 %v3708, %v3900
        %v3902 = vpop.f32.mrf.mxu0
        %v3903 = vadd.f32 %v3710, %v3902
        %v3904 = vpop.f32.mrf.mxu0
        %v3905 = vadd.f32 %v3712, %v3904
        %3906 = vmatprep.mubr.bf16.mxu0 %v2670
        %3907 = vmatmul.mubr.bf16.gmra.mxu0 %v2669
        %v3908 = vpop.f32.mrf.mxu0
        %v3909 = vadd.f32 %v3716, %v3908
        %v3910 = vpop.f32.mrf.mxu0
        %v3911 = vadd.f32 %v3718, %v3910
        %v3912 = vpop.f32.mrf.mxu0
        %v3913 = vadd.f32 %v3720, %v3912
        %v3914 = vpop.f32.mrf.mxu0
        %v3915 = vadd.f32 %v3722, %v3914
        %3916 = vmatprep.mubr.bf16.mxu0 %v2673
        %3917 = vmatmul.mubr.bf16.gmra.mxu0 %v2672
        %v3918 = vpop.f32.mrf.mxu0
        %v3919 = vadd.f32 %v3726, %v3918
        %v3920 = vpop.f32.mrf.mxu0
        %v3921 = vadd.f32 %v3728, %v3920
        %v3922 = vpop.f32.mrf.mxu0
        %v3923 = vadd.f32 %v3730, %v3922
        %v3924 = vpop.f32.mrf.mxu0
        %v3925 = vadd.f32 %v3732, %v3924
        %3926 = vmatprep.mubr.bf16.mxu0 %v2676
        %3927 = vmatmul.mubr.bf16.gmra.mxu0 %v2675
        %v3928 = vpop.f32.mrf.mxu0
        %v3929 = vadd.f32 %v3736, %v3928
        %v3930 = vpop.f32.mrf.mxu0
        %v3931 = vadd.f32 %v3738, %v3930
        %v3932 = vpop.f32.mrf.mxu0
        %v3933 = vadd.f32 %v3740, %v3932
        %v3934 = vpop.f32.mrf.mxu0
        %v3935 = vadd.f32 %v3742, %v3934
        %3936 = vmatprep.mubr.bf16.mxu0 %v2679
        %3937 = vmatmul.mubr.bf16.gmra.mxu0 %v2678
        %v3938 = vpop.f32.mrf.mxu0
        %v3939 = vadd.f32 %v3746, %v3938
        %v3940 = vpop.f32.mrf.mxu0
        %v3941 = vadd.f32 %v3748, %v3940
        %v3942 = vpop.f32.mrf.mxu0
        %v3943 = vadd.f32 %v3750, %v3942
        %v3944 = vpop.f32.mrf.mxu0
        %v3945 = vadd.f32 %v3752, %v3944
        %3946 = vdwg.mxu0
        %3947 = vmatprep.subr.bf16.mxu0 %v3352
        %3948 = vmatpush1.bf16.msra.mxu0 %v3351
        %3949 = vmatprep.subr.bf16.mxu0 %v3350
        %3950 = vmatpush1.bf16.msra.mxu0 %v3349
        %3951 = vmatprep.subr.bf16.mxu0 %v3348
        %3952 = vmatpush1.bf16.msra.mxu0 %v3347
        %3953 = vmatprep.subr.bf16.mxu0 %v3346
        %3954 = vmatpush1.bf16.msra.mxu0 %v3345
        %3955 = vmatprep.subr.bf16.mxu0 %v3344
        %3956 = vmatpush1.bf16.msra.mxu0 %v3343
        %3957 = vmatprep.subr.bf16.mxu0 %v3342
        %3958 = vmatpush1.bf16.msra.mxu0 %v3341
        %3959 = vmatprep.subr.bf16.mxu0 %v3340
        %3960 = vmatpush1.bf16.msra.mxu0 %v3339
        %3961 = vmatprep.subr.bf16.mxu0 %v3338
        %3962 = vmatpush1.bf16.msra.mxu0 %v3337
        %3963 = vmatprep.subr.bf16.mxu0 %v3368
        %3964 = vmatpush2.bf16.msra.mxu0 %v3367
        %3965 = vmatprep.subr.bf16.mxu0 %v3366
        %3966 = vmatpush2.bf16.msra.mxu0 %v3365
        %3967 = vmatprep.subr.bf16.mxu0 %v3364
        %3968 = vmatpush2.bf16.msra.mxu0 %v3363
        %3969 = vmatprep.subr.bf16.mxu0 %v3362
        %3970 = vmatpush2.bf16.msra.mxu0 %v3361
        %3971 = vmatprep.subr.bf16.mxu0 %v3360
        %3972 = vmatpush2.bf16.msra.mxu0 %v3359
        %3973 = vmatprep.subr.bf16.mxu0 %v3358
        %3974 = vmatpush2.bf16.msra.mxu0 %v3357
        %3975 = vmatprep.subr.bf16.mxu0 %v3356
        %3976 = vmatpush2.bf16.msra.mxu0 %v3355
        %3977 = vmatprep.subr.bf16.mxu0 %v3354
        %3978 = vmatpush2.bf16.msra.mxu0 %v3353
        %3979 = vmatprep.mubr.bf16.mxu0 %v2636
        %3980 = vmatmul.mubr.bf16.gmra.mxu0 %v2635
        %v3981 = vpop.f32.mrf.mxu0
        %v3982 = vadd.f32 %v3789, %v3981
        %v3983 = vpop.f32.mrf.mxu0
        %v3984 = vadd.f32 %v3791, %v3983
        %v3985 = vpop.f32.mrf.mxu0
        %v3986 = vadd.f32 %v3793, %v3985
        %v3987 = vpop.f32.mrf.mxu0
        %v3988 = vadd.f32 %v3795, %v3987
        %3989 = vmatprep.mubr.bf16.mxu0 %v2639
        %3990 = vmatmul.mubr.bf16.gmra.mxu0 %v2638
        %v3991 = vpop.f32.mrf.mxu0
        %v3992 = vadd.f32 %v3799, %v3991
        %v3993 = vpop.f32.mrf.mxu0
        %v3994 = vadd.f32 %v3801, %v3993
        %v3995 = vpop.f32.mrf.mxu0
        %v3996 = vadd.f32 %v3803, %v3995
        %v3997 = vpop.f32.mrf.mxu0
        %v3998 = vadd.f32 %v3805, %v3997
        %3999 = vmatprep.mubr.bf16.mxu0 %v2642
        %4000 = vmatmul.mubr.bf16.gmra.mxu0 %v2641
        %v4001 = vpop.f32.mrf.mxu0
        %v4002 = vadd.f32 %v3809, %v4001
        %v4003 = vpop.f32.mrf.mxu0
        %v4004 = vadd.f32 %v3811, %v4003
        %v4005 = vpop.f32.mrf.mxu0
        %v4006 = vadd.f32 %v3813, %v4005
        %v4007 = vpop.f32.mrf.mxu0
        %v4008 = vadd.f32 %v3815, %v4007
        %4009 = vmatprep.mubr.bf16.mxu0 %v2645
        %4010 = vmatmul.mubr.bf16.gmra.mxu0 %v2644
        %v4011 = vpop.f32.mrf.mxu0
        %v4012 = vadd.f32 %v3819, %v4011
        %v4013 = vpop.f32.mrf.mxu0
        %v4014 = vadd.f32 %v3821, %v4013
        %v4015 = vpop.f32.mrf.mxu0
        %v4016 = vadd.f32 %v3823, %v4015
        %v4017 = vpop.f32.mrf.mxu0
        %v4018 = vadd.f32 %v3825, %v4017
        %4019 = vmatprep.mubr.bf16.mxu0 %v2648
        %4020 = vmatmul.mubr.bf16.gmra.mxu0 %v2647
        %v4021 = vpop.f32.mrf.mxu0
        %v4022 = vadd.f32 %v3829, %v4021
        %v4023 = vpop.f32.mrf.mxu0
        %v4024 = vadd.f32 %v3831, %v4023
        %v4025 = vpop.f32.mrf.mxu0
        %v4026 = vadd.f32 %v3833, %v4025
        %v4027 = vpop.f32.mrf.mxu0
        %v4028 = vadd.f32 %v3835, %v4027
        %4029 = vmatprep.mubr.bf16.mxu0 %v2651
        %4030 = vmatmul.mubr.bf16.gmra.mxu0 %v2650
        %v4031 = vpop.f32.mrf.mxu0
        %v4032 = vadd.f32 %v3839, %v4031
        %v4033 = vpop.f32.mrf.mxu0
        %v4034 = vadd.f32 %v3841, %v4033
        %v4035 = vpop.f32.mrf.mxu0
        %v4036 = vadd.f32 %v3843, %v4035
        %v4037 = vpop.f32.mrf.mxu0
        %v4038 = vadd.f32 %v3845, %v4037
        %4039 = vmatprep.mubr.bf16.mxu0 %v2654
        %4040 = vmatmul.mubr.bf16.gmra.mxu0 %v2653
        %v4041 = vpop.f32.mrf.mxu0
        %v4042 = vadd.f32 %v3849, %v4041
        %v4043 = vpop.f32.mrf.mxu0
        %v4044 = vadd.f32 %v3851, %v4043
        %v4045 = vpop.f32.mrf.mxu0
        %v4046 = vadd.f32 %v3853, %v4045
        %v4047 = vpop.f32.mrf.mxu0
        %v4048 = vadd.f32 %v3855, %v4047
        %4049 = vmatprep.mubr.bf16.mxu0 %v2657
        %4050 = vmatmul.mubr.bf16.gmra.mxu0 %v2656
        %v4051 = vpop.f32.mrf.mxu0
        %v4052 = vadd.f32 %v3859, %v4051
        %v4053 = vpop.f32.mrf.mxu0
        %v4054 = vadd.f32 %v3861, %v4053
        %v4055 = vpop.f32.mrf.mxu0
        %v4056 = vadd.f32 %v3863, %v4055
        %v4057 = vpop.f32.mrf.mxu0
        %v4058 = vadd.f32 %v3865, %v4057
        %4059 = vmatprep.mubr.bf16.mxu0 %v2660
        %4060 = vmatmul.mubr.bf16.gmra.mxu0 %v2659
        %v4061 = vpop.f32.mrf.mxu0
        %v4062 = vadd.f32 %v3869, %v4061
        %v4063 = vpop.f32.mrf.mxu0
        %v4064 = vadd.f32 %v3871, %v4063
        %v4065 = vpop.f32.mrf.mxu0
        %v4066 = vadd.f32 %v3873, %v4065
        %v4067 = vpop.f32.mrf.mxu0
        %v4068 = vadd.f32 %v3875, %v4067
        %4069 = vmatprep.mubr.bf16.mxu0 %v2663
        %4070 = vmatmul.mubr.bf16.gmra.mxu0 %v2662
        %v4071 = vpop.f32.mrf.mxu0
        %v4072 = vadd.f32 %v3879, %v4071
        %v4073 = vpop.f32.mrf.mxu0
        %v4074 = vadd.f32 %v3881, %v4073
        %v4075 = vpop.f32.mrf.mxu0
        %v4076 = vadd.f32 %v3883, %v4075
        %v4077 = vpop.f32.mrf.mxu0
        %v4078 = vadd.f32 %v3885, %v4077
        %4079 = vmatprep.mubr.bf16.mxu0 %v2666
        %4080 = vmatmul.mubr.bf16.gmra.mxu0 %v2665
        %v4081 = vpop.f32.mrf.mxu0
        %v4082 = vadd.f32 %v3889, %v4081
        %v4083 = vpop.f32.mrf.mxu0
        %v4084 = vadd.f32 %v3891, %v4083
        %v4085 = vpop.f32.mrf.mxu0
        %v4086 = vadd.f32 %v3893, %v4085
        %v4087 = vpop.f32.mrf.mxu0
        %v4088 = vadd.f32 %v3895, %v4087
        %4089 = vmatprep.mubr.bf16.mxu0 %v2669
        %4090 = vmatmul.mubr.bf16.gmra.mxu0 %v2668
        %v4091 = vpop.f32.mrf.mxu0
        %v4092 = vadd.f32 %v3899, %v4091
        %v4093 = vpop.f32.mrf.mxu0
        %v4094 = vadd.f32 %v3901, %v4093
        %v4095 = vpop.f32.mrf.mxu0
        %v4096 = vadd.f32 %v3903, %v4095
        %v4097 = vpop.f32.mrf.mxu0
        %v4098 = vadd.f32 %v3905, %v4097
        %4099 = vmatprep.mubr.bf16.mxu0 %v2672
        %4100 = vmatmul.mubr.bf16.gmra.mxu0 %v2671
        %v4101 = vpop.f32.mrf.mxu0
        %v4102 = vadd.f32 %v3909, %v4101
        %v4103 = vpop.f32.mrf.mxu0
        %v4104 = vadd.f32 %v3911, %v4103
        %v4105 = vpop.f32.mrf.mxu0
        %v4106 = vadd.f32 %v3913, %v4105
        %v4107 = vpop.f32.mrf.mxu0
        %v4108 = vadd.f32 %v3915, %v4107
        %4109 = vmatprep.mubr.bf16.mxu0 %v2675
        %4110 = vmatmul.mubr.bf16.gmra.mxu0 %v2674
        %v4111 = vpop.f32.mrf.mxu0
        %v4112 = vadd.f32 %v3919, %v4111
        %v4113 = vpop.f32.mrf.mxu0
        %v4114 = vadd.f32 %v3921, %v4113
        %v4115 = vpop.f32.mrf.mxu0
        %v4116 = vadd.f32 %v3923, %v4115
        %v4117 = vpop.f32.mrf.mxu0
        %v4118 = vadd.f32 %v3925, %v4117
        %4119 = vmatprep.mubr.bf16.mxu0 %v2678
        %4120 = vmatmul.mubr.bf16.gmra.mxu0 %v2677
        %v4121 = vpop.f32.mrf.mxu0
        %v4122 = vadd.f32 %v3929, %v4121
        %v4123 = vpop.f32.mrf.mxu0
        %v4124 = vadd.f32 %v3931, %v4123
        %v4125 = vpop.f32.mrf.mxu0
        %v4126 = vadd.f32 %v3933, %v4125
        %v4127 = vpop.f32.mrf.mxu0
        %v4128 = vadd.f32 %v3935, %v4127
        %4129 = vmatprep.mubr.bf16.mxu0 %v2681
        %4130 = vmatmul.mubr.bf16.gmra.mxu0 %v2680
        %v4131 = vpop.f32.mrf.mxu0
        %v4132 = vadd.f32 %v3939, %v4131
        %v4133 = vpop.f32.mrf.mxu0
        %v4134 = vadd.f32 %v3941, %v4133
        %v4135 = vpop.f32.mrf.mxu0
        %v4136 = vadd.f32 %v3943, %v4135
        %v4137 = vpop.f32.mrf.mxu0
        %v4138 = vadd.f32 %v3945, %v4137
        %4139 = vdwg.mxu0
        %4140 = vmatprep.subr.bf16.mxu0 %v3384
        %4141 = vmatpush1.bf16.msra.mxu0 %v3383
        %4142 = vmatprep.subr.bf16.mxu0 %v3382
        %4143 = vmatpush1.bf16.msra.mxu0 %v3381
        %4144 = vmatprep.subr.bf16.mxu0 %v3380
        %4145 = vmatpush1.bf16.msra.mxu0 %v3379
        %4146 = vmatprep.subr.bf16.mxu0 %v3378
        %4147 = vmatpush1.bf16.msra.mxu0 %v3377
        %4148 = vmatprep.subr.bf16.mxu0 %v3376
        %4149 = vmatpush1.bf16.msra.mxu0 %v3375
        %4150 = vmatprep.subr.bf16.mxu0 %v3374
        %4151 = vmatpush1.bf16.msra.mxu0 %v3373
        %4152 = vmatprep.subr.bf16.mxu0 %v3372
        %4153 = vmatpush1.bf16.msra.mxu0 %v3371
        %4154 = vmatprep.subr.bf16.mxu0 %v3370
        %4155 = vmatpush1.bf16.msra.mxu0 %v3369
        %4156 = vmatprep.subr.bf16.mxu0 %v3400
        %4157 = vmatpush2.bf16.msra.mxu0 %v3399
        %4158 = vmatprep.subr.bf16.mxu0 %v3398
        %4159 = vmatpush2.bf16.msra.mxu0 %v3397
        %4160 = vmatprep.subr.bf16.mxu0 %v3396
        %4161 = vmatpush2.bf16.msra.mxu0 %v3395
        %4162 = vmatprep.subr.bf16.mxu0 %v3394
        %4163 = vmatpush2.bf16.msra.mxu0 %v3393
        %4164 = vmatprep.subr.bf16.mxu0 %v3392
        %4165 = vmatpush2.bf16.msra.mxu0 %v3391
        %4166 = vmatprep.subr.bf16.mxu0 %v3390
        %4167 = vmatpush2.bf16.msra.mxu0 %v3389
        %4168 = vmatprep.subr.bf16.mxu0 %v3388
        %4169 = vmatpush2.bf16.msra.mxu0 %v3387
        %4170 = vmatprep.subr.bf16.mxu0 %v3386
        %4171 = vmatpush2.bf16.msra.mxu0 %v3385
        %4172 = vmatprep.mubr.bf16.mxu0 %v2638
        %4173 = vmatmul.mubr.bf16.gmra.mxu0 %v2637
        %v4174 = vpop.f32.mrf.mxu0
        %v4175 = vadd.f32 %v3982, %v4174
        %v4176 = vpop.f32.mrf.mxu0
        %v4177 = vadd.f32 %v3984, %v4176
        %v4178 = vpop.f32.mrf.mxu0
        %v4179 = vadd.f32 %v3986, %v4178
        %v4180 = vpop.f32.mrf.mxu0
        %v4181 = vadd.f32 %v3988, %v4180
        %4182 = vmatprep.mubr.bf16.mxu0 %v2641
        %4183 = vmatmul.mubr.bf16.gmra.mxu0 %v2640
        %v4184 = vpop.f32.mrf.mxu0
        %v4185 = vadd.f32 %v3992, %v4184
        %v4186 = vpop.f32.mrf.mxu0
        %v4187 = vadd.f32 %v3994, %v4186
        %v4188 = vpop.f32.mrf.mxu0
        %v4189 = vadd.f32 %v3996, %v4188
        %v4190 = vpop.f32.mrf.mxu0
        %v4191 = vadd.f32 %v3998, %v4190
        %4192 = vmatprep.mubr.bf16.mxu0 %v2644
        %4193 = vmatmul.mubr.bf16.gmra.mxu0 %v2643
        %v4194 = vpop.f32.mrf.mxu0
        %v4195 = vadd.f32 %v4002, %v4194
        %v4196 = vpop.f32.mrf.mxu0
        %v4197 = vadd.f32 %v4004, %v4196
        %v4198 = vpop.f32.mrf.mxu0
        %v4199 = vadd.f32 %v4006, %v4198
        %v4200 = vpop.f32.mrf.mxu0
        %v4201 = vadd.f32 %v4008, %v4200
        %4202 = vmatprep.mubr.bf16.mxu0 %v2647
        %4203 = vmatmul.mubr.bf16.gmra.mxu0 %v2646
        %v4204 = vpop.f32.mrf.mxu0
        %v4205 = vadd.f32 %v4012, %v4204
        %v4206 = vpop.f32.mrf.mxu0
        %v4207 = vadd.f32 %v4014, %v4206
        %v4208 = vpop.f32.mrf.mxu0
        %v4209 = vadd.f32 %v4016, %v4208
        %v4210 = vpop.f32.mrf.mxu0
        %v4211 = vadd.f32 %v4018, %v4210
        %4212 = vmatprep.mubr.bf16.mxu0 %v2650
        %4213 = vmatmul.mubr.bf16.gmra.mxu0 %v2649
        %v4214 = vpop.f32.mrf.mxu0
        %v4215 = vadd.f32 %v4022, %v4214
        %v4216 = vpop.f32.mrf.mxu0
        %v4217 = vadd.f32 %v4024, %v4216
        %v4218 = vpop.f32.mrf.mxu0
        %v4219 = vadd.f32 %v4026, %v4218
        %v4220 = vpop.f32.mrf.mxu0
        %v4221 = vadd.f32 %v4028, %v4220
        %4222 = vmatprep.mubr.bf16.mxu0 %v2653
        %4223 = vmatmul.mubr.bf16.gmra.mxu0 %v2652
        %v4224 = vpop.f32.mrf.mxu0
        %v4225 = vadd.f32 %v4032, %v4224
        %v4226 = vpop.f32.mrf.mxu0
        %v4227 = vadd.f32 %v4034, %v4226
        %v4228 = vpop.f32.mrf.mxu0
        %v4229 = vadd.f32 %v4036, %v4228
        %v4230 = vpop.f32.mrf.mxu0
        %v4231 = vadd.f32 %v4038, %v4230
        %4232 = vmatprep.mubr.bf16.mxu0 %v2656
        %4233 = vmatmul.mubr.bf16.gmra.mxu0 %v2655
        %v4234 = vpop.f32.mrf.mxu0
        %v4235 = vadd.f32 %v4042, %v4234
        %v4236 = vpop.f32.mrf.mxu0
        %v4237 = vadd.f32 %v4044, %v4236
        %v4238 = vpop.f32.mrf.mxu0
        %v4239 = vadd.f32 %v4046, %v4238
        %v4240 = vpop.f32.mrf.mxu0
        %v4241 = vadd.f32 %v4048, %v4240
        %4242 = vmatprep.mubr.bf16.mxu0 %v2659
        %4243 = vmatmul.mubr.bf16.gmra.mxu0 %v2658
        %v4244 = vpop.f32.mrf.mxu0
        %v4245 = vadd.f32 %v4052, %v4244
        %v4246 = vpop.f32.mrf.mxu0
        %v4247 = vadd.f32 %v4054, %v4246
        %v4248 = vpop.f32.mrf.mxu0
        %v4249 = vadd.f32 %v4056, %v4248
        %v4250 = vpop.f32.mrf.mxu0
        %v4251 = vadd.f32 %v4058, %v4250
        %4252 = vmatprep.mubr.bf16.mxu0 %v2662
        %4253 = vmatmul.mubr.bf16.gmra.mxu0 %v2661
        %v4254 = vpop.f32.mrf.mxu0
        %v4255 = vadd.f32 %v4062, %v4254
        %v4256 = vpop.f32.mrf.mxu0
        %v4257 = vadd.f32 %v4064, %v4256
        %v4258 = vpop.f32.mrf.mxu0
        %v4259 = vadd.f32 %v4066, %v4258
        %v4260 = vpop.f32.mrf.mxu0
        %v4261 = vadd.f32 %v4068, %v4260
        %4262 = vmatprep.mubr.bf16.mxu0 %v2665
        %4263 = vmatmul.mubr.bf16.gmra.mxu0 %v2664
        %v4264 = vpop.f32.mrf.mxu0
        %v4265 = vadd.f32 %v4072, %v4264
        %v4266 = vpop.f32.mrf.mxu0
        %v4267 = vadd.f32 %v4074, %v4266
        %v4268 = vpop.f32.mrf.mxu0
        %v4269 = vadd.f32 %v4076, %v4268
        %v4270 = vpop.f32.mrf.mxu0
        %v4271 = vadd.f32 %v4078, %v4270
        %4272 = vmatprep.mubr.bf16.mxu0 %v2668
        %4273 = vmatmul.mubr.bf16.gmra.mxu0 %v2667
        %v4274 = vpop.f32.mrf.mxu0
        %v4275 = vadd.f32 %v4082, %v4274
        %v4276 = vpop.f32.mrf.mxu0
        %v4277 = vadd.f32 %v4084, %v4276
        %v4278 = vpop.f32.mrf.mxu0
        %v4279 = vadd.f32 %v4086, %v4278
        %v4280 = vpop.f32.mrf.mxu0
        %v4281 = vadd.f32 %v4088, %v4280
        %4282 = vmatprep.mubr.bf16.mxu0 %v2671
        %4283 = vmatmul.mubr.bf16.gmra.mxu0 %v2670
        %v4284 = vpop.f32.mrf.mxu0
        %v4285 = vadd.f32 %v4092, %v4284
        %v4286 = vpop.f32.mrf.mxu0
        %v4287 = vadd.f32 %v4094, %v4286
        %v4288 = vpop.f32.mrf.mxu0
        %v4289 = vadd.f32 %v4096, %v4288
        %v4290 = vpop.f32.mrf.mxu0
        %v4291 = vadd.f32 %v4098, %v4290
        %4292 = vmatprep.mubr.bf16.mxu0 %v2674
        %4293 = vmatmul.mubr.bf16.gmra.mxu0 %v2673
        %v4294 = vpop.f32.mrf.mxu0
        %v4295 = vadd.f32 %v4102, %v4294
        %v4296 = vpop.f32.mrf.mxu0
        %v4297 = vadd.f32 %v4104, %v4296
        %v4298 = vpop.f32.mrf.mxu0
        %v4299 = vadd.f32 %v4106, %v4298
        %v4300 = vpop.f32.mrf.mxu0
        %v4301 = vadd.f32 %v4108, %v4300
        %4302 = vmatprep.mubr.bf16.mxu0 %v2677
        %4303 = vmatmul.mubr.bf16.gmra.mxu0 %v2676
        %v4304 = vpop.f32.mrf.mxu0
        %v4305 = vadd.f32 %v4112, %v4304
        %v4306 = vpop.f32.mrf.mxu0
        %v4307 = vadd.f32 %v4114, %v4306
        %v4308 = vpop.f32.mrf.mxu0
        %v4309 = vadd.f32 %v4116, %v4308
        %v4310 = vpop.f32.mrf.mxu0
        %v4311 = vadd.f32 %v4118, %v4310
        %4312 = vmatprep.mubr.bf16.mxu0 %v2680
        %4313 = vmatmul.mubr.bf16.gmra.mxu0 %v2679
        %v4314 = vpop.f32.mrf.mxu0
        %v4315 = vadd.f32 %v4122, %v4314
        %v4316 = vpop.f32.mrf.mxu0
        %v4317 = vadd.f32 %v4124, %v4316
        %v4318 = vpop.f32.mrf.mxu0
        %v4319 = vadd.f32 %v4126, %v4318
        %v4320 = vpop.f32.mrf.mxu0
        %v4321 = vadd.f32 %v4128, %v4320
        %4322 = vmatprep.mubr.bf16.mxu0 %v2683
        %4323 = vmatmul.mubr.bf16.gmra.mxu0 %v2682
        %v4324 = vpop.f32.mrf.mxu0
        %v4325 = vadd.f32 %v4132, %v4324
        %v4326 = vpop.f32.mrf.mxu0
        %v4327 = vadd.f32 %v4134, %v4326
        %v4328 = vpop.f32.mrf.mxu0
        %v4329 = vadd.f32 %v4136, %v4328
        %v4330 = vpop.f32.mrf.mxu0
        %v4331 = vadd.f32 %v4138, %v4330
        %4332 = vdwg.mxu0
        %4333 = vmatprep.subr.bf16.mxu0 %v3416
        %4334 = vmatpush1.bf16.msra.mxu0 %v3415
        %4335 = vmatprep.subr.bf16.mxu0 %v3414
        %4336 = vmatpush1.bf16.msra.mxu0 %v3413
        %4337 = vmatprep.subr.bf16.mxu0 %v3412
        %4338 = vmatpush1.bf16.msra.mxu0 %v3411
        %4339 = vmatprep.subr.bf16.mxu0 %v3410
        %4340 = vmatpush1.bf16.msra.mxu0 %v3409
        %4341 = vmatprep.subr.bf16.mxu0 %v3408
        %4342 = vmatpush1.bf16.msra.mxu0 %v3407
        %4343 = vmatprep.subr.bf16.mxu0 %v3406
        %4344 = vmatpush1.bf16.msra.mxu0 %v3405
        %4345 = vmatprep.subr.bf16.mxu0 %v3404
        %4346 = vmatpush1.bf16.msra.mxu0 %v3403
        %4347 = vmatprep.subr.bf16.mxu0 %v3402
        %4348 = vmatpush1.bf16.msra.mxu0 %v3401
        %4349 = vmatprep.subr.bf16.mxu0 0
        %4350 = vmatpush2.bf16.msra.mxu0 0
        %4351 = vmatprep.subr.bf16.mxu0 0
        %4352 = vmatpush2.bf16.msra.mxu0 0
        %4353 = vmatprep.subr.bf16.mxu0 0
        %4354 = vmatpush2.bf16.msra.mxu0 0
        %4355 = vmatprep.subr.bf16.mxu0 0
        %4356 = vmatpush2.bf16.msra.mxu0 0
        %4357 = vmatprep.subr.bf16.mxu0 0
        %4358 = vmatpush2.bf16.msra.mxu0 0
        %4359 = vmatprep.subr.bf16.mxu0 0
        %4360 = vmatpush2.bf16.msra.mxu0 0
        %4361 = vmatprep.subr.bf16.mxu0 0
        %4362 = vmatpush2.bf16.msra.mxu0 0
        %4363 = vmatprep.subr.bf16.mxu0 0
        %4364 = vmatpush2.bf16.msra.mxu0 0
        %4365 = vmatprep.mubr.bf16.mxu0 0
        %4366 = vmatmul.mubr.bf16.gmra.mxu0 %v2639
        %v4367 = vpop.f32.mrf.mxu0
        %v4368 = vadd.f32 %v4175, %v4367
        %v4369 = vpop.f32.mrf.mxu0
        %v4370 = vadd.f32 %v4177, %v4369
        %v4371 = vpop.f32.mrf.mxu0
        %v4372 = vadd.f32 %v4179, %v4371
        %v4373 = vpop.f32.mrf.mxu0
        %v4374 = vadd.f32 %v4181, %v4373
        %4375 = vmatprep.mubr.bf16.mxu0 0
        %4376 = vmatmul.mubr.bf16.gmra.mxu0 %v2642
        %v4377 = vpop.f32.mrf.mxu0
        %v4378 = vadd.f32 %v4185, %v4377
        %v4379 = vpop.f32.mrf.mxu0
        %v4380 = vadd.f32 %v4187, %v4379
        %v4381 = vpop.f32.mrf.mxu0
        %v4382 = vadd.f32 %v4189, %v4381
        %v4383 = vpop.f32.mrf.mxu0
        %v4384 = vadd.f32 %v4191, %v4383
        %4385 = vmatprep.mubr.bf16.mxu0 0
        %4386 = vmatmul.mubr.bf16.gmra.mxu0 %v2645
        %v4387 = vpop.f32.mrf.mxu0
        %v4388 = vadd.f32 %v4195, %v4387
        %v4389 = vpop.f32.mrf.mxu0
        %v4390 = vadd.f32 %v4197, %v4389
        %v4391 = vpop.f32.mrf.mxu0
        %v4392 = vadd.f32 %v4199, %v4391
        %v4393 = vpop.f32.mrf.mxu0
        %v4394 = vadd.f32 %v4201, %v4393
        %4395 = vmatprep.mubr.bf16.mxu0 0
        %4396 = vmatmul.mubr.bf16.gmra.mxu0 %v2648
        %v4397 = vpop.f32.mrf.mxu0
        %v4398 = vadd.f32 %v4205, %v4397
        %v4399 = vpop.f32.mrf.mxu0
        %v4400 = vadd.f32 %v4207, %v4399
        %v4401 = vpop.f32.mrf.mxu0
        %v4402 = vadd.f32 %v4209, %v4401
        %v4403 = vpop.f32.mrf.mxu0
        %v4404 = vadd.f32 %v4211, %v4403
        %4405 = vmatprep.mubr.bf16.mxu0 0
        %4406 = vmatmul.mubr.bf16.gmra.mxu0 %v2651
        %v4407 = vpop.f32.mrf.mxu0
        %v4408 = vadd.f32 %v4215, %v4407
        %v4409 = vpop.f32.mrf.mxu0
        %v4410 = vadd.f32 %v4217, %v4409
        %v4411 = vpop.f32.mrf.mxu0
        %v4412 = vadd.f32 %v4219, %v4411
        %v4413 = vpop.f32.mrf.mxu0
        %v4414 = vadd.f32 %v4221, %v4413
        %4415 = vmatprep.mubr.bf16.mxu0 0
        %4416 = vmatmul.mubr.bf16.gmra.mxu0 %v2654
        %v4417 = vpop.f32.mrf.mxu0
        %v4418 = vadd.f32 %v4225, %v4417
        %v4419 = vpop.f32.mrf.mxu0
        %v4420 = vadd.f32 %v4227, %v4419
        %v4421 = vpop.f32.mrf.mxu0
        %v4422 = vadd.f32 %v4229, %v4421
        %v4423 = vpop.f32.mrf.mxu0
        %v4424 = vadd.f32 %v4231, %v4423
        %4425 = vmatprep.mubr.bf16.mxu0 0
        %4426 = vmatmul.mubr.bf16.gmra.mxu0 %v2657
        %v4427 = vpop.f32.mrf.mxu0
        %v4428 = vadd.f32 %v4235, %v4427
        %v4429 = vpop.f32.mrf.mxu0
        %v4430 = vadd.f32 %v4237, %v4429
        %v4431 = vpop.f32.mrf.mxu0
        %v4432 = vadd.f32 %v4239, %v4431
        %v4433 = vpop.f32.mrf.mxu0
        %v4434 = vadd.f32 %v4241, %v4433
        %4435 = vmatprep.mubr.bf16.mxu0 0
        %4436 = vmatmul.mubr.bf16.gmra.mxu0 %v2660
        %v4437 = vpop.f32.mrf.mxu0
        %v4438 = vadd.f32 %v4245, %v4437
        %v4439 = vpop.f32.mrf.mxu0
        %v4440 = vadd.f32 %v4247, %v4439
        %v4441 = vpop.f32.mrf.mxu0
        %v4442 = vadd.f32 %v4249, %v4441
        %v4443 = vpop.f32.mrf.mxu0
        %v4444 = vadd.f32 %v4251, %v4443
        %4445 = vmatprep.mubr.bf16.mxu0 0
        %4446 = vmatmul.mubr.bf16.gmra.mxu0 %v2663
        %v4447 = vpop.f32.mrf.mxu0
        %v4448 = vadd.f32 %v4255, %v4447
        %v4449 = vpop.f32.mrf.mxu0
        %v4450 = vadd.f32 %v4257, %v4449
        %v4451 = vpop.f32.mrf.mxu0
        %v4452 = vadd.f32 %v4259, %v4451
        %v4453 = vpop.f32.mrf.mxu0
        %v4454 = vadd.f32 %v4261, %v4453
        %4455 = vmatprep.mubr.bf16.mxu0 0
        %4456 = vmatmul.mubr.bf16.gmra.mxu0 %v2666
        %v4457 = vpop.f32.mrf.mxu0
        %v4458 = vadd.f32 %v4265, %v4457
        %v4459 = vpop.f32.mrf.mxu0
        %v4460 = vadd.f32 %v4267, %v4459
        %v4461 = vpop.f32.mrf.mxu0
        %v4462 = vadd.f32 %v4269, %v4461
        %v4463 = vpop.f32.mrf.mxu0
        %v4464 = vadd.f32 %v4271, %v4463
        %4465 = vmatprep.mubr.bf16.mxu0 0
        %4466 = vmatmul.mubr.bf16.gmra.mxu0 %v2669
        %v4467 = vpop.f32.mrf.mxu0
        %v4468 = vadd.f32 %v4275, %v4467
        %v4469 = vpop.f32.mrf.mxu0
        %v4470 = vadd.f32 %v4277, %v4469
        %v4471 = vpop.f32.mrf.mxu0
        %v4472 = vadd.f32 %v4279, %v4471
        %v4473 = vpop.f32.mrf.mxu0
        %v4474 = vadd.f32 %v4281, %v4473
        %4475 = vmatprep.mubr.bf16.mxu0 0
        %4476 = vmatmul.mubr.bf16.gmra.mxu0 %v2672
        %v4477 = vpop.f32.mrf.mxu0
        %v4478 = vadd.f32 %v4285, %v4477
        %v4479 = vpop.f32.mrf.mxu0
        %v4480 = vadd.f32 %v4287, %v4479
        %v4481 = vpop.f32.mrf.mxu0
        %v4482 = vadd.f32 %v4289, %v4481
        %v4483 = vpop.f32.mrf.mxu0
        %v4484 = vadd.f32 %v4291, %v4483
        %4485 = vmatprep.mubr.bf16.mxu0 0
        %4486 = vmatmul.mubr.bf16.gmra.mxu0 %v2675
        %v4487 = vpop.f32.mrf.mxu0
        %v4488 = vadd.f32 %v4295, %v4487
        %v4489 = vpop.f32.mrf.mxu0
        %v4490 = vadd.f32 %v4297, %v4489
        %v4491 = vpop.f32.mrf.mxu0
        %v4492 = vadd.f32 %v4299, %v4491
        %v4493 = vpop.f32.mrf.mxu0
        %v4494 = vadd.f32 %v4301, %v4493
        %4495 = vmatprep.mubr.bf16.mxu0 0
        %4496 = vmatmul.mubr.bf16.gmra.mxu0 %v2678
        %v4497 = vpop.f32.mrf.mxu0
        %v4498 = vadd.f32 %v4305, %v4497
        %v4499 = vpop.f32.mrf.mxu0
        %v4500 = vadd.f32 %v4307, %v4499
        %v4501 = vpop.f32.mrf.mxu0
        %v4502 = vadd.f32 %v4309, %v4501
        %v4503 = vpop.f32.mrf.mxu0
        %v4504 = vadd.f32 %v4311, %v4503
        %4505 = vmatprep.mubr.bf16.mxu0 0
        %4506 = vmatmul.mubr.bf16.gmra.mxu0 %v2681
        %v4507 = vpop.f32.mrf.mxu0
        %v4508 = vadd.f32 %v4315, %v4507
        %v4509 = vpop.f32.mrf.mxu0
        %v4510 = vadd.f32 %v4317, %v4509
        %v4511 = vpop.f32.mrf.mxu0
        %v4512 = vadd.f32 %v4319, %v4511
        %v4513 = vpop.f32.mrf.mxu0
        %v4514 = vadd.f32 %v4321, %v4513
        %4515 = vmatprep.mubr.bf16.mxu0 0
        %4516 = vmatmul.mubr.bf16.gmra.mxu0 %v2684
        %v4517 = vpop.f32.mrf.mxu0
        %v4518 = vadd.f32 %v4325, %v4517
        %v4519 = vpop.f32.mrf.mxu0
        %v4520 = vadd.f32 %v4327, %v4519
        %v4521 = vpop.f32.mrf.mxu0
        %v4522 = vadd.f32 %v4329, %v4521
        %v4523 = vpop.f32.mrf.mxu0
        %v4524 = vadd.f32 %v4331, %v4523
        %4525 = vdwg.mxu0
        %v4526 = vmax.f32 %v4368, 0.0
        %v4527 = vmax.f32 %v4370, 0.0
        %v4528 = vmax.f32 %v4372, 0.0
        %v4529 = vmax.f32 %v4374, 0.0
        %v4530 = vmax.f32 %v4378, 0.0
        %v4531 = vmax.f32 %v4380, 0.0
        %v4532 = vmax.f32 %v4382, 0.0
        %v4533 = vmax.f32 %v4384, 0.0
        %v4534 = vmax.f32 %v4388, 0.0
        %v4535 = vmax.f32 %v4390, 0.0
        %v4536 = vmax.f32 %v4392, 0.0
        %v4537 = vmax.f32 %v4394, 0.0
        %v4538 = vmax.f32 %v4398, 0.0
        %v4539 = vmax.f32 %v4400, 0.0
        %v4540 = vmax.f32 %v4402, 0.0
        %v4541 = vmax.f32 %v4404, 0.0
        %v4542 = vmax.f32 %v4408, 0.0
        %v4543 = vmax.f32 %v4410, 0.0
        %v4544 = vmax.f32 %v4412, 0.0
        %v4545 = vmax.f32 %v4414, 0.0
        %v4546 = vmax.f32 %v4418, 0.0
        %v4547 = vmax.f32 %v4420, 0.0
        %v4548 = vmax.f32 %v4422, 0.0
        %v4549 = vmax.f32 %v4424, 0.0
        %v4550 = vmax.f32 %v4428, 0.0
        %v4551 = vmax.f32 %v4430, 0.0
        %v4552 = vmax.f32 %v4432, 0.0
        %v4553 = vmax.f32 %v4434, 0.0
        %v4554 = vmax.f32 %v4438, 0.0
        %v4555 = vmax.f32 %v4440, 0.0
        %v4556 = vmax.f32 %v4442, 0.0
        %v4557 = vmax.f32 %v4444, 0.0
        %v4558 = vmax.f32 %v4448, 0.0
        %v4559 = vmax.f32 %v4450, 0.0
        %v4560 = vmax.f32 %v4452, 0.0
        %v4561 = vmax.f32 %v4454, 0.0
        %v4562 = vmax.f32 %v4458, 0.0
        %v4563 = vmax.f32 %v4460, 0.0
        %v4564 = vmax.f32 %v4462, 0.0
        %v4565 = vmax.f32 %v4464, 0.0
        %v4566 = vmax.f32 %v4468, 0.0
        %v4567 = vmax.f32 %v4470, 0.0
        %v4568 = vmax.f32 %v4472, 0.0
        %v4569 = vmax.f32 %v4474, 0.0
        %v4570 = vmax.f32 %v4478, 0.0
        %v4571 = vmax.f32 %v4480, 0.0
        %v4572 = vmax.f32 %v4482, 0.0
        %v4573 = vmax.f32 %v4484, 0.0
        %v4574 = vmax.f32 %v4488, 0.0
        %v4575 = vmax.f32 %v4490, 0.0
        %v4576 = vmax.f32 %v4492, 0.0
        %v4577 = vmax.f32 %v4494, 0.0
        %v4578 = vmax.f32 %v4498, 0.0
        %v4579 = vmax.f32 %v4500, 0.0
        %v4580 = vmax.f32 %v4502, 0.0
        %v4581 = vmax.f32 %v4504, 0.0
        %v4582 = vmax.f32 %v4508, 0.0
        %v4583 = vmax.f32 %v4510, 0.0
        %v4584 = vmax.f32 %v4512, 0.0
        %v4585 = vmax.f32 %v4514, 0.0
        %v4586 = vmax.f32 %v4518, 0.0
        %v4587 = vmax.f32 %v4520, 0.0
        %v4588 = vmax.f32 %v4522, 0.0
        %v4589 = vmax.f32 %v4524, 0.0
        %4590 = vst [vmem:[%s460] sm:$0xff] %v4526
        %4591 = vst [vmem:[%s460 + $0x8] sm:$0xff] %v4528
        %4592 = vst [vmem:[%s460 + $0x10] sm:$0xff] %v4530
        %4593 = vst [vmem:[%s460 + $0x18] sm:$0xff] %v4532
        %4594 = vst [vmem:[%s460 + $0x20] sm:$0xff] %v4534
        %4595 = vst [vmem:[%s460 + $0x28] sm:$0xff] %v4536
        %4596 = vst [vmem:[%s460 + $0x30] sm:$0xff] %v4538
        %4597 = vst [vmem:[%s460 + $0x38] sm:$0xff] %v4540
        %4598 = vst [vmem:[%s460 + $0x40] sm:$0xff] %v4542
        %4599 = vst [vmem:[%s460 + $0x48] sm:$0xff] %v4544
        %4600 = vst [vmem:[%s460 + $0x50] sm:$0xff] %v4546
        %4601 = vst [vmem:[%s460 + $0x58] sm:$0xff] %v4548
        %4602 = vst [vmem:[%s460 + $0x60] sm:$0xff] %v4550
        %4603 = vst [vmem:[%s460 + $0x68] sm:$0xff] %v4552
        %4604 = vst [vmem:[%s460 + $0x70] sm:$0xff] %v4554
        %4605 = vst [vmem:[%s460 + $0x78] sm:$0xff] %v4556
        %4606 = vst [vmem:[%s460 + $0x80] sm:$0xff] %v4558
        %4607 = vst [vmem:[%s460 + $0x88] sm:$0xff] %v4560
        %4608 = vst [vmem:[%s460 + $0x90] sm:$0xff] %v4562
        %4609 = vst [vmem:[%s460 + $0x98] sm:$0xff] %v4564
        %4610 = vst [vmem:[%s460 + $0xa0] sm:$0xff] %v4566
        %4611 = vst [vmem:[%s460 + $0xa8] sm:$0xff] %v4568
        %4612 = vst [vmem:[%s460 + $0xb0] sm:$0xff] %v4570
        %4613 = vst [vmem:[%s460 + $0xb8] sm:$0xff] %v4572
        %4614 = vst [vmem:[%s460 + $0xc0] sm:$0xff] %v4574
        %4615 = vst [vmem:[%s460 + $0xc8] sm:$0xff] %v4576
        %4616 = vst [vmem:[%s460 + $0xd0] sm:$0xff] %v4578
        %4617 = vst [vmem:[%s460 + $0xd8] sm:$0xff] %v4580
        %4618 = vst [vmem:[%s460 + $0xe0] sm:$0xff] %v4582
        %4619 = vst [vmem:[%s460 + $0xe8] sm:$0xff] %v4584
        %4620 = vst [vmem:[%s460 + $0xf0] sm:$0xff] %v4586
        %4621 = vst [vmem:[%s460 + $0xf8] sm:$0xff] %v4588
        %s4622 = scalar_lea.vmem [#allocation3], 24
        %4623 = vst [vmem:[%s4622 + $0x1] sm:$0xff] %v4527
        %4624 = vst [vmem:[%s4622 + $0x9] sm:$0xff] %v4529
        %4625 = vst [vmem:[%s4622 + $0x19] sm:$0xff] %v4531
        %4626 = vst [vmem:[%s4622 + $0x21] sm:$0xff] %v4533
        %4627 = vst [vmem:[%s4622 + $0x31] sm:$0xff] %v4535
        %4628 = vst [vmem:[%s4622 + $0x39] sm:$0xff] %v4537
        %4629 = vst [vmem:[%s4622 + $0x49] sm:$0xff] %v4539
        %4630 = vst [vmem:[%s4622 + $0x51] sm:$0xff] %v4541
        %4631 = vst [vmem:[%s4622 + $0x61] sm:$0xff] %v4543
        %4632 = vst [vmem:[%s4622 + $0x69] sm:$0xff] %v4545
        %4633 = vst [vmem:[%s4622 + $0x79] sm:$0xff] %v4547
        %4634 = vst [vmem:[%s4622 + $0x81] sm:$0xff] %v4549
        %4635 = vst [vmem:[%s4622 + $0x91] sm:$0xff] %v4551
        %4636 = vst [vmem:[%s4622 + $0x99] sm:$0xff] %v4553
        %4637 = vst [vmem:[%s4622 + $0xa9] sm:$0xff] %v4555
        %4638 = vst [vmem:[%s4622 + $0xb1] sm:$0xff] %v4557
        %4639 = vst [vmem:[%s4622 + $0xc1] sm:$0xff] %v4559
        %4640 = vst [vmem:[%s4622 + $0xc9] sm:$0xff] %v4561
        %4641 = vst [vmem:[%s4622 + $0xd9] sm:$0xff] %v4563
        %4642 = vst [vmem:[%s4622 + $0xe1] sm:$0xff] %v4565
        %4643 = vst [vmem:[%s4622 + $0xf1] sm:$0xff] %v4567
        %4644 = vst [vmem:[%s4622 + $0xf9] sm:$0xff] %v4569
        %4645 = vst [vmem:[%s4622 + $0x109] sm:$0xff] %v4571
        %4646 = vst [vmem:[%s4622 + $0x111] sm:$0xff] %v4573
        %4647 = vst [vmem:[%s4622 + $0x121] sm:$0xff] %v4575
        %4648 = vst [vmem:[%s4622 + $0x129] sm:$0xff] %v4577
        %4649 = vst [vmem:[%s4622 + $0x139] sm:$0xff] %v4579
        %4650 = vst [vmem:[%s4622 + $0x141] sm:$0xff] %v4581
        %4651 = vst [vmem:[%s4622 + $0x151] sm:$0xff] %v4583
        %4652 = vst [vmem:[%s4622 + $0x159] sm:$0xff] %v4585
        %4653 = vst [vmem:[%s4622 + $0x169] sm:$0xff] %v4587
        %4654 = vst [vmem:[%s4622 + $0x171] sm:$0xff] %v4589
        %v4655 = vld [vmem:[#allocation3] sm:$0xff]
        %v4656 = vld [vmem:[#allocation3 + $0x8] sm:$0xff]
        %v4657 = vld [vmem:[#allocation3 + $0x10] sm:$0x3]
        %v4658 = vld [vmem:[#allocation3 + $0x18] sm:$0xff]
        %v4659 = vld [vmem:[#allocation3 + $0x20] sm:$0xff]
        %v4660 = vld [vmem:[#allocation3 + $0x28] sm:$0x3]
        %v4661 = vld [vmem:[#allocation3 + $0x30] sm:$0xff]
        %v4662 = vld [vmem:[#allocation3 + $0x38] sm:$0xff]
        %v4663 = vld [vmem:[#allocation3 + $0x40] sm:$0x3]
        %v4664 = vld [vmem:[#allocation3 + $0x48] sm:$0xff]
        %v4665 = vld [vmem:[#allocation3 + $0x50] sm:$0xff]
        %v4666 = vld [vmem:[#allocation3 + $0x58] sm:$0x3]
        %v4667 = vld [vmem:[#allocation3 + $0x60] sm:$0xff]
        %v4668 = vld [vmem:[#allocation3 + $0x68] sm:$0xff]
        %v4669 = vld [vmem:[#allocation3 + $0x70] sm:$0x3]
        %v4670 = vld [vmem:[#allocation3 + $0x78] sm:$0xff]
        %v4671 = vld [vmem:[#allocation3 + $0x80] sm:$0xff]
        %v4672 = vld [vmem:[#allocation3 + $0x88] sm:$0x3]
        %v4673 = vld [vmem:[#allocation3 + $0x90] sm:$0xff]
        %v4674 = vld [vmem:[#allocation3 + $0x98] sm:$0xff]
        %v4675 = vld [vmem:[#allocation3 + $0xa0] sm:$0x3]
        %v4676 = vld [vmem:[#allocation3 + $0xa8] sm:$0xff]
        %v4677 = vld [vmem:[#allocation3 + $0xb0] sm:$0xff]
        %v4678 = vld [vmem:[#allocation3 + $0xb8] sm:$0x3]
        %v4679 = vld [vmem:[#allocation3 + $0xc0] sm:$0xff]
        %v4680 = vld [vmem:[#allocation3 + $0xc8] sm:$0xff]
        %v4681 = vld [vmem:[#allocation3 + $0xd0] sm:$0x3]
        %v4682 = vld [vmem:[#allocation3 + $0xd8] sm:$0xff]
        %v4683 = vld [vmem:[#allocation3 + $0xe0] sm:$0xff]
        %v4684 = vld [vmem:[#allocation3 + $0xe8] sm:$0x3]
        %v4685 = vld [vmem:[#allocation3 + $0xf0] sm:$0xff]
        %v4686 = vld [vmem:[#allocation3 + $0xf8] sm:$0xff]
        %v4687 = vld [vmem:[#allocation3 + $0x100] sm:$0x3]
        %v4688 = vld [vmem:[#allocation3 + $0x108] sm:$0xff]
        %v4689 = vld [vmem:[#allocation3 + $0x110] sm:$0xff]
        %v4690 = vld [vmem:[#allocation3 + $0x118] sm:$0x3]
        %v4691 = vld [vmem:[#allocation3 + $0x120] sm:$0xff]
        %v4692 = vld [vmem:[#allocation3 + $0x128] sm:$0xff]
        %v4693 = vld [vmem:[#allocation3 + $0x130] sm:$0x3]
        %v4694 = vld [vmem:[#allocation3 + $0x138] sm:$0xff]
        %v4695 = vld [vmem:[#allocation3 + $0x140] sm:$0xff]
        %v4696 = vld [vmem:[#allocation3 + $0x148] sm:$0x3]
        %v4697 = vld [vmem:[#allocation3 + $0x150] sm:$0xff]
        %v4698 = vld [vmem:[#allocation3 + $0x158] sm:$0xff]
        %v4699 = vld [vmem:[#allocation3 + $0x160] sm:$0x3]
        %v4700 = vld [vmem:[#allocation3 + $0x168] sm:$0xff]
        %v4701 = vld [vmem:[#allocation3 + $0x170] sm:$0xff]
        %v4702 = vld [vmem:[#allocation3 + $0x178] sm:$0x3]
        %v4703 = vld [vmem:[#allocation3 + $0x180] sm:$0xff]
        %v4704 = vld [vmem:[#allocation3 + $0x188] sm:$0xff]
        %v4705 = vld [vmem:[#allocation3 + $0x190] sm:$0x3]
        %v4706 = vld [vmem:[#allocation3 + $0x198] sm:$0xff]
        %v4707 = vld [vmem:[#allocation3 + $0x1a0] sm:$0xff]
        %v4708 = vld [vmem:[#allocation3 + $0x1a8] sm:$0x3]
        %v4757 = vrot.slane %v4655, 1
        %v4758 = vrot.slane %v4656, 1
        %v4759 = vsel %vm827, %v4757, %v4758
        %v4760 = vrot.slane %v4657, 1
        %v4761 = vsel %vm827, %v4758, %v4760
        %v4762 = vrot.slane %v4658, 1
        %v4763 = vrot.slane %v4659, 1
        %v4764 = vsel %vm827, %v4762, %v4763
        %v4765 = vrot.slane %v4660, 1
        %v4766 = vsel %vm827, %v4763, %v4765
        %v4767 = vrot.slane %v4661, 1
        %v4768 = vrot.slane %v4662, 1
        %v4769 = vsel %vm827, %v4767, %v4768
        %v4770 = vrot.slane %v4663, 1
        %v4771 = vsel %vm827, %v4768, %v4770
        %v4772 = vrot.slane %v4664, 1
        %v4773 = vrot.slane %v4665, 1
        %v4774 = vsel %vm827, %v4772, %v4773
        %v4775 = vrot.slane %v4666, 1
        %v4776 = vsel %vm827, %v4773, %v4775
        %v4777 = vrot.slane %v4667, 1
        %v4778 = vrot.slane %v4668, 1
        %v4779 = vsel %vm827, %v4777, %v4778
        %v4780 = vrot.slane %v4669, 1
        %v4781 = vsel %vm827, %v4778, %v4780
        %v4782 = vrot.slane %v4670, 1
        %v4783 = vrot.slane %v4671, 1
        %v4784 = vsel %vm827, %v4782, %v4783
        %v4785 = vrot.slane %v4672, 1
        %v4786 = vsel %vm827, %v4783, %v4785
        %v4787 = vrot.slane %v4673, 1
        %v4788 = vrot.slane %v4674, 1
        %v4789 = vsel %vm827, %v4787, %v4788
        %v4790 = vrot.slane %v4675, 1
        %v4791 = vsel %vm827, %v4788, %v4790
        %v4792 = vrot.slane %v4676, 1
        %v4793 = vrot.slane %v4677, 1
        %v4794 = vsel %vm827, %v4792, %v4793
        %v4795 = vrot.slane %v4678, 1
        %v4796 = vsel %vm827, %v4793, %v4795
        %v4797 = vrot.slane %v4679, 1
        %v4798 = vrot.slane %v4680, 1
        %v4799 = vsel %vm827, %v4797, %v4798
        %v4800 = vrot.slane %v4681, 1
        %v4801 = vsel %vm827, %v4798, %v4800
        %v4802 = vrot.slane %v4682, 1
        %v4803 = vrot.slane %v4683, 1
        %v4804 = vsel %vm827, %v4802, %v4803
        %v4805 = vrot.slane %v4684, 1
        %v4806 = vsel %vm827, %v4803, %v4805
        %v4807 = vrot.slane %v4685, 1
        %v4808 = vrot.slane %v4686, 1
        %v4809 = vsel %vm827, %v4807, %v4808
        %v4810 = vrot.slane %v4687, 1
        %v4811 = vsel %vm827, %v4808, %v4810
        %v4812 = vrot.slane %v4688, 1
        %v4813 = vrot.slane %v4689, 1
        %v4814 = vsel %vm827, %v4812, %v4813
        %v4815 = vrot.slane %v4690, 1
        %v4816 = vsel %vm827, %v4813, %v4815
        %v4817 = vrot.slane %v4691, 1
        %v4818 = vrot.slane %v4692, 1
        %v4819 = vsel %vm827, %v4817, %v4818
        %v4820 = vrot.slane %v4693, 1
        %v4821 = vsel %vm827, %v4818, %v4820
        %v4822 = vrot.slane %v4694, 1
        %v4823 = vrot.slane %v4695, 1
        %v4824 = vsel %vm827, %v4822, %v4823
        %v4825 = vrot.slane %v4696, 1
        %v4826 = vsel %vm827, %v4823, %v4825
        %v4827 = vrot.slane %v4697, 1
        %v4828 = vrot.slane %v4698, 1
        %v4829 = vsel %vm827, %v4827, %v4828
        %v4830 = vrot.slane %v4699, 1
        %v4831 = vsel %vm827, %v4828, %v4830
        %v4832 = vrot.slane %v4700, 1
        %v4833 = vrot.slane %v4701, 1
        %v4834 = vsel %vm827, %v4832, %v4833
        %v4835 = vrot.slane %v4702, 1
        %v4836 = vsel %vm827, %v4833, %v4835
        %v4869 = vrot.slane %v4655, 2
        %v4870 = vrot.slane %v4656, 2
        %v4871 = vsel %vm972, %v4869, %v4870
        %v4872 = vrot.slane %v4657, 2
        %v4873 = vsel %vm972, %v4870, %v4872
        %v4874 = vrot.slane %v4658, 2
        %v4875 = vrot.slane %v4659, 2
        %v4876 = vsel %vm972, %v4874, %v4875
        %v4877 = vrot.slane %v4660, 2
        %v4878 = vsel %vm972, %v4875, %v4877
        %v4879 = vrot.slane %v4661, 2
        %v4880 = vrot.slane %v4662, 2
        %v4881 = vsel %vm972, %v4879, %v4880
        %v4882 = vrot.slane %v4663, 2
        %v4883 = vsel %vm972, %v4880, %v4882
        %v4884 = vrot.slane %v4664, 2
        %v4885 = vrot.slane %v4665, 2
        %v4886 = vsel %vm972, %v4884, %v4885
        %v4887 = vrot.slane %v4666, 2
        %v4888 = vsel %vm972, %v4885, %v4887
        %v4889 = vrot.slane %v4667, 2
        %v4890 = vrot.slane %v4668, 2
        %v4891 = vsel %vm972, %v4889, %v4890
        %v4892 = vrot.slane %v4669, 2
        %v4893 = vsel %vm972, %v4890, %v4892
        %v4894 = vrot.slane %v4670, 2
        %v4895 = vrot.slane %v4671, 2
        %v4896 = vsel %vm972, %v4894, %v4895
        %v4897 = vrot.slane %v4672, 2
        %v4898 = vsel %vm972, %v4895, %v4897
        %v4899 = vrot.slane %v4673, 2
        %v4900 = vrot.slane %v4674, 2
        %v4901 = vsel %vm972, %v4899, %v4900
        %v4902 = vrot.slane %v4675, 2
        %v4903 = vsel %vm972, %v4900, %v4902
        %v4904 = vrot.slane %v4676, 2
        %v4905 = vrot.slane %v4677, 2
        %v4906 = vsel %vm972, %v4904, %v4905
        %v4907 = vrot.slane %v4678, 2
        %v4908 = vsel %vm972, %v4905, %v4907
        %v4909 = vrot.slane %v4679, 2
        %v4910 = vrot.slane %v4680, 2
        %v4911 = vsel %vm972, %v4909, %v4910
        %v4912 = vrot.slane %v4681, 2
        %v4913 = vsel %vm972, %v4910, %v4912
        %v4914 = vrot.slane %v4682, 2
        %v4915 = vrot.slane %v4683, 2
        %v4916 = vsel %vm972, %v4914, %v4915
        %v4917 = vrot.slane %v4684, 2
        %v4918 = vsel %vm972, %v4915, %v4917
        %v4919 = vrot.slane %v4685, 2
        %v4920 = vrot.slane %v4686, 2
        %v4921 = vsel %vm972, %v4919, %v4920
        %v4922 = vrot.slane %v4687, 2
        %v4923 = vsel %vm972, %v4920, %v4922
        %v4924 = vrot.slane %v4688, 2
        %v4925 = vrot.slane %v4689, 2
        %v4926 = vsel %vm972, %v4924, %v4925
        %v4927 = vrot.slane %v4690, 2
        %v4928 = vsel %vm972, %v4925, %v4927
        %v4929 = vrot.slane %v4691, 2
        %v4930 = vrot.slane %v4692, 2
        %v4931 = vsel %vm972, %v4929, %v4930
        %v4932 = vrot.slane %v4693, 2
        %v4933 = vsel %vm972, %v4930, %v4932
        %v4934 = vrot.slane %v4694, 2
        %v4935 = vrot.slane %v4695, 2
        %v4936 = vsel %vm972, %v4934, %v4935
        %v4937 = vrot.slane %v4696, 2
        %v4938 = vsel %vm972, %v4935, %v4937
        %v4939 = vrot.slane %v4697, 2
        %v4940 = vrot.slane %v4698, 2
        %v4941 = vsel %vm972, %v4939, %v4940
        %v4942 = vrot.slane %v4699, 2
        %v4943 = vsel %vm972, %v4940, %v4942
        %v4944 = vrot.slane %v4700, 2
        %v4945 = vrot.slane %v4701, 2
        %v4946 = vsel %vm972, %v4944, %v4945
        %v4947 = vrot.slane %v4702, 2
        %v4948 = vsel %vm972, %v4945, %v4947
        %v4984 = vrot.slane %v4703, 1
        %v4985 = vrot.slane %v4704, 1
        %v4986 = vsel %vm827, %v4984, %v4985
        %v4987 = vrot.slane %v4705, 1
        %v4988 = vsel %vm827, %v4985, %v4987
        %v4991 = vrot.slane %v4703, 2
        %v4992 = vrot.slane %v4704, 2
        %v4993 = vsel %vm972, %v4991, %v4992
        %v4994 = vrot.slane %v4705, 2
        %v4995 = vsel %vm972, %v4992, %v4994
        %v5001 = vrot.slane %v4706, 1
        %v5002 = vrot.slane %v4707, 1
        %v5003 = vsel %vm827, %v5001, %v5002
        %v5004 = vrot.slane %v4708, 1
        %v5005 = vsel %vm827, %v5002, %v5004
        %v5008 = vrot.slane %v4706, 2
        %v5009 = vrot.slane %v4707, 2
        %v5010 = vsel %vm972, %v5008, %v5009
        %v5011 = vrot.slane %v4708, 2
        %v5012 = vsel %vm972, %v5009, %v5011
        %v5015 = vpack.c.bf16 %v4656, %v4655
        %v5016 = vpack.c.bf16 %v4761, %v4759
        %v5017 = vpack.c.bf16 %v4873, %v4871
        %v5018 = vpack.c.bf16 %v4659, %v4658
        %v5019 = vpack.c.bf16 %v4766, %v4764
        %v5020 = vpack.c.bf16 %v4878, %v4876
        %v5021 = vpack.c.bf16 %v4662, %v4661
        %v5022 = vpack.c.bf16 %v4771, %v4769
        %v5023 = vpack.c.bf16 %v4883, %v4881
        %v5024 = vpack.c.bf16 %v4665, %v4664
        %v5025 = vpack.c.bf16 %v4776, %v4774
        %v5026 = vpack.c.bf16 %v4888, %v4886
        %v5027 = vpack.c.bf16 %v4668, %v4667
        %v5028 = vpack.c.bf16 %v4781, %v4779
        %v5029 = vpack.c.bf16 %v4893, %v4891
        %v5030 = vpack.c.bf16 %v4671, %v4670
        %v5031 = vpack.c.bf16 %v4786, %v4784
        %v5032 = vpack.c.bf16 %v4898, %v4896
        %v5033 = vpack.c.bf16 %v4674, %v4673
        %v5034 = vpack.c.bf16 %v4791, %v4789
        %v5035 = vpack.c.bf16 %v4903, %v4901
        %v5036 = vpack.c.bf16 %v4677, %v4676
        %v5037 = vpack.c.bf16 %v4796, %v4794
        %v5038 = vpack.c.bf16 %v4908, %v4906
        %v5039 = vpack.c.bf16 %v4680, %v4679
        %v5040 = vpack.c.bf16 %v4801, %v4799
        %v5041 = vpack.c.bf16 %v4913, %v4911
        %v5042 = vpack.c.bf16 %v4683, %v4682
        %v5043 = vpack.c.bf16 %v4806, %v4804
        %v5044 = vpack.c.bf16 %v4918, %v4916
        %v5045 = vpack.c.bf16 %v4686, %v4685
        %v5046 = vpack.c.bf16 %v4811, %v4809
        %v5047 = vpack.c.bf16 %v4923, %v4921
        %v5048 = vpack.c.bf16 %v4689, %v4688
        %v5049 = vpack.c.bf16 %v4816, %v4814
        %v5050 = vpack.c.bf16 %v4928, %v4926
        %v5051 = vpack.c.bf16 %v4692, %v4691
        %v5052 = vpack.c.bf16 %v4821, %v4819
        %v5053 = vpack.c.bf16 %v4933, %v4931
        %v5054 = vpack.c.bf16 %v4695, %v4694
        %v5055 = vpack.c.bf16 %v4826, %v4824
        %v5056 = vpack.c.bf16 %v4938, %v4936
        %v5057 = vpack.c.bf16 %v4698, %v4697
        %v5058 = vpack.c.bf16 %v4831, %v4829
        %v5059 = vpack.c.bf16 %v4943, %v4941
        %v5060 = vpack.c.bf16 %v4701, %v4700
        %v5061 = vpack.c.bf16 %v4836, %v4834
        %v5062 = vpack.c.bf16 %v4948, %v4946
        %v5063 = vpack.c.bf16 %v4704, %v4703
        %v5064 = vpack.c.bf16 %v4988, %v4986
        %v5065 = vpack.c.bf16 %v4995, %v4993
        %v5066 = vpack.c.bf16 %v4707, %v4706
        %v5067 = vpack.c.bf16 %v5005, %v5003
        %v5068 = vpack.c.bf16 %v5012, %v5010
        %v5069 = vld [vmem:[#allocation4] sm:$0xf]
        %v5070 = vld [vmem:[#allocation4 + $0x4] sm:$0xf]
        %v5071 = vld [vmem:[#allocation4 + $0x8] sm:$0xf]
        %v5072 = vld [vmem:[#allocation4 + $0xc] sm:$0xf]
        %v5073 = vld [vmem:[#allocation4 + $0x10] sm:$0xf]
        %v5074 = vld [vmem:[#allocation4 + $0x14] sm:$0xf]
        %v5075 = vld [vmem:[#allocation4 + $0x18] sm:$0xf]
        %v5076 = vld [vmem:[#allocation4 + $0x1c] sm:$0xf]
        %v5077 = vld [vmem:[#allocation4 + $0x20] sm:$0xf]
        %v5078 = vld [vmem:[#allocation4 + $0x24] sm:$0xf]
        %v5079 = vld [vmem:[#allocation4 + $0x28] sm:$0xf]
        %v5080 = vld [vmem:[#allocation4 + $0x2c] sm:$0xf]
        %v5081 = vld [vmem:[#allocation4 + $0x30] sm:$0xf]
        %v5082 = vld [vmem:[#allocation4 + $0x34] sm:$0xf]
        %v5083 = vld [vmem:[#allocation4 + $0x38] sm:$0xf]
        %v5084 = vld [vmem:[#allocation4 + $0x3c] sm:$0xf]
        %v5085 = vld [vmem:[#allocation4 + $0x40] sm:$0xf]
        %v5086 = vld [vmem:[#allocation4 + $0x44] sm:$0xf]
        %v5087 = vld [vmem:[#allocation4 + $0x48] sm:$0xf]
        %v5088 = vld [vmem:[#allocation4 + $0x4c] sm:$0xf]
        %v5089 = vld [vmem:[#allocation4 + $0x50] sm:$0xf]
        %v5090 = vld [vmem:[#allocation4 + $0x54] sm:$0xf]
        %v5091 = vld [vmem:[#allocation4 + $0x58] sm:$0xf]
        %v5092 = vld [vmem:[#allocation4 + $0x5c] sm:$0xf]
        %v5093 = vld [vmem:[#allocation4 + $0x60] sm:$0xf]
        %v5094 = vld [vmem:[#allocation4 + $0x64] sm:$0xf]
        %v5095 = vld [vmem:[#allocation4 + $0x68] sm:$0xf]
        %v5096 = vld [vmem:[#allocation4 + $0x6c] sm:$0xf]
        %v5097 = vld [vmem:[#allocation4 + $0x70] sm:$0xf]
        %v5098 = vld [vmem:[#allocation4 + $0x74] sm:$0xf]
        %v5099 = vld [vmem:[#allocation4 + $0x78] sm:$0xf]
        %v5100 = vld [vmem:[#allocation4 + $0x7c] sm:$0xf]
        %v5101 = vld [vmem:[#allocation4 + $0x80] sm:$0xf]
        %v5102 = vld [vmem:[#allocation4 + $0x84] sm:$0xf]
        %v5103 = vld [vmem:[#allocation4 + $0x88] sm:$0xf]
        %v5104 = vld [vmem:[#allocation4 + $0x8c] sm:$0xf]
        %v5105 = vld [vmem:[#allocation4 + $0x90] sm:$0xf]
        %v5106 = vld [vmem:[#allocation4 + $0x94] sm:$0xf]
        %v5107 = vld [vmem:[#allocation4 + $0x98] sm:$0xf]
        %v5108 = vld [vmem:[#allocation4 + $0x9c] sm:$0xf]
        %v5109 = vld [vmem:[#allocation4 + $0xa0] sm:$0xf]
        %v5110 = vld [vmem:[#allocation4 + $0xa4] sm:$0xf]
        %v5111 = vld [vmem:[#allocation4 + $0xa8] sm:$0xf]
        %v5112 = vld [vmem:[#allocation4 + $0xac] sm:$0xf]
        %v5113 = vld [vmem:[#allocation4 + $0xb0] sm:$0xf]
        %v5114 = vld [vmem:[#allocation4 + $0xb4] sm:$0xf]
        %v5115 = vld [vmem:[#allocation4 + $0xb8] sm:$0xf]
        %v5116 = vld [vmem:[#allocation4 + $0xbc] sm:$0xf]
        %v5117 = vld [vmem:[#allocation4 + $0xc0] sm:$0xf]
        %v5118 = vld [vmem:[#allocation4 + $0xc4] sm:$0xf]
        %v5119 = vld [vmem:[#allocation4 + $0xc8] sm:$0xf]
        %v5120 = vld [vmem:[#allocation4 + $0xcc] sm:$0xf]
        %v5121 = vld [vmem:[#allocation4 + $0xd0] sm:$0xf]
        %v5122 = vld [vmem:[#allocation4 + $0xd4] sm:$0xf]
        %v5123 = vld [vmem:[#allocation4 + $0xd8] sm:$0xf]
        %v5124 = vld [vmem:[#allocation4 + $0xdc] sm:$0xf]
        %v5125 = vld [vmem:[#allocation4 + $0xe0] sm:$0xf]
        %v5126 = vld [vmem:[#allocation4 + $0xe4] sm:$0xf]
        %v5127 = vld [vmem:[#allocation4 + $0xe8] sm:$0xf]
        %v5128 = vld [vmem:[#allocation4 + $0xec] sm:$0xf]
        %v5129 = vld [vmem:[#allocation4 + $0xf0] sm:$0xf]
        %v5130 = vld [vmem:[#allocation4 + $0xf4] sm:$0xf]
        %v5131 = vld [vmem:[#allocation4 + $0xf8] sm:$0xf]
        %v5132 = vld [vmem:[#allocation4 + $0xfc] sm:$0xf]
        %v5133 = vld [vmem:[#allocation4 + $0x100] sm:$0xf]
        %v5134 = vld [vmem:[#allocation4 + $0x104] sm:$0xf]
        %v5135 = vld [vmem:[#allocation4 + $0x108] sm:$0xf]
        %v5136 = vld [vmem:[#allocation4 + $0x10c] sm:$0xf]
        %v5137 = vld [vmem:[#allocation4 + $0x110] sm:$0xf]
        %v5138 = vld [vmem:[#allocation4 + $0x114] sm:$0xf]
        %v5139 = vld [vmem:[#allocation4 + $0x118] sm:$0xf]
        %v5140 = vld [vmem:[#allocation4 + $0x11c] sm:$0xf]
        %v5141 = vld [vmem:[#allocation4 + $0x120] sm:$0xf]
        %v5142 = vld [vmem:[#allocation4 + $0x124] sm:$0xf]
        %v5143 = vld [vmem:[#allocation4 + $0x128] sm:$0xf]
        %v5144 = vld [vmem:[#allocation4 + $0x12c] sm:$0xf]
        %v5145 = vld [vmem:[#allocation4 + $0x130] sm:$0xf]
        %v5146 = vld [vmem:[#allocation4 + $0x134] sm:$0xf]
        %v5147 = vld [vmem:[#allocation4 + $0x138] sm:$0xf]
        %v5148 = vld [vmem:[#allocation4 + $0x13c] sm:$0xf]
        %v5149 = vld [vmem:[#allocation4 + $0x140] sm:$0xf]
        %v5150 = vld [vmem:[#allocation4 + $0x144] sm:$0xf]
        %v5151 = vld [vmem:[#allocation4 + $0x148] sm:$0xf]
        %v5152 = vld [vmem:[#allocation4 + $0x14c] sm:$0xf]
        %v5153 = vld [vmem:[#allocation4 + $0x150] sm:$0xf]
        %v5154 = vld [vmem:[#allocation4 + $0x154] sm:$0xf]
        %v5155 = vld [vmem:[#allocation4 + $0x158] sm:$0xf]
        %v5156 = vld [vmem:[#allocation4 + $0x15c] sm:$0xf]
        %v5157 = vld [vmem:[#allocation4 + $0x160] sm:$0xf]
        %v5158 = vld [vmem:[#allocation4 + $0x164] sm:$0xf]
        %v5159 = vld [vmem:[#allocation4 + $0x168] sm:$0xf]
        %v5160 = vld [vmem:[#allocation4 + $0x16c] sm:$0xf]
        %v5161 = vld [vmem:[#allocation4 + $0x170] sm:$0xf]
        %v5162 = vld [vmem:[#allocation4 + $0x174] sm:$0xf]
        %v5163 = vld [vmem:[#allocation4 + $0x178] sm:$0xf]
        %v5164 = vld [vmem:[#allocation4 + $0x17c] sm:$0xf]
        %v5165 = vld [vmem:[#allocation4 + $0x180] sm:$0xf]
        %v5166 = vld [vmem:[#allocation4 + $0x184] sm:$0xf]
        %v5167 = vld [vmem:[#allocation4 + $0x188] sm:$0xf]
        %v5168 = vld [vmem:[#allocation4 + $0x18c] sm:$0xf]
        %v5169 = vld [vmem:[#allocation4 + $0x190] sm:$0xf]
        %v5170 = vld [vmem:[#allocation4 + $0x194] sm:$0xf]
        %v5171 = vld [vmem:[#allocation4 + $0x198] sm:$0xf]
        %v5172 = vld [vmem:[#allocation4 + $0x19c] sm:$0xf]
        %v5173 = vld [vmem:[#allocation4 + $0x1a0] sm:$0xf]
        %v5174 = vld [vmem:[#allocation4 + $0x1a4] sm:$0xf]
        %v5175 = vld [vmem:[#allocation4 + $0x1a8] sm:$0xf]
        %v5176 = vld [vmem:[#allocation4 + $0x1ac] sm:$0xf]
        %v5177 = vld [vmem:[#allocation4 + $0x1b0] sm:$0xf]
        %v5178 = vld [vmem:[#allocation4 + $0x1b4] sm:$0xf]
        %v5179 = vld [vmem:[#allocation4 + $0x1b8] sm:$0xf]
        %v5180 = vld [vmem:[#allocation4 + $0x1bc] sm:$0xf]
        %v5181 = vld [vmem:[#allocation4 + $0x1c0] sm:$0xf]
        %v5182 = vld [vmem:[#allocation4 + $0x1c4] sm:$0xf]
        %v5183 = vld [vmem:[#allocation4 + $0x1c8] sm:$0xf]
        %v5184 = vld [vmem:[#allocation4 + $0x1cc] sm:$0xf]
        %v5185 = vld [vmem:[#allocation4 + $0x1d0] sm:$0xf]
        %v5186 = vld [vmem:[#allocation4 + $0x1d4] sm:$0xf]
        %v5187 = vld [vmem:[#allocation4 + $0x1d8] sm:$0xf]
        %v5188 = vld [vmem:[#allocation4 + $0x1dc] sm:$0xf]
        %v5189 = vld [vmem:[#allocation4 + $0x1e0] sm:$0xf]
        %v5190 = vld [vmem:[#allocation4 + $0x1e4] sm:$0xf]
        %v5191 = vld [vmem:[#allocation4 + $0x1e8] sm:$0xf]
        %v5192 = vld [vmem:[#allocation4 + $0x1ec] sm:$0xf]
        %v5193 = vld [vmem:[#allocation4 + $0x1f0] sm:$0xf]
        %v5194 = vld [vmem:[#allocation4 + $0x1f4] sm:$0xf]
        %v5195 = vld [vmem:[#allocation4 + $0x1f8] sm:$0xf]
        %v5196 = vld [vmem:[#allocation4 + $0x1fc] sm:$0xf]
        %v5197 = vld [vmem:[#allocation4 + $0x200] sm:$0xf]
        %v5198 = vld [vmem:[#allocation4 + $0x204] sm:$0xf]
        %v5199 = vld [vmem:[#allocation4 + $0x208] sm:$0xf]
        %v5200 = vld [vmem:[#allocation4 + $0x20c] sm:$0xf]
        %v5201 = vld [vmem:[#allocation4 + $0x210] sm:$0xf]
        %v5202 = vld [vmem:[#allocation4 + $0x214] sm:$0xf]
        %v5203 = vld [vmem:[#allocation4 + $0x218] sm:$0xf]
        %v5204 = vld [vmem:[#allocation4 + $0x21c] sm:$0xf]
        %v5205 = vld [vmem:[#allocation4 + $0x220] sm:$0xf]
        %v5206 = vld [vmem:[#allocation4 + $0x224] sm:$0xf]
        %v5207 = vld [vmem:[#allocation4 + $0x228] sm:$0xf]
        %v5208 = vld [vmem:[#allocation4 + $0x22c] sm:$0xf]
        %v5209 = vld [vmem:[#allocation4 + $0x230] sm:$0xf]
        %v5210 = vld [vmem:[#allocation4 + $0x234] sm:$0xf]
        %v5211 = vld [vmem:[#allocation4 + $0x238] sm:$0xf]
        %v5212 = vld [vmem:[#allocation4 + $0x23c] sm:$0xf]
        %v5213 = vld [vmem:[%s8] sm:$0x1]
        %v5215 = vlaneseq
        %v5216 = vshrl.u32 %v5215, 7
        %v5217 = vsub.s32 0, %v5216
        %v5218 = vrot.slane %v5213, %v5217
        %v5364 = vunpack.c.l.b16 %v5069
        %v5365 = vunpack.c.l.b16 %v5070
        %v5366 = vunpack.c.l.b16 %v5071
        %v5367 = vunpack.c.l.b16 %v5072
        %v5368 = vunpack.c.l.b16 %v5073
        %v5369 = vunpack.c.l.b16 %v5074
        %v5370 = vunpack.c.l.b16 %v5075
        %v5371 = vunpack.c.l.b16 %v5076
        %v5372 = vunpack.c.l.b16 %v5077
        %v5373 = vunpack.c.l.b16 %v5078
        %v5374 = vunpack.c.l.b16 %v5079
        %v5375 = vunpack.c.l.b16 %v5080
        %v5376 = vunpack.c.l.b16 %v5081
        %v5377 = vunpack.c.l.b16 %v5082
        %v5378 = vunpack.c.l.b16 %v5083
        %v5379 = vunpack.c.l.b16 %v5084
        %v5380 = vunpack.c.l.b16 %v5085
        %v5381 = vunpack.c.l.b16 %v5086
        %v5382 = vunpack.c.l.b16 %v5087
        %v5383 = vunpack.c.l.b16 %v5088
        %v5384 = vunpack.c.l.b16 %v5089
        %v5385 = vunpack.c.l.b16 %v5090
        %v5386 = vunpack.c.l.b16 %v5091
        %v5387 = vunpack.c.l.b16 %v5092
        %v5388 = vunpack.c.l.b16 %v5093
        %v5389 = vunpack.c.l.b16 %v5094
        %v5390 = vunpack.c.l.b16 %v5095
        %v5391 = vunpack.c.l.b16 %v5096
        %v5392 = vunpack.c.l.b16 %v5097
        %v5393 = vunpack.c.l.b16 %v5098
        %v5394 = vunpack.c.l.b16 %v5099
        %v5395 = vunpack.c.l.b16 %v5100
        %v5396 = vunpack.c.l.b16 %v5101
        %v5397 = vunpack.c.l.b16 %v5102
        %v5398 = vunpack.c.l.b16 %v5103
        %v5399 = vunpack.c.l.b16 %v5104
        %v5400 = vunpack.c.l.b16 %v5105
        %v5401 = vunpack.c.l.b16 %v5106
        %v5402 = vunpack.c.l.b16 %v5107
        %v5403 = vunpack.c.l.b16 %v5108
        %v5404 = vunpack.c.l.b16 %v5109
        %v5405 = vunpack.c.l.b16 %v5110
        %v5406 = vunpack.c.l.b16 %v5111
        %v5407 = vunpack.c.l.b16 %v5112
        %v5408 = vunpack.c.l.b16 %v5113
        %v5409 = vunpack.c.l.b16 %v5114
        %v5410 = vunpack.c.l.b16 %v5115
        %v5411 = vunpack.c.l.b16 %v5116
        %v5412 = vunpack.c.l.b16 %v5117
        %v5413 = vunpack.c.l.b16 %v5118
        %v5414 = vunpack.c.l.b16 %v5119
        %v5415 = vunpack.c.l.b16 %v5120
        %v5416 = vunpack.c.l.b16 %v5121
        %v5417 = vunpack.c.l.b16 %v5122
        %v5418 = vunpack.c.l.b16 %v5123
        %v5419 = vunpack.c.l.b16 %v5124
        %v5420 = vunpack.c.l.b16 %v5125
        %v5421 = vunpack.c.l.b16 %v5126
        %v5422 = vunpack.c.l.b16 %v5127
        %v5423 = vunpack.c.l.b16 %v5128
        %v5424 = vunpack.c.l.b16 %v5129
        %v5425 = vunpack.c.l.b16 %v5130
        %v5426 = vunpack.c.l.b16 %v5131
        %v5427 = vunpack.c.l.b16 %v5132
        %v5428 = vunpack.c.l.b16 %v5133
        %v5429 = vunpack.c.l.b16 %v5134
        %v5430 = vunpack.c.l.b16 %v5135
        %v5431 = vunpack.c.l.b16 %v5136
        %v5432 = vunpack.c.l.b16 %v5137
        %v5433 = vunpack.c.l.b16 %v5138
        %v5434 = vunpack.c.l.b16 %v5139
        %v5435 = vunpack.c.l.b16 %v5140
        %v5436 = vunpack.c.l.b16 %v5141
        %v5437 = vunpack.c.l.b16 %v5142
        %v5438 = vunpack.c.l.b16 %v5143
        %v5439 = vunpack.c.l.b16 %v5144
        %v5440 = vunpack.c.l.b16 %v5145
        %v5441 = vunpack.c.l.b16 %v5146
        %v5442 = vunpack.c.l.b16 %v5147
        %v5443 = vunpack.c.l.b16 %v5148
        %v5444 = vunpack.c.l.b16 %v5149
        %v5445 = vunpack.c.l.b16 %v5150
        %v5446 = vunpack.c.l.b16 %v5151
        %v5447 = vunpack.c.l.b16 %v5152
        %v5448 = vunpack.c.l.b16 %v5153
        %v5449 = vunpack.c.l.b16 %v5154
        %v5450 = vunpack.c.l.b16 %v5155
        %v5451 = vunpack.c.l.b16 %v5156
        %v5452 = vunpack.c.l.b16 %v5157
        %v5453 = vunpack.c.l.b16 %v5158
        %v5454 = vunpack.c.l.b16 %v5159
        %v5455 = vunpack.c.l.b16 %v5160
        %v5456 = vunpack.c.l.b16 %v5161
        %v5457 = vunpack.c.l.b16 %v5162
        %v5458 = vunpack.c.l.b16 %v5163
        %v5459 = vunpack.c.l.b16 %v5164
        %v5460 = vunpack.c.l.b16 %v5165
        %v5461 = vunpack.c.l.b16 %v5166
        %v5462 = vunpack.c.l.b16 %v5167
        %v5463 = vunpack.c.l.b16 %v5168
        %v5464 = vunpack.c.l.b16 %v5169
        %v5465 = vunpack.c.l.b16 %v5170
        %v5466 = vunpack.c.l.b16 %v5171
        %v5467 = vunpack.c.l.b16 %v5172
        %v5468 = vunpack.c.l.b16 %v5173
        %v5469 = vunpack.c.l.b16 %v5174
        %v5470 = vunpack.c.l.b16 %v5175
        %v5471 = vunpack.c.l.b16 %v5176
        %v5472 = vunpack.c.l.b16 %v5177
        %v5473 = vunpack.c.l.b16 %v5178
        %v5474 = vunpack.c.l.b16 %v5179
        %v5475 = vunpack.c.l.b16 %v5180
        %v5476 = vunpack.c.l.b16 %v5181
        %v5477 = vunpack.c.l.b16 %v5182
        %v5478 = vunpack.c.l.b16 %v5183
        %v5479 = vunpack.c.l.b16 %v5184
        %v5480 = vunpack.c.l.b16 %v5185
        %v5481 = vunpack.c.l.b16 %v5186
        %v5482 = vunpack.c.l.b16 %v5187
        %v5483 = vunpack.c.l.b16 %v5188
        %v5484 = vunpack.c.l.b16 %v5189
        %v5485 = vunpack.c.l.b16 %v5190
        %v5486 = vunpack.c.l.b16 %v5191
        %v5487 = vunpack.c.l.b16 %v5192
        %v5488 = vunpack.c.l.b16 %v5193
        %v5489 = vunpack.c.l.b16 %v5194
        %v5490 = vunpack.c.l.b16 %v5195
        %v5491 = vunpack.c.l.b16 %v5196
        %v5492 = vunpack.c.l.b16 %v5197
        %v5493 = vunpack.c.l.b16 %v5198
        %v5494 = vunpack.c.l.b16 %v5199
        %v5495 = vunpack.c.l.b16 %v5200
        %v5496 = vunpack.c.l.b16 %v5201
        %v5497 = vunpack.c.l.b16 %v5202
        %v5498 = vunpack.c.l.b16 %v5203
        %v5499 = vunpack.c.l.b16 %v5204
        %v5500 = vunpack.c.l.b16 %v5205
        %v5501 = vunpack.c.l.b16 %v5206
        %v5502 = vunpack.c.l.b16 %v5207
        %v5503 = vunpack.c.l.b16 %v5208
        %v5504 = vunpack.c.l.b16 %v5209
        %v5505 = vunpack.c.l.b16 %v5210
        %v5506 = vunpack.c.l.b16 %v5211
        %v5507 = vunpack.c.l.b16 %v5212
        %v5508 = vpack.c.b16 %v5365, %v5364
        %v5509 = vpack.c.b16 %v5367, %v5366
        %v5510 = vpack.c.b16 %v5369, %v5368
        %v5511 = vpack.c.b16 %v5371, %v5370
        %v5512 = vpack.c.b16 %v5373, %v5372
        %v5513 = vpack.c.b16 %v5375, %v5374
        %v5514 = vpack.c.b16 %v5377, %v5376
        %v5515 = vpack.c.b16 %v5379, %v5378
        %v5516 = vpack.c.b16 %v5381, %v5380
        %v5517 = vpack.c.b16 %v5383, %v5382
        %v5518 = vpack.c.b16 %v5385, %v5384
        %v5519 = vpack.c.b16 %v5387, %v5386
        %v5520 = vpack.c.b16 %v5389, %v5388
        %v5521 = vpack.c.b16 %v5391, %v5390
        %v5522 = vpack.c.b16 %v5393, %v5392
        %v5523 = vpack.c.b16 %v5395, %v5394
        %v5524 = vpack.c.b16 %v5397, %v5396
        %v5525 = vpack.c.b16 %v5399, %v5398
        %v5526 = vpack.c.b16 %v5401, %v5400
        %v5527 = vpack.c.b16 %v5403, %v5402
        %v5528 = vpack.c.b16 %v5405, %v5404
        %v5529 = vpack.c.b16 %v5407, %v5406
        %v5530 = vpack.c.b16 %v5409, %v5408
        %v5531 = vpack.c.b16 %v5411, %v5410
        %v5532 = vpack.c.b16 %v5413, %v5412
        %v5533 = vpack.c.b16 %v5415, %v5414
        %v5534 = vpack.c.b16 %v5417, %v5416
        %v5535 = vpack.c.b16 %v5419, %v5418
        %v5536 = vpack.c.b16 %v5421, %v5420
        %v5537 = vpack.c.b16 %v5423, %v5422
        %v5538 = vpack.c.b16 %v5425, %v5424
        %v5539 = vpack.c.b16 %v5427, %v5426
        %v5540 = vpack.c.b16 %v5429, %v5428
        %v5541 = vpack.c.b16 %v5431, %v5430
        %v5542 = vpack.c.b16 %v5433, %v5432
        %v5543 = vpack.c.b16 %v5435, %v5434
        %v5544 = vpack.c.b16 %v5437, %v5436
        %v5545 = vpack.c.b16 %v5439, %v5438
        %v5546 = vpack.c.b16 %v5441, %v5440
        %v5547 = vpack.c.b16 %v5443, %v5442
        %v5548 = vpack.c.b16 %v5445, %v5444
        %v5549 = vpack.c.b16 %v5447, %v5446
        %v5550 = vpack.c.b16 %v5449, %v5448
        %v5551 = vpack.c.b16 %v5451, %v5450
        %v5552 = vpack.c.b16 %v5453, %v5452
        %v5553 = vpack.c.b16 %v5455, %v5454
        %v5554 = vpack.c.b16 %v5457, %v5456
        %v5555 = vpack.c.b16 %v5459, %v5458
        %v5556 = vpack.c.b16 %v5461, %v5460
        %v5557 = vpack.c.b16 %v5463, %v5462
        %v5558 = vpack.c.b16 %v5465, %v5464
        %v5559 = vpack.c.b16 %v5467, %v5466
        %v5560 = vpack.c.b16 %v5469, %v5468
        %v5561 = vpack.c.b16 %v5471, %v5470
        %v5562 = vpack.c.b16 %v5473, %v5472
        %v5563 = vpack.c.b16 %v5475, %v5474
        %v5564 = vpack.c.b16 %v5477, %v5476
        %v5565 = vpack.c.b16 %v5479, %v5478
        %v5566 = vpack.c.b16 %v5481, %v5480
        %v5567 = vpack.c.b16 %v5483, %v5482
        %v5568 = vpack.c.b16 %v5485, %v5484
        %v5569 = vpack.c.b16 %v5487, %v5486
        %v5570 = vpack.c.b16 %v5489, %v5488
        %v5571 = vpack.c.b16 %v5491, %v5490
        %v5572 = vpack.c.b16 %v5493, %v5492
        %v5573 = vpack.c.b16 %v5495, %v5494
        %v5574 = vpack.c.b16 %v5497, %v5496
        %v5575 = vpack.c.b16 %v5499, %v5498
        %v5576 = vpack.c.b16 %v5501, %v5500
        %v5577 = vpack.c.b16 %v5503, %v5502
        %v5578 = vpack.c.b16 %v5505, %v5504
        %v5579 = vpack.c.b16 %v5507, %v5506
        %5652 = vmatprep.subr.bf16.mxu0 0
        %5653 = vmatpush1.bf16.msra.mxu0 %v5515
        %5654 = vmatprep.subr.bf16.mxu0 0
        %5655 = vmatpush1.bf16.msra.mxu0 %v5514
        %5656 = vmatprep.subr.bf16.mxu0 0
        %5657 = vmatpush1.bf16.msra.mxu0 %v5513
        %5658 = vmatprep.subr.bf16.mxu0 0
        %5659 = vmatpush1.bf16.msra.mxu0 %v5512
        %5660 = vmatprep.subr.bf16.mxu0 0
        %5661 = vmatpush1.bf16.msra.mxu0 %v5511
        %5662 = vmatprep.subr.bf16.mxu0 0
        %5663 = vmatpush1.bf16.msra.mxu0 %v5510
        %5664 = vmatprep.subr.bf16.mxu0 0
        %5665 = vmatpush1.bf16.msra.mxu0 %v5509
        %5666 = vmatprep.subr.bf16.mxu0 0
        %5667 = vmatpush1.bf16.msra.mxu0 %v5508
        %5668 = vmatprep.subr.bf16.mxu0 0
        %5669 = vmatpush2.bf16.msra.mxu0 %v5523
        %5670 = vmatprep.subr.bf16.mxu0 0
        %5671 = vmatpush2.bf16.msra.mxu0 %v5522
        %5672 = vmatprep.subr.bf16.mxu0 0
        %5673 = vmatpush2.bf16.msra.mxu0 %v5521
        %5674 = vmatprep.subr.bf16.mxu0 0
        %5675 = vmatpush2.bf16.msra.mxu0 %v5520
        %5676 = vmatprep.subr.bf16.mxu0 0
        %5677 = vmatpush2.bf16.msra.mxu0 %v5519
        %5678 = vmatprep.subr.bf16.mxu0 0
        %5679 = vmatpush2.bf16.msra.mxu0 %v5518
        %5680 = vmatprep.subr.bf16.mxu0 0
        %5681 = vmatpush2.bf16.msra.mxu0 %v5517
        %5682 = vmatprep.subr.bf16.mxu0 0
        %5683 = vmatpush2.bf16.msra.mxu0 %v5516
        %5684 = vmatprep.mubr.bf16.mxu0 %v5016
        %5685 = vmatmul.mubr.bf16.gmra.mxu0 %v5015
        %v5686 = vpop.f32.mrf.mxu0
        %v5687 = vadd.f32 %v5218, %v5686
        %v5688 = vpop.f32.mrf.mxu0
        %v5689 = vpop.f32.mrf.mxu0
        %v5690 = vadd.f32 %v5218, %v5689
        %v5691 = vpop.f32.mrf.mxu0
        %5692 = vmatprep.mubr.bf16.mxu0 %v5019
        %5693 = vmatmul.mubr.bf16.gmra.mxu0 %v5018
        %v5694 = vpop.f32.mrf.mxu0
        %v5695 = vadd.f32 %v5218, %v5694
        %v5696 = vpop.f32.mrf.mxu0
        %v5697 = vpop.f32.mrf.mxu0
        %v5698 = vadd.f32 %v5218, %v5697
        %v5699 = vpop.f32.mrf.mxu0
        %5700 = vmatprep.mubr.bf16.mxu0 %v5022
        %5701 = vmatmul.mubr.bf16.gmra.mxu0 %v5021
        %v5702 = vpop.f32.mrf.mxu0
        %v5703 = vadd.f32 %v5218, %v5702
        %v5704 = vpop.f32.mrf.mxu0
        %v5705 = vpop.f32.mrf.mxu0
        %v5706 = vadd.f32 %v5218, %v5705
        %v5707 = vpop.f32.mrf.mxu0
        %5708 = vmatprep.mubr.bf16.mxu0 %v5025
        %5709 = vmatmul.mubr.bf16.gmra.mxu0 %v5024
        %v5710 = vpop.f32.mrf.mxu0
        %v5711 = vadd.f32 %v5218, %v5710
        %v5712 = vpop.f32.mrf.mxu0
        %v5713 = vpop.f32.mrf.mxu0
        %v5714 = vadd.f32 %v5218, %v5713
        %v5715 = vpop.f32.mrf.mxu0
        %5716 = vmatprep.mubr.bf16.mxu0 %v5028
        %5717 = vmatmul.mubr.bf16.gmra.mxu0 %v5027
        %v5718 = vpop.f32.mrf.mxu0
        %v5719 = vadd.f32 %v5218, %v5718
        %v5720 = vpop.f32.mrf.mxu0
        %v5721 = vpop.f32.mrf.mxu0
        %v5722 = vadd.f32 %v5218, %v5721
        %v5723 = vpop.f32.mrf.mxu0
        %5724 = vmatprep.mubr.bf16.mxu0 %v5031
        %5725 = vmatmul.mubr.bf16.gmra.mxu0 %v5030
        %v5726 = vpop.f32.mrf.mxu0
        %v5727 = vadd.f32 %v5218, %v5726
        %v5728 = vpop.f32.mrf.mxu0
        %v5729 = vpop.f32.mrf.mxu0
        %v5730 = vadd.f32 %v5218, %v5729
        %v5731 = vpop.f32.mrf.mxu0
        %5732 = vmatprep.mubr.bf16.mxu0 %v5034
        %5733 = vmatmul.mubr.bf16.gmra.mxu0 %v5033
        %v5734 = vpop.f32.mrf.mxu0
        %v5735 = vadd.f32 %v5218, %v5734
        %v5736 = vpop.f32.mrf.mxu0
        %v5737 = vpop.f32.mrf.mxu0
        %v5738 = vadd.f32 %v5218, %v5737
        %v5739 = vpop.f32.mrf.mxu0
        %5740 = vmatprep.mubr.bf16.mxu0 %v5037
        %5741 = vmatmul.mubr.bf16.gmra.mxu0 %v5036
        %v5742 = vpop.f32.mrf.mxu0
        %v5743 = vadd.f32 %v5218, %v5742
        %v5744 = vpop.f32.mrf.mxu0
        %v5745 = vpop.f32.mrf.mxu0
        %v5746 = vadd.f32 %v5218, %v5745
        %v5747 = vpop.f32.mrf.mxu0
        %5748 = vmatprep.mubr.bf16.mxu0 %v5040
        %5749 = vmatmul.mubr.bf16.gmra.mxu0 %v5039
        %v5750 = vpop.f32.mrf.mxu0
        %v5751 = vadd.f32 %v5218, %v5750
        %v5752 = vpop.f32.mrf.mxu0
        %v5753 = vpop.f32.mrf.mxu0
        %v5754 = vadd.f32 %v5218, %v5753
        %v5755 = vpop.f32.mrf.mxu0
        %5756 = vmatprep.mubr.bf16.mxu0 %v5043
        %5757 = vmatmul.mubr.bf16.gmra.mxu0 %v5042
        %v5758 = vpop.f32.mrf.mxu0
        %v5759 = vadd.f32 %v5218, %v5758
        %v5760 = vpop.f32.mrf.mxu0
        %v5761 = vpop.f32.mrf.mxu0
        %v5762 = vadd.f32 %v5218, %v5761
        %v5763 = vpop.f32.mrf.mxu0
        %5764 = vmatprep.mubr.bf16.mxu0 %v5046
        %5765 = vmatmul.mubr.bf16.gmra.mxu0 %v5045
        %v5766 = vpop.f32.mrf.mxu0
        %v5767 = vadd.f32 %v5218, %v5766
        %v5768 = vpop.f32.mrf.mxu0
        %v5769 = vpop.f32.mrf.mxu0
        %v5770 = vadd.f32 %v5218, %v5769
        %v5771 = vpop.f32.mrf.mxu0
        %5772 = vmatprep.mubr.bf16.mxu0 %v5049
        %5773 = vmatmul.mubr.bf16.gmra.mxu0 %v5048
        %v5774 = vpop.f32.mrf.mxu0
        %v5775 = vadd.f32 %v5218, %v5774
        %v5776 = vpop.f32.mrf.mxu0
        %v5777 = vpop.f32.mrf.mxu0
        %v5778 = vadd.f32 %v5218, %v5777
        %v5779 = vpop.f32.mrf.mxu0
        %5780 = vmatprep.mubr.bf16.mxu0 %v5052
        %5781 = vmatmul.mubr.bf16.gmra.mxu0 %v5051
        %v5782 = vpop.f32.mrf.mxu0
        %v5783 = vadd.f32 %v5218, %v5782
        %v5784 = vpop.f32.mrf.mxu0
        %v5785 = vpop.f32.mrf.mxu0
        %v5786 = vadd.f32 %v5218, %v5785
        %v5787 = vpop.f32.mrf.mxu0
        %5788 = vmatprep.mubr.bf16.mxu0 %v5055
        %5789 = vmatmul.mubr.bf16.gmra.mxu0 %v5054
        %v5790 = vpop.f32.mrf.mxu0
        %v5791 = vadd.f32 %v5218, %v5790
        %v5792 = vpop.f32.mrf.mxu0
        %v5793 = vpop.f32.mrf.mxu0
        %v5794 = vadd.f32 %v5218, %v5793
        %v5795 = vpop.f32.mrf.mxu0
        %5796 = vmatprep.mubr.bf16.mxu0 %v5058
        %5797 = vmatmul.mubr.bf16.gmra.mxu0 %v5057
        %v5798 = vpop.f32.mrf.mxu0
        %v5799 = vadd.f32 %v5218, %v5798
        %v5800 = vpop.f32.mrf.mxu0
        %v5801 = vpop.f32.mrf.mxu0
        %v5802 = vadd.f32 %v5218, %v5801
        %v5803 = vpop.f32.mrf.mxu0
        %5804 = vmatprep.mubr.bf16.mxu0 %v5061
        %5805 = vmatmul.mubr.bf16.gmra.mxu0 %v5060
        %v5806 = vpop.f32.mrf.mxu0
        %v5807 = vadd.f32 %v5218, %v5806
        %v5808 = vpop.f32.mrf.mxu0
        %v5809 = vpop.f32.mrf.mxu0
        %v5810 = vadd.f32 %v5218, %v5809
        %v5811 = vpop.f32.mrf.mxu0
        %5812 = vdwg.mxu0
        %5813 = vmatprep.subr.bf16.mxu0 0
        %5814 = vmatpush1.bf16.msra.mxu0 %v5531
        %5815 = vmatprep.subr.bf16.mxu0 0
        %5816 = vmatpush1.bf16.msra.mxu0 %v5530
        %5817 = vmatprep.subr.bf16.mxu0 0
        %5818 = vmatpush1.bf16.msra.mxu0 %v5529
        %5819 = vmatprep.subr.bf16.mxu0 0
        %5820 = vmatpush1.bf16.msra.mxu0 %v5528
        %5821 = vmatprep.subr.bf16.mxu0 0
        %5822 = vmatpush1.bf16.msra.mxu0 %v5527
        %5823 = vmatprep.subr.bf16.mxu0 0
        %5824 = vmatpush1.bf16.msra.mxu0 %v5526
        %5825 = vmatprep.subr.bf16.mxu0 0
        %5826 = vmatpush1.bf16.msra.mxu0 %v5525
        %5827 = vmatprep.subr.bf16.mxu0 0
        %5828 = vmatpush1.bf16.msra.mxu0 %v5524
        %5829 = vmatprep.subr.bf16.mxu0 0
        %5830 = vmatpush2.bf16.msra.mxu0 %v5539
        %5831 = vmatprep.subr.bf16.mxu0 0
        %5832 = vmatpush2.bf16.msra.mxu0 %v5538
        %5833 = vmatprep.subr.bf16.mxu0 0
        %5834 = vmatpush2.bf16.msra.mxu0 %v5537
        %5835 = vmatprep.subr.bf16.mxu0 0
        %5836 = vmatpush2.bf16.msra.mxu0 %v5536
        %5837 = vmatprep.subr.bf16.mxu0 0
        %5838 = vmatpush2.bf16.msra.mxu0 %v5535
        %5839 = vmatprep.subr.bf16.mxu0 0
        %5840 = vmatpush2.bf16.msra.mxu0 %v5534
        %5841 = vmatprep.subr.bf16.mxu0 0
        %5842 = vmatpush2.bf16.msra.mxu0 %v5533
        %5843 = vmatprep.subr.bf16.mxu0 0
        %5844 = vmatpush2.bf16.msra.mxu0 %v5532
        %5845 = vmatprep.mubr.bf16.mxu0 %v5018
        %5846 = vmatmul.mubr.bf16.gmra.mxu0 %v5017
        %v5847 = vpop.f32.mrf.mxu0
        %v5848 = vadd.f32 %v5687, %v5847
        %v5849 = vpop.f32.mrf.mxu0
        %v5850 = vpop.f32.mrf.mxu0
        %v5851 = vadd.f32 %v5690, %v5850
        %v5852 = vpop.f32.mrf.mxu0
        %5853 = vmatprep.mubr.bf16.mxu0 %v5021
        %5854 = vmatmul.mubr.bf16.gmra.mxu0 %v5020
        %v5855 = vpop.f32.mrf.mxu0
        %v5856 = vadd.f32 %v5695, %v5855
        %v5857 = vpop.f32.mrf.mxu0
        %v5858 = vpop.f32.mrf.mxu0
        %v5859 = vadd.f32 %v5698, %v5858
        %v5860 = vpop.f32.mrf.mxu0
        %5861 = vmatprep.mubr.bf16.mxu0 %v5024
        %5862 = vmatmul.mubr.bf16.gmra.mxu0 %v5023
        %v5863 = vpop.f32.mrf.mxu0
        %v5864 = vadd.f32 %v5703, %v5863
        %v5865 = vpop.f32.mrf.mxu0
        %v5866 = vpop.f32.mrf.mxu0
        %v5867 = vadd.f32 %v5706, %v5866
        %v5868 = vpop.f32.mrf.mxu0
        %5869 = vmatprep.mubr.bf16.mxu0 %v5027
        %5870 = vmatmul.mubr.bf16.gmra.mxu0 %v5026
        %v5871 = vpop.f32.mrf.mxu0
        %v5872 = vadd.f32 %v5711, %v5871
        %v5873 = vpop.f32.mrf.mxu0
        %v5874 = vpop.f32.mrf.mxu0
        %v5875 = vadd.f32 %v5714, %v5874
        %v5876 = vpop.f32.mrf.mxu0
        %5877 = vmatprep.mubr.bf16.mxu0 %v5030
        %5878 = vmatmul.mubr.bf16.gmra.mxu0 %v5029
        %v5879 = vpop.f32.mrf.mxu0
        %v5880 = vadd.f32 %v5719, %v5879
        %v5881 = vpop.f32.mrf.mxu0
        %v5882 = vpop.f32.mrf.mxu0
        %v5883 = vadd.f32 %v5722, %v5882
        %v5884 = vpop.f32.mrf.mxu0
        %5885 = vmatprep.mubr.bf16.mxu0 %v5033
        %5886 = vmatmul.mubr.bf16.gmra.mxu0 %v5032
        %v5887 = vpop.f32.mrf.mxu0
        %v5888 = vadd.f32 %v5727, %v5887
        %v5889 = vpop.f32.mrf.mxu0
        %v5890 = vpop.f32.mrf.mxu0
        %v5891 = vadd.f32 %v5730, %v5890
        %v5892 = vpop.f32.mrf.mxu0
        %5893 = vmatprep.mubr.bf16.mxu0 %v5036
        %5894 = vmatmul.mubr.bf16.gmra.mxu0 %v5035
        %v5895 = vpop.f32.mrf.mxu0
        %v5896 = vadd.f32 %v5735, %v5895
        %v5897 = vpop.f32.mrf.mxu0
        %v5898 = vpop.f32.mrf.mxu0
        %v5899 = vadd.f32 %v5738, %v5898
        %v5900 = vpop.f32.mrf.mxu0
        %5901 = vmatprep.mubr.bf16.mxu0 %v5039
        %5902 = vmatmul.mubr.bf16.gmra.mxu0 %v5038
        %v5903 = vpop.f32.mrf.mxu0
        %v5904 = vadd.f32 %v5743, %v5903
        %v5905 = vpop.f32.mrf.mxu0
        %v5906 = vpop.f32.mrf.mxu0
        %v5907 = vadd.f32 %v5746, %v5906
        %v5908 = vpop.f32.mrf.mxu0
        %5909 = vmatprep.mubr.bf16.mxu0 %v5042
        %5910 = vmatmul.mubr.bf16.gmra.mxu0 %v5041
        %v5911 = vpop.f32.mrf.mxu0
        %v5912 = vadd.f32 %v5751, %v5911
        %v5913 = vpop.f32.mrf.mxu0
        %v5914 = vpop.f32.mrf.mxu0
        %v5915 = vadd.f32 %v5754, %v5914
        %v5916 = vpop.f32.mrf.mxu0
        %5917 = vmatprep.mubr.bf16.mxu0 %v5045
        %5918 = vmatmul.mubr.bf16.gmra.mxu0 %v5044
        %v5919 = vpop.f32.mrf.mxu0
        %v5920 = vadd.f32 %v5759, %v5919
        %v5921 = vpop.f32.mrf.mxu0
        %v5922 = vpop.f32.mrf.mxu0
        %v5923 = vadd.f32 %v5762, %v5922
        %v5924 = vpop.f32.mrf.mxu0
        %5925 = vmatprep.mubr.bf16.mxu0 %v5048
        %5926 = vmatmul.mubr.bf16.gmra.mxu0 %v5047
        %v5927 = vpop.f32.mrf.mxu0
        %v5928 = vadd.f32 %v5767, %v5927
        %v5929 = vpop.f32.mrf.mxu0
        %v5930 = vpop.f32.mrf.mxu0
        %v5931 = vadd.f32 %v5770, %v5930
        %v5932 = vpop.f32.mrf.mxu0
        %5933 = vmatprep.mubr.bf16.mxu0 %v5051
        %5934 = vmatmul.mubr.bf16.gmra.mxu0 %v5050
        %v5935 = vpop.f32.mrf.mxu0
        %v5936 = vadd.f32 %v5775, %v5935
        %v5937 = vpop.f32.mrf.mxu0
        %v5938 = vpop.f32.mrf.mxu0
        %v5939 = vadd.f32 %v5778, %v5938
        %v5940 = vpop.f32.mrf.mxu0
        %5941 = vmatprep.mubr.bf16.mxu0 %v5054
        %5942 = vmatmul.mubr.bf16.gmra.mxu0 %v5053
        %v5943 = vpop.f32.mrf.mxu0
        %v5944 = vadd.f32 %v5783, %v5943
        %v5945 = vpop.f32.mrf.mxu0
        %v5946 = vpop.f32.mrf.mxu0
        %v5947 = vadd.f32 %v5786, %v5946
        %v5948 = vpop.f32.mrf.mxu0
        %5949 = vmatprep.mubr.bf16.mxu0 %v5057
        %5950 = vmatmul.mubr.bf16.gmra.mxu0 %v5056
        %v5951 = vpop.f32.mrf.mxu0
        %v5952 = vadd.f32 %v5791, %v5951
        %v5953 = vpop.f32.mrf.mxu0
        %v5954 = vpop.f32.mrf.mxu0
        %v5955 = vadd.f32 %v5794, %v5954
        %v5956 = vpop.f32.mrf.mxu0
        %5957 = vmatprep.mubr.bf16.mxu0 %v5060
        %5958 = vmatmul.mubr.bf16.gmra.mxu0 %v5059
        %v5959 = vpop.f32.mrf.mxu0
        %v5960 = vadd.f32 %v5799, %v5959
        %v5961 = vpop.f32.mrf.mxu0
        %v5962 = vpop.f32.mrf.mxu0
        %v5963 = vadd.f32 %v5802, %v5962
        %v5964 = vpop.f32.mrf.mxu0
        %5965 = vmatprep.mubr.bf16.mxu0 %v5063
        %5966 = vmatmul.mubr.bf16.gmra.mxu0 %v5062
        %v5967 = vpop.f32.mrf.mxu0
        %v5968 = vadd.f32 %v5807, %v5967
        %v5969 = vpop.f32.mrf.mxu0
        %v5970 = vpop.f32.mrf.mxu0
        %v5971 = vadd.f32 %v5810, %v5970
        %v5972 = vpop.f32.mrf.mxu0
        %5973 = vdwg.mxu0
        %5974 = vmatprep.subr.bf16.mxu0 0
        %5975 = vmatpush1.bf16.msra.mxu0 %v5547
        %5976 = vmatprep.subr.bf16.mxu0 0
        %5977 = vmatpush1.bf16.msra.mxu0 %v5546
        %5978 = vmatprep.subr.bf16.mxu0 0
        %5979 = vmatpush1.bf16.msra.mxu0 %v5545
        %5980 = vmatprep.subr.bf16.mxu0 0
        %5981 = vmatpush1.bf16.msra.mxu0 %v5544
        %5982 = vmatprep.subr.bf16.mxu0 0
        %5983 = vmatpush1.bf16.msra.mxu0 %v5543
        %5984 = vmatprep.subr.bf16.mxu0 0
        %5985 = vmatpush1.bf16.msra.mxu0 %v5542
        %5986 = vmatprep.subr.bf16.mxu0 0
        %5987 = vmatpush1.bf16.msra.mxu0 %v5541
        %5988 = vmatprep.subr.bf16.mxu0 0
        %5989 = vmatpush1.bf16.msra.mxu0 %v5540
        %5990 = vmatprep.subr.bf16.mxu0 0
        %5991 = vmatpush2.bf16.msra.mxu0 %v5555
        %5992 = vmatprep.subr.bf16.mxu0 0
        %5993 = vmatpush2.bf16.msra.mxu0 %v5554
        %5994 = vmatprep.subr.bf16.mxu0 0
        %5995 = vmatpush2.bf16.msra.mxu0 %v5553
        %5996 = vmatprep.subr.bf16.mxu0 0
        %5997 = vmatpush2.bf16.msra.mxu0 %v5552
        %5998 = vmatprep.subr.bf16.mxu0 0
        %5999 = vmatpush2.bf16.msra.mxu0 %v5551
        %6000 = vmatprep.subr.bf16.mxu0 0
        %6001 = vmatpush2.bf16.msra.mxu0 %v5550
        %6002 = vmatprep.subr.bf16.mxu0 0
        %6003 = vmatpush2.bf16.msra.mxu0 %v5549
        %6004 = vmatprep.subr.bf16.mxu0 0
        %6005 = vmatpush2.bf16.msra.mxu0 %v5548
        %6006 = vmatprep.mubr.bf16.mxu0 %v5020
        %6007 = vmatmul.mubr.bf16.gmra.mxu0 %v5019
        %v6008 = vpop.f32.mrf.mxu0
        %v6009 = vadd.f32 %v5848, %v6008
        %v6010 = vpop.f32.mrf.mxu0
        %v6011 = vpop.f32.mrf.mxu0
        %v6012 = vadd.f32 %v5851, %v6011
        %v6013 = vpop.f32.mrf.mxu0
        %6014 = vmatprep.mubr.bf16.mxu0 %v5023
        %6015 = vmatmul.mubr.bf16.gmra.mxu0 %v5022
        %v6016 = vpop.f32.mrf.mxu0
        %v6017 = vadd.f32 %v5856, %v6016
        %v6018 = vpop.f32.mrf.mxu0
        %v6019 = vpop.f32.mrf.mxu0
        %v6020 = vadd.f32 %v5859, %v6019
        %v6021 = vpop.f32.mrf.mxu0
        %6022 = vmatprep.mubr.bf16.mxu0 %v5026
        %6023 = vmatmul.mubr.bf16.gmra.mxu0 %v5025
        %v6024 = vpop.f32.mrf.mxu0
        %v6025 = vadd.f32 %v5864, %v6024
        %v6026 = vpop.f32.mrf.mxu0
        %v6027 = vpop.f32.mrf.mxu0
        %v6028 = vadd.f32 %v5867, %v6027
        %v6029 = vpop.f32.mrf.mxu0
        %6030 = vmatprep.mubr.bf16.mxu0 %v5029
        %6031 = vmatmul.mubr.bf16.gmra.mxu0 %v5028
        %v6032 = vpop.f32.mrf.mxu0
        %v6033 = vadd.f32 %v5872, %v6032
        %v6034 = vpop.f32.mrf.mxu0
        %v6035 = vpop.f32.mrf.mxu0
        %v6036 = vadd.f32 %v5875, %v6035
        %v6037 = vpop.f32.mrf.mxu0
        %6038 = vmatprep.mubr.bf16.mxu0 %v5032
        %6039 = vmatmul.mubr.bf16.gmra.mxu0 %v5031
        %v6040 = vpop.f32.mrf.mxu0
        %v6041 = vadd.f32 %v5880, %v6040
        %v6042 = vpop.f32.mrf.mxu0
        %v6043 = vpop.f32.mrf.mxu0
        %v6044 = vadd.f32 %v5883, %v6043
        %v6045 = vpop.f32.mrf.mxu0
        %6046 = vmatprep.mubr.bf16.mxu0 %v5035
        %6047 = vmatmul.mubr.bf16.gmra.mxu0 %v5034
        %v6048 = vpop.f32.mrf.mxu0
        %v6049 = vadd.f32 %v5888, %v6048
        %v6050 = vpop.f32.mrf.mxu0
        %v6051 = vpop.f32.mrf.mxu0
        %v6052 = vadd.f32 %v5891, %v6051
        %v6053 = vpop.f32.mrf.mxu0
        %6054 = vmatprep.mubr.bf16.mxu0 %v5038
        %6055 = vmatmul.mubr.bf16.gmra.mxu0 %v5037
        %v6056 = vpop.f32.mrf.mxu0
        %v6057 = vadd.f32 %v5896, %v6056
        %v6058 = vpop.f32.mrf.mxu0
        %v6059 = vpop.f32.mrf.mxu0
        %v6060 = vadd.f32 %v5899, %v6059
        %v6061 = vpop.f32.mrf.mxu0
        %6062 = vmatprep.mubr.bf16.mxu0 %v5041
        %6063 = vmatmul.mubr.bf16.gmra.mxu0 %v5040
        %v6064 = vpop.f32.mrf.mxu0
        %v6065 = vadd.f32 %v5904, %v6064
        %v6066 = vpop.f32.mrf.mxu0
        %v6067 = vpop.f32.mrf.mxu0
        %v6068 = vadd.f32 %v5907, %v6067
        %v6069 = vpop.f32.mrf.mxu0
        %6070 = vmatprep.mubr.bf16.mxu0 %v5044
        %6071 = vmatmul.mubr.bf16.gmra.mxu0 %v5043
        %v6072 = vpop.f32.mrf.mxu0
        %v6073 = vadd.f32 %v5912, %v6072
        %v6074 = vpop.f32.mrf.mxu0
        %v6075 = vpop.f32.mrf.mxu0
        %v6076 = vadd.f32 %v5915, %v6075
        %v6077 = vpop.f32.mrf.mxu0
        %6078 = vmatprep.mubr.bf16.mxu0 %v5047
        %6079 = vmatmul.mubr.bf16.gmra.mxu0 %v5046
        %v6080 = vpop.f32.mrf.mxu0
        %v6081 = vadd.f32 %v5920, %v6080
        %v6082 = vpop.f32.mrf.mxu0
        %v6083 = vpop.f32.mrf.mxu0
        %v6084 = vadd.f32 %v5923, %v6083
        %v6085 = vpop.f32.mrf.mxu0
        %6086 = vmatprep.mubr.bf16.mxu0 %v5050
        %6087 = vmatmul.mubr.bf16.gmra.mxu0 %v5049
        %v6088 = vpop.f32.mrf.mxu0
        %v6089 = vadd.f32 %v5928, %v6088
        %v6090 = vpop.f32.mrf.mxu0
        %v6091 = vpop.f32.mrf.mxu0
        %v6092 = vadd.f32 %v5931, %v6091
        %v6093 = vpop.f32.mrf.mxu0
        %6094 = vmatprep.mubr.bf16.mxu0 %v5053
        %6095 = vmatmul.mubr.bf16.gmra.mxu0 %v5052
        %v6096 = vpop.f32.mrf.mxu0
        %v6097 = vadd.f32 %v5936, %v6096
        %v6098 = vpop.f32.mrf.mxu0
        %v6099 = vpop.f32.mrf.mxu0
        %v6100 = vadd.f32 %v5939, %v6099
        %v6101 = vpop.f32.mrf.mxu0
        %6102 = vmatprep.mubr.bf16.mxu0 %v5056
        %6103 = vmatmul.mubr.bf16.gmra.mxu0 %v5055
        %v6104 = vpop.f32.mrf.mxu0
        %v6105 = vadd.f32 %v5944, %v6104
        %v6106 = vpop.f32.mrf.mxu0
        %v6107 = vpop.f32.mrf.mxu0
        %v6108 = vadd.f32 %v5947, %v6107
        %v6109 = vpop.f32.mrf.mxu0
        %6110 = vmatprep.mubr.bf16.mxu0 %v5059
        %6111 = vmatmul.mubr.bf16.gmra.mxu0 %v5058
        %v6112 = vpop.f32.mrf.mxu0
        %v6113 = vadd.f32 %v5952, %v6112
        %v6114 = vpop.f32.mrf.mxu0
        %v6115 = vpop.f32.mrf.mxu0
        %v6116 = vadd.f32 %v5955, %v6115
        %v6117 = vpop.f32.mrf.mxu0
        %6118 = vmatprep.mubr.bf16.mxu0 %v5062
        %6119 = vmatmul.mubr.bf16.gmra.mxu0 %v5061
        %v6120 = vpop.f32.mrf.mxu0
        %v6121 = vadd.f32 %v5960, %v6120
        %v6122 = vpop.f32.mrf.mxu0
        %v6123 = vpop.f32.mrf.mxu0
        %v6124 = vadd.f32 %v5963, %v6123
        %v6125 = vpop.f32.mrf.mxu0
        %6126 = vmatprep.mubr.bf16.mxu0 %v5065
        %6127 = vmatmul.mubr.bf16.gmra.mxu0 %v5064
        %v6128 = vpop.f32.mrf.mxu0
        %v6129 = vadd.f32 %v5968, %v6128
        %v6130 = vpop.f32.mrf.mxu0
        %v6131 = vpop.f32.mrf.mxu0
        %v6132 = vadd.f32 %v5971, %v6131
        %v6133 = vpop.f32.mrf.mxu0
        %6134 = vdwg.mxu0
        %6135 = vmatprep.subr.bf16.mxu0 0
        %6136 = vmatpush1.bf16.msra.mxu0 %v5563
        %6137 = vmatprep.subr.bf16.mxu0 0
        %6138 = vmatpush1.bf16.msra.mxu0 %v5562
        %6139 = vmatprep.subr.bf16.mxu0 0
        %6140 = vmatpush1.bf16.msra.mxu0 %v5561
        %6141 = vmatprep.subr.bf16.mxu0 0
        %6142 = vmatpush1.bf16.msra.mxu0 %v5560
        %6143 = vmatprep.subr.bf16.mxu0 0
        %6144 = vmatpush1.bf16.msra.mxu0 %v5559
        %6145 = vmatprep.subr.bf16.mxu0 0
        %6146 = vmatpush1.bf16.msra.mxu0 %v5558
        %6147 = vmatprep.subr.bf16.mxu0 0
        %6148 = vmatpush1.bf16.msra.mxu0 %v5557
        %6149 = vmatprep.subr.bf16.mxu0 0
        %6150 = vmatpush1.bf16.msra.mxu0 %v5556
        %6151 = vmatprep.subr.bf16.mxu0 0
        %6152 = vmatpush2.bf16.msra.mxu0 %v5571
        %6153 = vmatprep.subr.bf16.mxu0 0
        %6154 = vmatpush2.bf16.msra.mxu0 %v5570
        %6155 = vmatprep.subr.bf16.mxu0 0
        %6156 = vmatpush2.bf16.msra.mxu0 %v5569
        %6157 = vmatprep.subr.bf16.mxu0 0
        %6158 = vmatpush2.bf16.msra.mxu0 %v5568
        %6159 = vmatprep.subr.bf16.mxu0 0
        %6160 = vmatpush2.bf16.msra.mxu0 %v5567
        %6161 = vmatprep.subr.bf16.mxu0 0
        %6162 = vmatpush2.bf16.msra.mxu0 %v5566
        %6163 = vmatprep.subr.bf16.mxu0 0
        %6164 = vmatpush2.bf16.msra.mxu0 %v5565
        %6165 = vmatprep.subr.bf16.mxu0 0
        %6166 = vmatpush2.bf16.msra.mxu0 %v5564
        %6167 = vmatprep.mubr.bf16.mxu0 %v5022
        %6168 = vmatmul.mubr.bf16.gmra.mxu0 %v5021
        %v6169 = vpop.f32.mrf.mxu0
        %v6170 = vadd.f32 %v6009, %v6169
        %v6171 = vpop.f32.mrf.mxu0
        %v6172 = vpop.f32.mrf.mxu0
        %v6173 = vadd.f32 %v6012, %v6172
        %v6174 = vpop.f32.mrf.mxu0
        %6175 = vmatprep.mubr.bf16.mxu0 %v5025
        %6176 = vmatmul.mubr.bf16.gmra.mxu0 %v5024
        %v6177 = vpop.f32.mrf.mxu0
        %v6178 = vadd.f32 %v6017, %v6177
        %v6179 = vpop.f32.mrf.mxu0
        %v6180 = vpop.f32.mrf.mxu0
        %v6181 = vadd.f32 %v6020, %v6180
        %v6182 = vpop.f32.mrf.mxu0
        %6183 = vmatprep.mubr.bf16.mxu0 %v5028
        %6184 = vmatmul.mubr.bf16.gmra.mxu0 %v5027
        %v6185 = vpop.f32.mrf.mxu0
        %v6186 = vadd.f32 %v6025, %v6185
        %v6187 = vpop.f32.mrf.mxu0
        %v6188 = vpop.f32.mrf.mxu0
        %v6189 = vadd.f32 %v6028, %v6188
        %v6190 = vpop.f32.mrf.mxu0
        %6191 = vmatprep.mubr.bf16.mxu0 %v5031
        %6192 = vmatmul.mubr.bf16.gmra.mxu0 %v5030
        %v6193 = vpop.f32.mrf.mxu0
        %v6194 = vadd.f32 %v6033, %v6193
        %v6195 = vpop.f32.mrf.mxu0
        %v6196 = vpop.f32.mrf.mxu0
        %v6197 = vadd.f32 %v6036, %v6196
        %v6198 = vpop.f32.mrf.mxu0
        %6199 = vmatprep.mubr.bf16.mxu0 %v5034
        %6200 = vmatmul.mubr.bf16.gmra.mxu0 %v5033
        %v6201 = vpop.f32.mrf.mxu0
        %v6202 = vadd.f32 %v6041, %v6201
        %v6203 = vpop.f32.mrf.mxu0
        %v6204 = vpop.f32.mrf.mxu0
        %v6205 = vadd.f32 %v6044, %v6204
        %v6206 = vpop.f32.mrf.mxu0
        %6207 = vmatprep.mubr.bf16.mxu0 %v5037
        %6208 = vmatmul.mubr.bf16.gmra.mxu0 %v5036
        %v6209 = vpop.f32.mrf.mxu0
        %v6210 = vadd.f32 %v6049, %v6209
        %v6211 = vpop.f32.mrf.mxu0
        %v6212 = vpop.f32.mrf.mxu0
        %v6213 = vadd.f32 %v6052, %v6212
        %v6214 = vpop.f32.mrf.mxu0
        %6215 = vmatprep.mubr.bf16.mxu0 %v5040
        %6216 = vmatmul.mubr.bf16.gmra.mxu0 %v5039
        %v6217 = vpop.f32.mrf.mxu0
        %v6218 = vadd.f32 %v6057, %v6217
        %v6219 = vpop.f32.mrf.mxu0
        %v6220 = vpop.f32.mrf.mxu0
        %v6221 = vadd.f32 %v6060, %v6220
        %v6222 = vpop.f32.mrf.mxu0
        %6223 = vmatprep.mubr.bf16.mxu0 %v5043
        %6224 = vmatmul.mubr.bf16.gmra.mxu0 %v5042
        %v6225 = vpop.f32.mrf.mxu0
        %v6226 = vadd.f32 %v6065, %v6225
        %v6227 = vpop.f32.mrf.mxu0
        %v6228 = vpop.f32.mrf.mxu0
        %v6229 = vadd.f32 %v6068, %v6228
        %v6230 = vpop.f32.mrf.mxu0
        %6231 = vmatprep.mubr.bf16.mxu0 %v5046
        %6232 = vmatmul.mubr.bf16.gmra.mxu0 %v5045
        %v6233 = vpop.f32.mrf.mxu0
        %v6234 = vadd.f32 %v6073, %v6233
        %v6235 = vpop.f32.mrf.mxu0
        %v6236 = vpop.f32.mrf.mxu0
        %v6237 = vadd.f32 %v6076, %v6236
        %v6238 = vpop.f32.mrf.mxu0
        %6239 = vmatprep.mubr.bf16.mxu0 %v5049
        %6240 = vmatmul.mubr.bf16.gmra.mxu0 %v5048
        %v6241 = vpop.f32.mrf.mxu0
        %v6242 = vadd.f32 %v6081, %v6241
        %v6243 = vpop.f32.mrf.mxu0
        %v6244 = vpop.f32.mrf.mxu0
        %v6245 = vadd.f32 %v6084, %v6244
        %v6246 = vpop.f32.mrf.mxu0
        %6247 = vmatprep.mubr.bf16.mxu0 %v5052
        %6248 = vmatmul.mubr.bf16.gmra.mxu0 %v5051
        %v6249 = vpop.f32.mrf.mxu0
        %v6250 = vadd.f32 %v6089, %v6249
        %v6251 = vpop.f32.mrf.mxu0
        %v6252 = vpop.f32.mrf.mxu0
        %v6253 = vadd.f32 %v6092, %v6252
        %v6254 = vpop.f32.mrf.mxu0
        %6255 = vmatprep.mubr.bf16.mxu0 %v5055
        %6256 = vmatmul.mubr.bf16.gmra.mxu0 %v5054
        %v6257 = vpop.f32.mrf.mxu0
        %v6258 = vadd.f32 %v6097, %v6257
        %v6259 = vpop.f32.mrf.mxu0
        %v6260 = vpop.f32.mrf.mxu0
        %v6261 = vadd.f32 %v6100, %v6260
        %v6262 = vpop.f32.mrf.mxu0
        %6263 = vmatprep.mubr.bf16.mxu0 %v5058
        %6264 = vmatmul.mubr.bf16.gmra.mxu0 %v5057
        %v6265 = vpop.f32.mrf.mxu0
        %v6266 = vadd.f32 %v6105, %v6265
        %v6267 = vpop.f32.mrf.mxu0
        %v6268 = vpop.f32.mrf.mxu0
        %v6269 = vadd.f32 %v6108, %v6268
        %v6270 = vpop.f32.mrf.mxu0
        %6271 = vmatprep.mubr.bf16.mxu0 %v5061
        %6272 = vmatmul.mubr.bf16.gmra.mxu0 %v5060
        %v6273 = vpop.f32.mrf.mxu0
        %v6274 = vadd.f32 %v6113, %v6273
        %v6275 = vpop.f32.mrf.mxu0
        %v6276 = vpop.f32.mrf.mxu0
        %v6277 = vadd.f32 %v6116, %v6276
        %v6278 = vpop.f32.mrf.mxu0
        %6279 = vmatprep.mubr.bf16.mxu0 %v5064
        %6280 = vmatmul.mubr.bf16.gmra.mxu0 %v5063
        %v6281 = vpop.f32.mrf.mxu0
        %v6282 = vadd.f32 %v6121, %v6281
        %v6283 = vpop.f32.mrf.mxu0
        %v6284 = vpop.f32.mrf.mxu0
        %v6285 = vadd.f32 %v6124, %v6284
        %v6286 = vpop.f32.mrf.mxu0
        %6287 = vmatprep.mubr.bf16.mxu0 %v5067
        %6288 = vmatmul.mubr.bf16.gmra.mxu0 %v5066
        %v6289 = vpop.f32.mrf.mxu0
        %v6290 = vadd.f32 %v6129, %v6289
        %v6291 = vpop.f32.mrf.mxu0
        %v6292 = vpop.f32.mrf.mxu0
        %v6293 = vadd.f32 %v6132, %v6292
        %v6294 = vpop.f32.mrf.mxu0
        %6295 = vdwg.mxu0
        %6296 = vmatprep.subr.bf16.mxu0 0
        %6297 = vmatpush1.bf16.msra.mxu0 %v5579
        %6298 = vmatprep.subr.bf16.mxu0 0
        %6299 = vmatpush1.bf16.msra.mxu0 %v5578
        %6300 = vmatprep.subr.bf16.mxu0 0
        %6301 = vmatpush1.bf16.msra.mxu0 %v5577
        %6302 = vmatprep.subr.bf16.mxu0 0
        %6303 = vmatpush1.bf16.msra.mxu0 %v5576
        %6304 = vmatprep.subr.bf16.mxu0 0
        %6305 = vmatpush1.bf16.msra.mxu0 %v5575
        %6306 = vmatprep.subr.bf16.mxu0 0
        %6307 = vmatpush1.bf16.msra.mxu0 %v5574
        %6308 = vmatprep.subr.bf16.mxu0 0
        %6309 = vmatpush1.bf16.msra.mxu0 %v5573
        %6310 = vmatprep.subr.bf16.mxu0 0
        %6311 = vmatpush1.bf16.msra.mxu0 %v5572
        %6312 = vmatprep.subr.bf16.mxu0 0
        %6313 = vmatpush2.bf16.msra.mxu0 0
        %6314 = vmatprep.subr.bf16.mxu0 0
        %6315 = vmatpush2.bf16.msra.mxu0 0
        %6316 = vmatprep.subr.bf16.mxu0 0
        %6317 = vmatpush2.bf16.msra.mxu0 0
        %6318 = vmatprep.subr.bf16.mxu0 0
        %6319 = vmatpush2.bf16.msra.mxu0 0
        %6320 = vmatprep.subr.bf16.mxu0 0
        %6321 = vmatpush2.bf16.msra.mxu0 0
        %6322 = vmatprep.subr.bf16.mxu0 0
        %6323 = vmatpush2.bf16.msra.mxu0 0
        %6324 = vmatprep.subr.bf16.mxu0 0
        %6325 = vmatpush2.bf16.msra.mxu0 0
        %6326 = vmatprep.subr.bf16.mxu0 0
        %6327 = vmatpush2.bf16.msra.mxu0 0
        %6328 = vmatprep.mubr.bf16.mxu0 0
        %6329 = vmatmul.mubr.bf16.gmra.mxu0 %v5023
        %v6330 = vpop.f32.mrf.mxu0
        %v6331 = vadd.f32 %v6170, %v6330
        %v6332 = vpop.f32.mrf.mxu0
        %v6333 = vpop.f32.mrf.mxu0
        %v6334 = vadd.f32 %v6173, %v6333
        %v6335 = vpop.f32.mrf.mxu0
        %6336 = vmatprep.mubr.bf16.mxu0 0
        %6337 = vmatmul.mubr.bf16.gmra.mxu0 %v5026
        %v6338 = vpop.f32.mrf.mxu0
        %v6339 = vadd.f32 %v6178, %v6338
        %v6340 = vpop.f32.mrf.mxu0
        %v6341 = vpop.f32.mrf.mxu0
        %v6342 = vadd.f32 %v6181, %v6341
        %v6343 = vpop.f32.mrf.mxu0
        %6344 = vmatprep.mubr.bf16.mxu0 0
        %6345 = vmatmul.mubr.bf16.gmra.mxu0 %v5029
        %v6346 = vpop.f32.mrf.mxu0
        %v6347 = vadd.f32 %v6186, %v6346
        %v6348 = vpop.f32.mrf.mxu0
        %v6349 = vpop.f32.mrf.mxu0
        %v6350 = vadd.f32 %v6189, %v6349
        %v6351 = vpop.f32.mrf.mxu0
        %6352 = vmatprep.mubr.bf16.mxu0 0
        %6353 = vmatmul.mubr.bf16.gmra.mxu0 %v5032
        %v6354 = vpop.f32.mrf.mxu0
        %v6355 = vadd.f32 %v6194, %v6354
        %v6356 = vpop.f32.mrf.mxu0
        %v6357 = vpop.f32.mrf.mxu0
        %v6358 = vadd.f32 %v6197, %v6357
        %v6359 = vpop.f32.mrf.mxu0
        %6360 = vmatprep.mubr.bf16.mxu0 0
        %6361 = vmatmul.mubr.bf16.gmra.mxu0 %v5035
        %v6362 = vpop.f32.mrf.mxu0
        %v6363 = vadd.f32 %v6202, %v6362
        %v6364 = vpop.f32.mrf.mxu0
        %v6365 = vpop.f32.mrf.mxu0
        %v6366 = vadd.f32 %v6205, %v6365
        %v6367 = vpop.f32.mrf.mxu0
        %6368 = vmatprep.mubr.bf16.mxu0 0
        %6369 = vmatmul.mubr.bf16.gmra.mxu0 %v5038
        %v6370 = vpop.f32.mrf.mxu0
        %v6371 = vadd.f32 %v6210, %v6370
        %v6372 = vpop.f32.mrf.mxu0
        %v6373 = vpop.f32.mrf.mxu0
        %v6374 = vadd.f32 %v6213, %v6373
        %v6375 = vpop.f32.mrf.mxu0
        %6376 = vmatprep.mubr.bf16.mxu0 0
        %6377 = vmatmul.mubr.bf16.gmra.mxu0 %v5041
        %v6378 = vpop.f32.mrf.mxu0
        %v6379 = vadd.f32 %v6218, %v6378
        %v6380 = vpop.f32.mrf.mxu0
        %v6381 = vpop.f32.mrf.mxu0
        %v6382 = vadd.f32 %v6221, %v6381
        %v6383 = vpop.f32.mrf.mxu0
        %6384 = vmatprep.mubr.bf16.mxu0 0
        %6385 = vmatmul.mubr.bf16.gmra.mxu0 %v5044
        %v6386 = vpop.f32.mrf.mxu0
        %v6387 = vadd.f32 %v6226, %v6386
        %v6388 = vpop.f32.mrf.mxu0
        %v6389 = vpop.f32.mrf.mxu0
        %v6390 = vadd.f32 %v6229, %v6389
        %v6391 = vpop.f32.mrf.mxu0
        %6392 = vmatprep.mubr.bf16.mxu0 0
        %6393 = vmatmul.mubr.bf16.gmra.mxu0 %v5047
        %v6394 = vpop.f32.mrf.mxu0
        %v6395 = vadd.f32 %v6234, %v6394
        %v6396 = vpop.f32.mrf.mxu0
        %v6397 = vpop.f32.mrf.mxu0
        %v6398 = vadd.f32 %v6237, %v6397
        %v6399 = vpop.f32.mrf.mxu0
        %6400 = vmatprep.mubr.bf16.mxu0 0
        %6401 = vmatmul.mubr.bf16.gmra.mxu0 %v5050
        %v6402 = vpop.f32.mrf.mxu0
        %v6403 = vadd.f32 %v6242, %v6402
        %v6404 = vpop.f32.mrf.mxu0
        %v6405 = vpop.f32.mrf.mxu0
        %v6406 = vadd.f32 %v6245, %v6405
        %v6407 = vpop.f32.mrf.mxu0
        %6408 = vmatprep.mubr.bf16.mxu0 0
        %6409 = vmatmul.mubr.bf16.gmra.mxu0 %v5053
        %v6410 = vpop.f32.mrf.mxu0
        %v6411 = vadd.f32 %v6250, %v6410
        %v6412 = vpop.f32.mrf.mxu0
        %v6413 = vpop.f32.mrf.mxu0
        %v6414 = vadd.f32 %v6253, %v6413
        %v6415 = vpop.f32.mrf.mxu0
        %6416 = vmatprep.mubr.bf16.mxu0 0
        %6417 = vmatmul.mubr.bf16.gmra.mxu0 %v5056
        %v6418 = vpop.f32.mrf.mxu0
        %v6419 = vadd.f32 %v6258, %v6418
        %v6420 = vpop.f32.mrf.mxu0
        %v6421 = vpop.f32.mrf.mxu0
        %v6422 = vadd.f32 %v6261, %v6421
        %v6423 = vpop.f32.mrf.mxu0
        %6424 = vmatprep.mubr.bf16.mxu0 0
        %6425 = vmatmul.mubr.bf16.gmra.mxu0 %v5059
        %v6426 = vpop.f32.mrf.mxu0
        %v6427 = vadd.f32 %v6266, %v6426
        %v6428 = vpop.f32.mrf.mxu0
        %v6429 = vpop.f32.mrf.mxu0
        %v6430 = vadd.f32 %v6269, %v6429
        %v6431 = vpop.f32.mrf.mxu0
        %6432 = vmatprep.mubr.bf16.mxu0 0
        %6433 = vmatmul.mubr.bf16.gmra.mxu0 %v5062
        %v6434 = vpop.f32.mrf.mxu0
        %v6435 = vadd.f32 %v6274, %v6434
        %v6436 = vpop.f32.mrf.mxu0
        %v6437 = vpop.f32.mrf.mxu0
        %v6438 = vadd.f32 %v6277, %v6437
        %v6439 = vpop.f32.mrf.mxu0
        %6440 = vmatprep.mubr.bf16.mxu0 0
        %6441 = vmatmul.mubr.bf16.gmra.mxu0 %v5065
        %v6442 = vpop.f32.mrf.mxu0
        %v6443 = vadd.f32 %v6282, %v6442
        %v6444 = vpop.f32.mrf.mxu0
        %v6445 = vpop.f32.mrf.mxu0
        %v6446 = vadd.f32 %v6285, %v6445
        %v6447 = vpop.f32.mrf.mxu0
        %6448 = vmatprep.mubr.bf16.mxu0 0
        %6449 = vmatmul.mubr.bf16.gmra.mxu0 %v5068
        %v6450 = vpop.f32.mrf.mxu0
        %v6451 = vadd.f32 %v6290, %v6450
        %v6452 = vpop.f32.mrf.mxu0
        %v6453 = vpop.f32.mrf.mxu0
        %v6454 = vadd.f32 %v6293, %v6453
        %v6455 = vpop.f32.mrf.mxu0
        %6456 = vdwg.mxu0
        %v6457 = vmax.f32 %v6331, 0.0
        %v6458 = vmax.f32 %v6334, 0.0
        %v6459 = vmax.f32 %v6339, 0.0
        %v6460 = vmax.f32 %v6342, 0.0
        %v6461 = vmax.f32 %v6347, 0.0
        %v6462 = vmax.f32 %v6350, 0.0
        %v6463 = vmax.f32 %v6355, 0.0
        %v6464 = vmax.f32 %v6358, 0.0
        %v6465 = vmax.f32 %v6363, 0.0
        %v6466 = vmax.f32 %v6366, 0.0
        %v6467 = vmax.f32 %v6371, 0.0
        %v6468 = vmax.f32 %v6374, 0.0
        %v6469 = vmax.f32 %v6379, 0.0
        %v6470 = vmax.f32 %v6382, 0.0
        %v6471 = vmax.f32 %v6387, 0.0
        %v6472 = vmax.f32 %v6390, 0.0
        %v6473 = vmax.f32 %v6395, 0.0
        %v6474 = vmax.f32 %v6398, 0.0
        %v6475 = vmax.f32 %v6403, 0.0
        %v6476 = vmax.f32 %v6406, 0.0
        %v6477 = vmax.f32 %v6411, 0.0
        %v6478 = vmax.f32 %v6414, 0.0
        %v6479 = vmax.f32 %v6419, 0.0
        %v6480 = vmax.f32 %v6422, 0.0
        %v6481 = vmax.f32 %v6427, 0.0
        %v6482 = vmax.f32 %v6430, 0.0
        %v6483 = vmax.f32 %v6435, 0.0
        %v6484 = vmax.f32 %v6438, 0.0
        %v6485 = vmax.f32 %v6443, 0.0
        %v6486 = vmax.f32 %v6446, 0.0
        %v6487 = vmax.f32 %v6451, 0.0
        %v6488 = vmax.f32 %v6454, 0.0
        %6489 = vst [vmem:[%s465] sm:$0xff] %v6457
        %6490 = vst [vmem:[%s465 + $0x8] sm:$0xff] %v6458
        %6491 = vst [vmem:[%s465 + $0x10] sm:$0xff] %v6459
        %6492 = vst [vmem:[%s465 + $0x18] sm:$0xff] %v6460
        %6493 = vst [vmem:[%s465 + $0x20] sm:$0xff] %v6461
        %6494 = vst [vmem:[%s465 + $0x28] sm:$0xff] %v6462
        %6495 = vst [vmem:[%s465 + $0x30] sm:$0xff] %v6463
        %6496 = vst [vmem:[%s465 + $0x38] sm:$0xff] %v6464
        %6497 = vst [vmem:[%s465 + $0x40] sm:$0xff] %v6465
        %6498 = vst [vmem:[%s465 + $0x48] sm:$0xff] %v6466
        %6499 = vst [vmem:[%s465 + $0x50] sm:$0xff] %v6467
        %6500 = vst [vmem:[%s465 + $0x58] sm:$0xff] %v6468
        %6501 = vst [vmem:[%s465 + $0x60] sm:$0xff] %v6469
        %6502 = vst [vmem:[%s465 + $0x68] sm:$0xff] %v6470
        %6503 = vst [vmem:[%s465 + $0x70] sm:$0xff] %v6471
        %6504 = vst [vmem:[%s465 + $0x78] sm:$0xff] %v6472
        %6505 = vst [vmem:[%s465 + $0x80] sm:$0xff] %v6473
        %6506 = vst [vmem:[%s465 + $0x88] sm:$0xff] %v6474
        %6507 = vst [vmem:[%s465 + $0x90] sm:$0xff] %v6475
        %6508 = vst [vmem:[%s465 + $0x98] sm:$0xff] %v6476
        %6509 = vst [vmem:[%s465 + $0xa0] sm:$0xff] %v6477
        %6510 = vst [vmem:[%s465 + $0xa8] sm:$0xff] %v6478
        %6511 = vst [vmem:[%s465 + $0xb0] sm:$0xff] %v6479
        %6512 = vst [vmem:[%s465 + $0xb8] sm:$0xff] %v6480
        %6513 = vst [vmem:[%s465 + $0xc0] sm:$0xff] %v6481
        %6514 = vst [vmem:[%s465 + $0xc8] sm:$0xff] %v6482
        %6515 = vst [vmem:[%s465 + $0xd0] sm:$0xff] %v6483
        %6516 = vst [vmem:[%s465 + $0xd8] sm:$0xff] %v6484
        %6517 = vst [vmem:[%s465 + $0xe0] sm:$0xff] %v6485
        %6518 = vst [vmem:[%s465 + $0xe8] sm:$0xff] %v6486
        %6519 = vst [vmem:[%s465 + $0xf0] sm:$0xff] %v6487
        %6520 = vst [vmem:[%s465 + $0xf8] sm:$0xff] %v6488
        %p6521 = scmp.lt.s32.totalorder %s25, 1
        %s6522 = scalar_select %p6521, %s25, 1
        %s6523 = smul.addr %s6522, 32
        %s6524 = smul.addr %s6523, 8
        %s6525 = scalar_lea.vmem %s9, %s6524
        %p6526 = scmp.lt.s32.totalorder %s25, 1
        %s6527 = scalar_select %p6526, %s25, 1
        %s6528 = smul.addr %s6527, 32
        %s6529 = smul.addr %s6528, 8
        %s6530 = scalar_lea.vmem %s10, %s6529
        %p6531 = scmp.lt.s32.totalorder %s25, 1
        %s6532 = scalar_select %p6531, %s25, 1
        %s6533 = smul.addr %s6532, 32
        %s6534 = smul.addr %s6533, 8
        %s6535 = scalar_lea.vmem %s11, %s6534
        %p6536 = scmp.lt.s32.totalorder %s25, 1
        %s6537 = scalar_select %p6536, %s25, 1
        %s6538 = smul.addr %s6537, 32
        %s6539 = smul.addr %s6538, 8
        %s6540 = scalar_lea.vmem %s12, %s6539
        // Predicated region
        $region61: #{inception_a_forward.1} parent=55 // pred_check
          %p6541 = pneg %p237
        $region62: #{inception_a_forward.1} parent=55 // pred_check_branch
          %6543 = sbr.rel (%p6541) target = $region64
        $region63: #{inception_a_forward.1} parent=55 // pred_region
          _
        $region64: #{inception_a_forward.1} parent=55 // pred_fallthru
          _
        // Predicated region
        $region65: #{inception_a_forward.1} parent=55 // pred_check
          %p6544 = pneg %p263
        $region66: #{inception_a_forward.1} parent=55 // pred_check_branch
          %6546 = sbr.rel (%p6544) target = $region68
        $region67: #{inception_a_forward.1} parent=55 // pred_region
          _
        $region68: #{inception_a_forward.1} parent=55 // pred_fallthru
          _
        // Predicated region
        $region69: #{inception_a_forward.1} parent=55 // pred_check
          %p6547 = pneg %p289
        $region70: #{inception_a_forward.1} parent=55 // pred_check_branch
          %6549 = sbr.rel (%p6547) target = $region72
        $region71: #{inception_a_forward.1} parent=55 // pred_region
          _
        $region72: #{inception_a_forward.1} parent=55 // pred_fallthru
          _
        // Predicated region
        $region73: #{inception_a_forward.1} parent=55 // pred_check
          %p6550 = pneg %p315
        $region74: #{inception_a_forward.1} parent=55 // pred_check_branch
          %6552 = sbr.rel (%p6550) target = $region76
        $region75: #{inception_a_forward.1} parent=55 // pred_region
          _
        $region76: #{inception_a_forward.1} parent=55 // pred_fallthru
          _
      $region56: #{inception_a_forward.1} parent=5 // pred_fallthru
        _
      %p6553 = scmp.le.s32.totalorder 2, %s20
      // Predicated region
      $region77: #{inception_a_forward.1} parent=5 // pred_check
        %p6554 = pneg %p6553
      $region78: #{inception_a_forward.1} parent=5 // pred_check_branch
        %6556 = sbr.rel (%p6554) target = $region80
      $region79: #{inception_a_forward.1} parent=5 // pred_region
        %s6557 = ssub.s32 %s20, 2
        // Predicated region
        $region81: #{inception_a_forward.1} parent=79 // pred_check
          %p6558 = pneg %p243
        $region82: #{inception_a_forward.1} parent=79 // pred_check_branch
          %6560 = sbr.rel (%p6558) target = $region84
        $region83: #{inception_a_forward.1} parent=79 // pred_region
          %p6561 = scmp.lt.s32.totalorder %s26, 1
          %s6562 = scalar_select %p6561, %s26, 1
          %s6563 = smul.addr %s6562, 32
          %s6564 = smul.addr %s6563, 8
          %s6565 = scalar_lea.vmem %s9, %s6564
        $region84: #{inception_a_forward.1} parent=79 // pred_fallthru
          _
        // Predicated region
        $region85: #{inception_a_forward.1} parent=79 // pred_check
          %p6566 = pneg %p269
        $region86: #{inception_a_forward.1} parent=79 // pred_check_branch
          %6568 = sbr.rel (%p6566) target = $region88
        $region87: #{inception_a_forward.1} parent=79 // pred_region
          %p6569 = scmp.lt.s32.totalorder %s26, 1
          %s6570 = scalar_select %p6569, %s26, 1
          %s6571 = smul.addr %s6570, 32
          %s6572 = smul.addr %s6571, 8
          %s6573 = scalar_lea.vmem %s10, %s6572
        $region88: #{inception_a_forward.1} parent=79 // pred_fallthru
          _
        // Predicated region
        $region89: #{inception_a_forward.1} parent=79 // pred_check
          %p6574 = pneg %p295
        $region90: #{inception_a_forward.1} parent=79 // pred_check_branch
          %6576 = sbr.rel (%p6574) target = $region92
        $region91: #{inception_a_forward.1} parent=79 // pred_region
          %p6577 = scmp.lt.s32.totalorder %s26, 1
          %s6578 = scalar_select %p6577, %s26, 1
          %s6579 = smul.addr %s6578, 32
          %s6580 = smul.addr %s6579, 8
          %s6581 = scalar_lea.vmem %s11, %s6580
        $region92: #{inception_a_forward.1} parent=79 // pred_fallthru
          _
        // Predicated region
        $region93: #{inception_a_forward.1} parent=79 // pred_check
          %p6582 = pneg %p321
        $region94: #{inception_a_forward.1} parent=79 // pred_check_branch
          %6584 = sbr.rel (%p6582) target = $region96
        $region95: #{inception_a_forward.1} parent=79 // pred_region
          %p6585 = scmp.lt.s32.totalorder %s26, 1
          %s6586 = scalar_select %p6585, %s26, 1
          %s6587 = smul.addr %s6586, 32
          %s6588 = smul.addr %s6587, 8
          %s6589 = scalar_lea.vmem %s12, %s6588
        $region96: #{inception_a_forward.1} parent=79 // pred_fallthru
          _
      $region80: #{inception_a_forward.1} parent=5 // pred_fallthru
        _
    $region6: #{inception_a_forward.1} parent=1 // loop_footer
      %s24 = sadd.s32 1, %s20
    $region7: #{inception_a_forward.1} parent=1 // loop_footer_branch
      %19 = sbr.rel target = $region3
    $region8: #{inception_a_forward.1} parent=1 // loop_exit
      _
    %6590 = vsyncpa [#allocation5], 1
    %s6591 = scalar_lea.sflag [#allocation5], 1
    %6592 = vsyncpa %s6591, 1

</llo_original>
